<compile_context>
chip_gen: v7x
topology: tpu7x:2x2x1
jax: 0.10.0
libtpu: 0.0.40
codegen_flags: <defaults>
</compile_context>

<pallas_src>
import functools
import math

import jax
import jax.numpy as jnp
from jax import lax
from jax.experimental import pallas as pl
from jax.experimental.pallas import tpu as pltpu
from jax.scipy import special as jsp

EPS = float(jnp.finfo(jnp.float32).eps)          # torch.finfo(float32).eps
IGNORE_INDEX = -1.0
NUM_CLASSES = 2
SMOOTH = 0.0001 / NUM_CLASSES

# f32-safe alpha clamp (torch uses float64 with max ~9e307).  1e18 keeps alpha*(alpha+1)
# and lgamma terms finite in float32; only affects |logit| > ~41 (saturated regime).
MAX_ALPHA = 1.0e18
REF_MAX_ALPHA = float(jnp.finfo(jnp.float32).max) / 2.0 - 1.0   # f32 transcription of torch clamp

_HALF_LOG_2PI = 0.5 * math.log(2.0 * math.pi)

BLOCK_LANES = 2048          # lanes per block
CHUNK_SUBLANES = 8          # sublane rows per inner compute strip (one vreg tall)
SUBLANES = 64               # sublane rows per DMA block (8 strips)
NUM_CHUNKS = SUBLANES // CHUNK_SUBLANES
BLOCK = SUBLANES * BLOCK_LANES          # 131072 examples per grid step
NUM_CORE_SPLITS = 2         # leading "parallel" grid axis (dual TC on v7x; harmless elsewhere)
NUM_PLANES = 3              # logit, tbar (with -1 sentinel), mkl


def _digamma_lgamma(a, shift):
    """digamma(a) and lgamma(a) for a > 0, sharing the log / reciprocal work.

    Shift-by-`shift` recurrence (shift in {2, 4}, chosen statically from model_offset)
    followed by the asymptotic series; shift=2 costs 2 logs + 2 divides per call."""
    b = a + 1.0
    ab = a * b
    if shift == 2:
        corr_div = (a + b) / ab                      # 1/a + 1/(a+1)
        corr_log = jnp.log(ab)                       # log a + log(a+1)
    else:                                            # shift == 4 (small model_offset)
        c = a + 2.0
        d = a + 3.0
        cd = c * d
        corr_div = (a + b) / ab + (c + d) / cd
        corr_log = jnp.log(ab) + jnp.log(cd)
    y = a + float(shift)
    w = 1.0 / y
    w2 = w * w
    log_y = jnp.log(y)
    # digamma(y) ~ ln y - 1/(2y) - 1/(12y^2) + 1/(120y^4) - 1/(252y^6)
    dig = (log_y - 0.5 * w
           - w2 * (1.0 / 12.0 - w2 * (1.0 / 120.0 - w2 * (1.0 / 252.0)))) - corr_div
    # lgamma(y) ~ (y-1/2) ln y - y + ln(2*pi)/2 + 1/(12y) - 1/(360y^3) + 1/(1260y^5)
    lgm = ((y - 0.5) * log_y - y + _HALF_LOG_2PI
           + w * (1.0 / 12.0 - w2 * (1.0 / 360.0 - w2 * (1.0 / 1260.0)))) - corr_log
    return dig, lgm


def _rkl_kernel(data_ref, sum_ref, sum_acc, *, model_offset, target_offset, shift):
    # grid = (core_split, reduction steps); reset the per-core accumulator at step 0.
    @pl.when(pl.program_id(1) == 0)
    def _init():
        sum_acc[...] = jnp.zeros_like(sum_acc)

    k = float(target_offset) * NUM_CLASSES

    # Strip-mine the (64, 2048) DMA block into (8, 2048) compute strips so live-range /
    # spill pressure matches the previously-validated kernel shape.
    def _strip(r, carry):
        row = pl.multiple_of(r * CHUNK_SUBLANES, CHUNK_SUBLANES)
        sl = pl.ds(row, CHUNK_SUBLANES)
        lg = data_ref[0, sl, :]       # raw binary logits
        tbar = data_ref[1, sl, :]     # mean over ensemble of P(class=1); -1 => ignore/pad
        mkl = data_ref[2, sl, :]      # precomputed ensemble mean-KL

        # model Dirichlet parameters (sigmoid->2-class-logit->exp collapsed)
        alpha1 = jnp.minimum(jnp.exp(lg) + model_offset, MAX_ALPHA)
        alpha0 = jnp.minimum(jnp.exp(-lg) + model_offset, MAX_ALPHA)
        prec = alpha0 + alpha1

        dg0, lgam0 = _digamma_lgamma(alpha0 + EPS, shift)
        dg1, lgam1 = _digamma_lgamma(alpha1 + EPS, shift)
        dgp, lgamp = _digamma_lgamma(prec + EPS, shift)

        d0 = dg0 - dgp
        d1 = dg1 - dgp
        mean1 = tbar
        mean0 = 1.0 - tbar
        expected_kl = -(mean0 * d0 + mean1 * d1)
        dneg = (lgam0 + lgam1 - lgamp) - (d0 * (alpha0 - 1.0) + d1 * (alpha1 - 1.0))

        # ens_prec = (C-1)/x + K  with x = 2*mkl+EPS, K = target_offset*C
        # => dneg / ens_prec == dneg * x / ((C-1) + K*x)   (single exact divide)
        x = 2.0 * mkl + EPS
        loss = expected_kl - (dneg * x) / ((NUM_CLASSES - 1.0) + k * x)

        sum_acc[...] += jnp.where(tbar >= 0.0, loss, 0.0)   # pure VPU adds
        return carry

    lax.fori_loop(0, NUM_CHUNKS, _strip, 0)

    @pl.when(pl.program_id(1) == pl.num_programs(1) - 1)
    def _finalize():
        # single sublane reduce at the very end; cross-lane reduce happens in the wrapper.
        sum_ref[...] = jnp.sum(sum_acc[...], axis=0, keepdims=True)


@functools.partial(jax.jit, static_argnames=("model_offset", "target_offset"))
def binary_rkl_dirichlet_mediator_loss(logits, targets, model_offset=1.0, target_offset=1.0):
    """Scalar RKL Dirichlet mediator loss (mean over non-ignored turns)."""
    logits = logits.astype(jnp.float32).reshape(-1)               # [N]
    targets = targets.astype(jnp.float32)
    targets = targets.reshape(-1, targets.shape[-1])              # [N, M]
    n = logits.shape[0]

    # Ensemble statistics (@torch.no_grad() in the torch original) reduced over members
    # here; ignored rows use benign values so no NaN ever enters the kernel.
    valid = targets[:, 0] != IGNORE_INDEX
    count = jnp.sum(valid.astype(jnp.float32))
    t_safe = jnp.where(valid[:, None], targets, 0.5)
    tbar = jnp.mean(t_safe, axis=1)
    lp0 = jnp.mean(jnp.log((1.0 - t_safe) + SMOOTH), axis=1)
    lp1 = jnp.mean(jnp.log(t_safe + SMOOTH), axis=1)
    mean0 = 1.0 - tbar
    kl0 = jnp.where(mean0 > 0.0, mean0 * (jnp.log(mean0) - lp0), 0.0)
    kl1 = jnp.where(tbar > 0.0, tbar * (jnp.log(tbar) - lp1), 0.0)
    mkl = kl0 + kl1
    tbar_s = jnp.where(valid, tbar, -1.0)         # sentinel: tbar < 0 => ignored / padding

    steps_per_split = max(1, pl.cdiv(n, NUM_CORE_SPLITS * BLOCK))
    n_pad = NUM_CORE_SPLITS * steps_per_split * BLOCK
    rows = n_pad // BLOCK_LANES

    # Single padded slab holding all three planes (one pad materialisation, not five).
    data = (jnp.full((NUM_PLANES, n_pad), -1.0, jnp.float32)
            .at[0, :n].set(logits)
            .at[1, :n].set(tbar_s)
            .at[2, :n].set(mkl)
            .reshape(NUM_PLANES, rows, BLOCK_LANES))

    shift = 2 if model_offset >= 0.5 else 4       # static: keeps the series accurate
    kernel = functools.partial(_rkl_kernel, model_offset=float(model_offset),
                               target_offset=float(target_offset), shift=shift)
    in_map = lambda c, i: (0, c * steps_per_split + i, 0)
    out_map = lambda c, i: (0, c)

    loss_sum = pl.pallas_call(
        kernel,
        out_shape=jax.ShapeDtypeStruct((1, NUM_CORE_SPLITS * BLOCK_LANES), jnp.float32),
        grid_spec=pltpu.PrefetchScalarGridSpec(
            num_scalar_prefetch=0,
            grid=(NUM_CORE_SPLITS, steps_per_split),
            in_specs=[pl.BlockSpec((NUM_PLANES, SUBLANES, BLOCK_LANES), in_map)],
            out_specs=pl.BlockSpec((1, BLOCK_LANES), out_map),
            scratch_shapes=[pltpu.VMEM((CHUNK_SUBLANES, BLOCK_LANES), jnp.float32)]),
        compiler_params=pltpu.CompilerParams(
            # TODO(synk): on v7x, switch the leading axis to pltpu.CORE_PARALLEL if a
            # profile shows only one TensorCore active; "parallel" is kept here for
            # portability across 1-TC v5e/v6e.
            dimension_semantics=("parallel", "arbitrary")),
        cost_estimate=pl.CostEstimate(
            flops=100 * n_pad,
            transcendentals=(15 if shift == 2 else 21) * n_pad,
            bytes_accessed=4 * (NUM_PLANES * n_pad + NUM_CORE_SPLITS * BLOCK_LANES)),
    )(data)

    # TODO(synk): the torch module also returns `stats` / `ensemble_stats` diagnostic dicts
    # and would need a custom VJP for training; only the scalar forward loss is produced.
    return jnp.sum(loss_sum) / count


def reference_loss(logits, targets, model_offset=1.0, target_offset=1.0, ignore_index=-1.0):
    """Pure-JAX (float32) transcription of the torch forward, for validation."""
    t = targets.astype(jnp.float32).reshape(-1, targets.shape[-1])[..., None]   # [N, M, 1]
    t2 = jnp.concatenate([1.0 - t, t], axis=-1)                                 # [N, M, 2]
    row_ignore = t2[:, 0, 1] == ignore_index
    t2 = jnp.where(row_ignore[:, None, None], ignore_index, t2)

    p = jax.nn.sigmoid(logits.astype(jnp.float32).reshape(-1))[:, None]
    l2 = jnp.concatenate([1.0 - p, p], axis=-1)
    l2 = -1.0 * jnp.log(1.0 / (l2 + 1e-8) - 1.0)

    valid = t2[:, 0, 0] != ignore_index
    mean_probs = jnp.mean(t2, axis=1)                                           # [N, 2]
    logprobs = jnp.log(t2 + SMOOTH)
    tgt = mean_probs[:, None, :]
    kl = jnp.where(tgt > 0, tgt * (jnp.log(tgt) - logprobs), 0.0)
    mkl = kl.sum(-1).mean(1)
    ens_prec = (NUM_CLASSES - 1) / (2.0 * mkl + EPS) + target_offset * NUM_CLASSES

    alphas = jnp.minimum(jnp.exp(l2) + model_offset, REF_MAX_ALPHA)
    prec = alphas.sum(-1)
    dg_a = jsp.digamma(alphas + EPS)
    dg_p = jsp.digamma(prec + EPS)[:, None]
    ekl = -jnp.sum(mean_probs * (dg_a - dg_p), -1)
    dneg_in = ((dg_a - dg_p) * (alphas - 1.0)).sum(-1)
    dneg = jsp.gammaln(alphas + EPS).sum(-1) - jsp.gammaln(prec + EPS) - dneg_in
    loss = ekl - dneg / ens_prec
    return jnp.sum(jnp.where(valid, loss, 0.0)) / jnp.sum(valid.astype(jnp.float32))


if __name__ == "__main__":
    key = jax.random.PRNGKey(0)
    k1, k2, k3 = jax.random.split(key, 3)
    # N = flattened (dialogue turns x binary slots) decisions, M = ensemble members.
    N, M = 300, 8
    logits = jax.random.normal(k1, (N,), jnp.float32) * 2.0
    targets = jax.random.uniform(k2, (N, M), jnp.float32)
    ignore_rows = jax.random.uniform(k3, (N,)) < 0.2
    targets = jnp.where(ignore_rows[:, None], IGNORE_INDEX, targets)

    loss = binary_rkl_dirichlet_mediator_loss(logits, targets)
    loss = jax.block_until_ready(loss)

    ref = reference_loss(logits, targets)
    assert bool(jnp.isfinite(loss)), loss
    assert abs(float(loss) - float(ref)) < 1e-3 * max(1.0, abs(float(ref))), (float(loss), float(ref))
    print("KERNEL_OK")
</pallas_src>

<mosaic_0001>
module attributes {stable_mosaic.version = 11 : i64} {
  func.func @_rkl_kernel(%arg0: i32, %arg1: i32, %arg2: memref<3x64x2048xf32, #tpu.memory_space<vmem>>, %arg3: memref<1x2048xf32, #tpu.memory_space<vmem>>, %arg4: memref<8x2048xf32, #tpu.memory_space<vmem>>) attributes {dimension_semantics = [#tpu.dimension_semantics<parallel>, #tpu.dimension_semantics<arbitrary>], iteration_bounds = array<i64: 2, 1>, scalar_prefetch = 0 : i64, scratch_operands = 1 : i64, tpu.core_type = #tpu.core_type<tc>, window_params = [{transform_indices = @transform_0, window_bounds = array<i64: 3, 64, 2048>}, {transform_indices = @transform_1, window_bounds = array<i64: 1, 2048>}]} {
    %c0_i32 = arith.constant 0 : i32
    %0 = arith.cmpi eq, %arg1, %c0_i32 : i32
    %1 = arith.extui %0 : i1 to i32
    %c0_i32_0 = arith.constant 0 : i32
    %2 = arith.cmpi ne, %1, %c0_i32_0 : i32
    scf.if %2 {
      %cst = arith.constant 0.000000e+00 : f32
      %7 = vector.broadcast %cst : f32 to vector<8x2048xf32>
      %c0 = arith.constant 0 : index
      %c0_5 = arith.constant 0 : index
      %8 = vector.load %arg4[%c0, %c0_5] : memref<8x2048xf32, #tpu.memory_space<vmem>>, vector<8x2048xf32>
      tpu.vector_store %arg4[%c0, %c0_5], %7 {strides = array<i32>} : memref<8x2048xf32, #tpu.memory_space<vmem>>, vector<8x2048xf32>,
    } else {
    }
    %c0_i32_1 = arith.constant 0 : i32
    %c8_i32 = arith.constant 8 : i32
    %3 = arith.addi %c0_i32_1, %c8_i32 : i32
    %c1_i32 = arith.constant 1 : i32
    scf.for %arg5 = %c0_i32_1 to %3 step %c1_i32  : i32 {
      %c8_i32_5 = arith.constant 8 : i32
      %7 = arith.muli %arg5, %c8_i32_5 : i32
      %8 = tpu.assume_multiple %7, 8 : i32
      %c0 = arith.constant 0 : index
      %9 = arith.index_cast %8 : i32 to index
      %c0_6 = arith.constant 0 : index
      %10 = vector.load %arg2[%c0, %9, %c0_6] : memref<3x64x2048xf32, #tpu.memory_space<vmem>>, vector<1x8x2048xf32>
      %11 = vector.shape_cast %10 : vector<1x8x2048xf32> to vector<8x2048xf32>
      %c1 = arith.constant 1 : index
      %12 = arith.index_cast %8 : i32 to index
      %c0_7 = arith.constant 0 : index
      %13 = vector.load %arg2[%c1, %12, %c0_7] : memref<3x64x2048xf32, #tpu.memory_space<vmem>>, vector<1x8x2048xf32>
      %14 = vector.shape_cast %13 : vector<1x8x2048xf32> to vector<8x2048xf32>
      %c2 = arith.constant 2 : index
      %15 = arith.index_cast %8 : i32 to index
      %c0_8 = arith.constant 0 : index
      %16 = vector.load %arg2[%c2, %15, %c0_8] : memref<3x64x2048xf32, #tpu.memory_space<vmem>>, vector<1x8x2048xf32>
      %17 = vector.shape_cast %16 : vector<1x8x2048xf32> to vector<8x2048xf32>
      %18 = math.exp %11 : vector<8x2048xf32>
      %cst = arith.constant 1.000000e+00 : f32
      %19 = vector.broadcast %cst : f32 to vector<8x2048xf32>
      %20 = arith.addf %18, %19 : vector<8x2048xf32>
      %cst_9 = arith.constant 9.99999984E+17 : f32
      %21 = vector.broadcast %cst_9 : f32 to vector<8x2048xf32>
      %22 = arith.minimumf %20, %21 : vector<8x2048xf32>
      %cst_10 = arith.constant 0.000000e+00 : f32
      %23 = vector.broadcast %cst_10 : f32 to vector<8x2048xf32>
      %24 = arith.subf %23, %11 : vector<8x2048xf32>
      %25 = math.exp %24 : vector<8x2048xf32>
      %cst_11 = arith.constant 1.000000e+00 : f32
      %26 = vector.broadcast %cst_11 : f32 to vector<8x2048xf32>
      %27 = arith.addf %25, %26 : vector<8x2048xf32>
      %cst_12 = arith.constant 9.99999984E+17 : f32
      %28 = vector.broadcast %cst_12 : f32 to vector<8x2048xf32>
      %29 = arith.minimumf %27, %28 : vector<8x2048xf32>
      %30 = arith.addf %29, %22 : vector<8x2048xf32>
      %cst_13 = arith.constant 1.1920929E-7 : f32
      %31 = vector.broadcast %cst_13 : f32 to vector<8x2048xf32>
      %32 = arith.addf %29, %31 : vector<8x2048xf32>
      %cst_14 = arith.constant 1.000000e+00 : f32
      %33 = vector.broadcast %cst_14 : f32 to vector<8x2048xf32>
      %34 = arith.addf %32, %33 : vector<8x2048xf32>
      %35 = arith.mulf %32, %34 : vector<8x2048xf32>
      %36 = arith.addf %32, %34 : vector<8x2048xf32>
      %37 = arith.divf %36, %35 : vector<8x2048xf32>
      %38 = math.log %35 : vector<8x2048xf32>
      %cst_15 = arith.constant 2.000000e+00 : f32
      %39 = vector.broadcast %cst_15 : f32 to vector<8x2048xf32>
      %40 = arith.addf %32, %39 : vector<8x2048xf32>
      %cst_16 = arith.constant 1.000000e+00 : f32
      %41 = vector.broadcast %cst_16 : f32 to vector<8x2048xf32>
      %42 = arith.divf %41, %40 : vector<8x2048xf32>
      %43 = arith.mulf %42, %42 : vector<8x2048xf32>
      %44 = math.log %40 : vector<8x2048xf32>
      %cst_17 = arith.constant 5.000000e-01 : f32
      %45 = vector.broadcast %cst_17 : f32 to vector<8x2048xf32>
      %46 = arith.mulf %45, %42 : vector<8x2048xf32>
      %47 = arith.subf %44, %46 : vector<8x2048xf32>
      %cst_18 = arith.constant 0.0039682542 : f32
      %48 = vector.broadcast %cst_18 : f32 to vector<8x2048xf32>
      %49 = arith.mulf %43, %48 : vector<8x2048xf32>
      %cst_19 = arith.constant 0.00833333377 : f32
      %50 = vector.broadcast %cst_19 : f32 to vector<8x2048xf32>
      %51 = arith.subf %50, %49 : vector<8x2048xf32>
      %52 = arith.mulf %43, %51 : vector<8x2048xf32>
      %cst_20 = arith.constant 0.0833333358 : f32
      %53 = vector.broadcast %cst_20 : f32 to vector<8x2048xf32>
      %54 = arith.subf %53, %52 : vector<8x2048xf32>
      %55 = arith.mulf %43, %54 : vector<8x2048xf32>
      %56 = arith.subf %47, %55 : vector<8x2048xf32>
      %57 = arith.subf %56, %37 : vector<8x2048xf32>
      %cst_21 = arith.constant 5.000000e-01 : f32
      %58 = vector.broadcast %cst_21 : f32 to vector<8x2048xf32>
      %59 = arith.subf %40, %58 : vector<8x2048xf32>
      %60 = arith.mulf %59, %44 : vector<8x2048xf32>
      %61 = arith.subf %60, %40 : vector<8x2048xf32>
      %cst_22 = arith.constant 0.918938517 : f32
      %62 = vector.broadcast %cst_22 : f32 to vector<8x2048xf32>
      %63 = arith.addf %61, %62 : vector<8x2048xf32>
      %cst_23 = arith.constant 7.93650805E-4 : f32
      %64 = vector.broadcast %cst_23 : f32 to vector<8x2048xf32>
      %65 = arith.mulf %43, %64 : vector<8x2048xf32>
      %cst_24 = arith.constant 0.00277777785 : f32
      %66 = vector.broadcast %cst_24 : f32 to vector<8x2048xf32>
      %67 = arith.subf %66, %65 : vector<8x2048xf32>
      %68 = arith.mulf %43, %67 : vector<8x2048xf32>
      %cst_25 = arith.constant 0.0833333358 : f32
      %69 = vector.broadcast %cst_25 : f32 to vector<8x2048xf32>
      %70 = arith.subf %69, %68 : vector<8x2048xf32>
      %71 = arith.mulf %42, %70 : vector<8x2048xf32>
      %72 = arith.addf %63, %71 : vector<8x2048xf32>
      %73 = arith.subf %72, %38 : vector<8x2048xf32>
      %cst_26 = arith.constant 1.1920929E-7 : f32
      %74 = vector.broadcast %cst_26 : f32 to vector<8x2048xf32>
      %75 = arith.addf %22, %74 : vector<8x2048xf32>
      %cst_27 = arith.constant 1.000000e+00 : f32
      %76 = vector.broadcast %cst_27 : f32 to vector<8x2048xf32>
      %77 = arith.addf %75, %76 : vector<8x2048xf32>
      %78 = arith.mulf %75, %77 : vector<8x2048xf32>
      %79 = arith.addf %75, %77 : vector<8x2048xf32>
      %80 = arith.divf %79, %78 : vector<8x2048xf32>
      %81 = math.log %78 : vector<8x2048xf32>
      %cst_28 = arith.constant 2.000000e+00 : f32
      %82 = vector.broadcast %cst_28 : f32 to vector<8x2048xf32>
      %83 = arith.addf %75, %82 : vector<8x2048xf32>
      %cst_29 = arith.constant 1.000000e+00 : f32
      %84 = vector.broadcast %cst_29 : f32 to vector<8x2048xf32>
      %85 = arith.divf %84, %83 : vector<8x2048xf32>
      %86 = arith.mulf %85, %85 : vector<8x2048xf32>
      %87 = math.log %83 : vector<8x2048xf32>
      %cst_30 = arith.constant 5.000000e-01 : f32
      %88 = vector.broadcast %cst_30 : f32 to vector<8x2048xf32>
      %89 = arith.mulf %88, %85 : vector<8x2048xf32>
      %90 = arith.subf %87, %89 : vector<8x2048xf32>
      %cst_31 = arith.constant 0.0039682542 : f32
      %91 = vector.broadcast %cst_31 : f32 to vector<8x2048xf32>
      %92 = arith.mulf %86, %91 : vector<8x2048xf32>
      %cst_32 = arith.constant 0.00833333377 : f32
      %93 = vector.broadcast %cst_32 : f32 to vector<8x2048xf32>
      %94 = arith.subf %93, %92 : vector<8x2048xf32>
      %95 = arith.mulf %86, %94 : vector<8x2048xf32>
      %cst_33 = arith.constant 0.0833333358 : f32
      %96 = vector.broadcast %cst_33 : f32 to vector<8x2048xf32>
      %97 = arith.subf %96, %95 : vector<8x2048xf32>
      %98 = arith.mulf %86, %97 : vector<8x2048xf32>
      %99 = arith.subf %90, %98 : vector<8x2048xf32>
      %100 = arith.subf %99, %80 : vector<8x2048xf32>
      %cst_34 = arith.constant 5.000000e-01 : f32
      %101 = vector.broadcast %cst_34 : f32 to vector<8x2048xf32>
      %102 = arith.subf %83, %101 : vector<8x2048xf32>
      %103 = arith.mulf %102, %87 : vector<8x2048xf32>
      %104 = arith.subf %103, %83 : vector<8x2048xf32>
      %cst_35 = arith.constant 0.918938517 : f32
      %105 = vector.broadcast %cst_35 : f32 to vector<8x2048xf32>
      %106 = arith.addf %104, %105 : vector<8x2048xf32>
      %cst_36 = arith.constant 7.93650805E-4 : f32
      %107 = vector.broadcast %cst_36 : f32 to vector<8x2048xf32>
      %108 = arith.mulf %86, %107 : vector<8x2048xf32>
      %cst_37 = arith.constant 0.00277777785 : f32
      %109 = vector.broadcast %cst_37 : f32 to vector<8x2048xf32>
      %110 = arith.subf %109, %108 : vector<8x2048xf32>
      %111 = arith.mulf %86, %110 : vector<8x2048xf32>
      %cst_38 = arith.constant 0.0833333358 : f32
      %112 = vector.broadcast %cst_38 : f32 to vector<8x2048xf32>
      %113 = arith.subf %112, %111 : vector<8x2048xf32>
      %114 = arith.mulf %85, %113 : vector<8x2048xf32>
      %115 = arith.addf %106, %114 : vector<8x2048xf32>
      %116 = arith.subf %115, %81 : vector<8x2048xf32>
      %cst_39 = arith.constant 1.1920929E-7 : f32
      %117 = vector.broadcast %cst_39 : f32 to vector<8x2048xf32>
      %118 = arith.addf %30, %117 : vector<8x2048xf32>
      %cst_40 = arith.constant 1.000000e+00 : f32
      %119 = vector.broadcast %cst_40 : f32 to vector<8x2048xf32>
      %120 = arith.addf %118, %119 : vector<8x2048xf32>
      %121 = arith.mulf %118, %120 : vector<8x2048xf32>
      %122 = arith.addf %118, %120 : vector<8x2048xf32>
      %123 = arith.divf %122, %121 : vector<8x2048xf32>
      %124 = math.log %121 : vector<8x2048xf32>
      %cst_41 = arith.constant 2.000000e+00 : f32
      %125 = vector.broadcast %cst_41 : f32 to vector<8x2048xf32>
      %126 = arith.addf %118, %125 : vector<8x2048xf32>
      %cst_42 = arith.constant 1.000000e+00 : f32
      %127 = vector.broadcast %cst_42 : f32 to vector<8x2048xf32>
      %128 = arith.divf %127, %126 : vector<8x2048xf32>
      %129 = arith.mulf %128, %128 : vector<8x2048xf32>
      %130 = math.log %126 : vector<8x2048xf32>
      %cst_43 = arith.constant 5.000000e-01 : f32
      %131 = vector.broadcast %cst_43 : f32 to vector<8x2048xf32>
      %132 = arith.mulf %131, %128 : vector<8x2048xf32>
      %133 = arith.subf %130, %132 : vector<8x2048xf32>
      %cst_44 = arith.constant 0.0039682542 : f32
      %134 = vector.broadcast %cst_44 : f32 to vector<8x2048xf32>
      %135 = arith.mulf %129, %134 : vector<8x2048xf32>
      %cst_45 = arith.constant 0.00833333377 : f32
      %136 = vector.broadcast %cst_45 : f32 to vector<8x2048xf32>
      %137 = arith.subf %136, %135 : vector<8x2048xf32>
      %138 = arith.mulf %129, %137 : vector<8x2048xf32>
      %cst_46 = arith.constant 0.0833333358 : f32
      %139 = vector.broadcast %cst_46 : f32 to vector<8x2048xf32>
      %140 = arith.subf %139, %138 : vector<8x2048xf32>
      %141 = arith.mulf %129, %140 : vector<8x2048xf32>
      %142 = arith.subf %133, %141 : vector<8x2048xf32>
      %143 = arith.subf %142, %123 : vector<8x2048xf32>
      %cst_47 = arith.constant 5.000000e-01 : f32
      %144 = vector.broadcast %cst_47 : f32 to vector<8x2048xf32>
      %145 = arith.subf %126, %144 : vector<8x2048xf32>
      %146 = arith.mulf %145, %130 : vector<8x2048xf32>
      %147 = arith.subf %146, %126 : vector<8x2048xf32>
      %cst_48 = arith.constant 0.918938517 : f32
      %148 = vector.broadcast %cst_48 : f32 to vector<8x2048xf32>
      %149 = arith.addf %147, %148 : vector<8x2048xf32>
      %cst_49 = arith.constant 7.93650805E-4 : f32
      %150 = vector.broadcast %cst_49 : f32 to vector<8x2048xf32>
      %151 = arith.mulf %129, %150 : vector<8x2048xf32>
      %cst_50 = arith.constant 0.00277777785 : f32
      %152 = vector.broadcast %cst_50 : f32 to vector<8x2048xf32>
      %153 = arith.subf %152, %151 : vector<8x2048xf32>
      %154 = arith.mulf %129, %153 : vector<8x2048xf32>
      %cst_51 = arith.constant 0.0833333358 : f32
      %155 = vector.broadcast %cst_51 : f32 to vector<8x2048xf32>
      %156 = arith.subf %155, %154 : vector<8x2048xf32>
      %157 = arith.mulf %128, %156 : vector<8x2048xf32>
      %158 = arith.addf %149, %157 : vector<8x2048xf32>
      %159 = arith.subf %158, %124 : vector<8x2048xf32>
      %160 = arith.subf %57, %143 : vector<8x2048xf32>
      %161 = arith.subf %100, %143 : vector<8x2048xf32>
      %cst_52 = arith.constant 1.000000e+00 : f32
      %162 = vector.broadcast %cst_52 : f32 to vector<8x2048xf32>
      %163 = arith.subf %162, %14 : vector<8x2048xf32>
      %164 = arith.mulf %163, %160 : vector<8x2048xf32>
      %165 = arith.mulf %14, %161 : vector<8x2048xf32>
      %166 = arith.addf %164, %165 : vector<8x2048xf32>
      %cst_53 = arith.constant 0.000000e+00 : f32
      %167 = vector.broadcast %cst_53 : f32 to vector<8x2048xf32>
      %168 = arith.subf %167, %166 : vector<8x2048xf32>
      %169 = arith.addf %73, %116 : vector<8x2048xf32>
      %170 = arith.subf %169, %159 : vector<8x2048xf32>
      %cst_54 = arith.constant 1.000000e+00 : f32
      %171 = vector.broadcast %cst_54 : f32 to vector<8x2048xf32>
      %172 = arith.subf %29, %171 : vector<8x2048xf32>
      %173 = arith.mulf %160, %172 : vector<8x2048xf32>
      %cst_55 = arith.constant 1.000000e+00 : f32
      %174 = vector.broadcast %cst_55 : f32 to vector<8x2048xf32>
      %175 = arith.subf %22, %174 : vector<8x2048xf32>
      %176 = arith.mulf %161, %175 : vector<8x2048xf32>
      %177 = arith.addf %173, %176 : vector<8x2048xf32>
      %178 = arith.subf %170, %177 : vector<8x2048xf32>
      %cst_56 = arith.constant 2.000000e+00 : f32
      %179 = vector.broadcast %cst_56 : f32 to vector<8x2048xf32>
      %180 = arith.mulf %179, %17 : vector<8x2048xf32>
      %cst_57 = arith.constant 1.1920929E-7 : f32
      %181 = vector.broadcast %cst_57 : f32 to vector<8x2048xf32>
      %182 = arith.addf %180, %181 : vector<8x2048xf32>
      %183 = arith.mulf %178, %182 : vector<8x2048xf32>
      %cst_58 = arith.constant 2.000000e+00 : f32
      %184 = vector.broadcast %cst_58 : f32 to vector<8x2048xf32>
      %185 = arith.mulf %184, %182 : vector<8x2048xf32>
      %cst_59 = arith.constant 1.000000e+00 : f32
      %186 = vector.broadcast %cst_59 : f32 to vector<8x2048xf32>
      %187 = arith.addf %186, %185 : vector<8x2048xf32>
      %188 = arith.divf %183, %187 : vector<8x2048xf32>
      %189 = arith.subf %168, %188 : vector<8x2048xf32>
      %c0_60 = arith.constant 0 : index
      %c0_61 = arith.constant 0 : index
      %190 = vector.load %arg4[%c0_60, %c0_61] : memref<8x2048xf32, #tpu.memory_space<vmem>>, vector<8x2048xf32>
      %cst_62 = arith.constant 0.000000e+00 : f32
      %191 = vector.broadcast %cst_62 : f32 to vector<8x2048xf32>
      %192 = arith.cmpf oge, %14, %191 : vector<8x2048xf32>
      %cst_63 = arith.constant 0.000000e+00 : f32
      %193 = vector.broadcast %cst_63 : f32 to vector<8x2048xf32>
      %194 = arith.select %192, %189, %193 : vector<8x2048xi1>, vector<8x2048xf32>
      %195 = arith.addf %190, %194 : vector<8x2048xf32>
      %c0_64 = arith.constant 0 : index
      %c0_65 = arith.constant 0 : index
      %196 = vector.load %arg4[%c0_64, %c0_65] : memref<8x2048xf32, #tpu.memory_space<vmem>>, vector<8x2048xf32>
      tpu.vector_store %arg4[%c0_64, %c0_65], %195 {strides = array<i32>} : memref<8x2048xf32, #tpu.memory_space<vmem>>, vector<8x2048xf32>,
    }
    %c8_i32_2 = arith.constant 8 : i32
    %c0_i32_3 = arith.constant 0 : i32
    %4 = arith.cmpi eq, %arg1, %c0_i32_3 : i32
    %5 = arith.extui %4 : i1 to i32
    %c0_i32_4 = arith.constant 0 : i32
    %6 = arith.cmpi ne, %5, %c0_i32_4 : i32
    scf.if %6 {
      %c0 = arith.constant 0 : index
      %c0_5 = arith.constant 0 : index
      %7 = vector.load %arg4[%c0, %c0_5] : memref<8x2048xf32, #tpu.memory_space<vmem>>, vector<8x2048xf32>
      %cst = arith.constant dense<0.000000e+00> : vector<2048xf32>
      %8 = vector.multi_reduction <add>, %7, %cst [0] : vector<8x2048xf32> to vector<2048xf32>
      %9 = vector.shape_cast %8 : vector<2048xf32> to vector<1x2048xf32>
      %c0_6 = arith.constant 0 : index
      %c0_7 = arith.constant 0 : index
      %10 = vector.load %arg3[%c0_6, %c0_7] : memref<1x2048xf32, #tpu.memory_space<vmem>>, vector<1x2048xf32>
      tpu.vector_store %arg3[%c0_6, %c0_7], %9 {strides = array<i32>} : memref<1x2048xf32, #tpu.memory_space<vmem>>, vector<1x2048xf32>,
    } else {
    }
    return
  }
  func.func @transform_0(%arg0: i32, %arg1: i32) -> (i32, i32, i32) {
    %c1_i32 = arith.constant 1 : i32
    %0 = arith.muli %arg0, %c1_i32 : i32
    %1 = arith.addi %0, %arg1 : i32
    %c0_i32 = arith.constant 0 : i32
    %c0_i32_0 = arith.constant 0 : i32
    %c0_i32_1 = arith.constant 0 : i32
    return %c0_i32, %1, %c0_i32_0 : i32, i32, i32
  }
  func.func @transform_1(%arg0: i32, %arg1: i32) -> (i32, i32) {
    %c0_i32 = arith.constant 0 : i32
    %c0_i32_0 = arith.constant 0 : i32
    return %c0_i32, %arg0 : i32, i32
  }
}

</mosaic_0001>

<llo_original>
// kernel: binary_rkl_dirichlet_mediator_loss.1
$region0: #{binary_rkl_dirichlet_mediator_loss.1}
  #allocation0 [shape = 'u32[]', space=smem, size = 0x4, offset = 0x4, fixed_abs, tag = 'smem constant byte address 0x4 - core index']
  #allocation1 [shape = 'u32[144,128]{1,0:T(1,128)}', space=vmem, size = 0x12000, scoped, tag = 'internal scratch']
  #allocation2 [shape = 'f32[8,2048]{1,0:T(8,128)}', space=vmem, size = 0x10000, scoped, tag = 'scratch operand']
  %s0 = inlined_call_operand.vmem [shape: f32[3,128,2048], index: 0, kind: input, shape index: {}]
  %s1 = inlined_call_operand.vmem [shape: f32[1,4096], index: 1, kind: output, shape index: {}]
  %s2 = sld [smem:[#allocation0]]
  $region75: #{binary_rkl_dirichlet_mediator_loss.1} parent=0
    _
  %s4 = ssub.s32 1, %s2
  %s5 = scalar_select 0, %s4, %s2
  $region1: #{binary_rkl_dirichlet_mediator_loss.1} parent=0
    #allocation3 [shape = 'u8[3145728]{0}', space=vmem, size = 0x300000, scoped, tag = 'input window, operand 0']
    loop: start=0, step=1, limit=4
    $region2: #{binary_rkl_dirichlet_mediator_loss.1} parent=1 // loop_pre_header
      _
    $region3: #{binary_rkl_dirichlet_mediator_loss.1} parent=1 // loop_header
      %s7 = sphi 0, %s11
      %p8 = scmp.ge.s32.totalorder %s7, 4
      %s14 = sphi 0, %s26
      %s15 = sphi 0, %s22
      %s16 = sphi 0, %s14
      %s17 = sphi 0, %s15
      %s18 = sphi 0, %s16
      %s19 = sphi 0, %s17
      %s31 = sphi 0, %s33
      %s34 = sphi 0, %s31
      %s35 = sphi 0, %s34
      %s51 = sphi 0, %s35
      %s57 = sphi 0, %s59
      %s60 = sphi 0, %s57
      %s61 = sphi 0, %s60
      %s77 = sphi 0, %s61
    $region4: #{binary_rkl_dirichlet_mediator_loss.1} parent=1 // loop_header_branch
      %10 = sbr.rel (%p8) target = $region8
    $region5: #{binary_rkl_dirichlet_mediator_loss.1} parent=1 // loop_body
      %s12 = ssub.s32 %s7, 1
      %s13 = ssub.s32 %s7, 2
      %s20 = sadd.s32 1, %s15
      %p21 = scmp.ge.s32.totalorder %s20, 1
      %s22 = scalar_select %p21, 0, %s20
      %s23 = sadd.s32 1, %s14
      %s24 = scalar_select %p21, %s23, %s14
      %p25 = scmp.ge.s32.totalorder %s24, 2
      %s26 = scalar_select %p25, 0, %s24
      %s27 = sadd.s32 %s14, %s15
      %s28 = sadd.s32 %s26, %s22
      %s29 = ssub.s32 %s27, %s28
      %p30 = scmp.eq.s32.totalorder %s29, 0
      %s32 = sadd.s32 %s31, 1
      %s33 = scalar_select %p30, %s31, %s32
      %p36 = pneg %p30
      %p37 = scmp.eq.s32.totalorder %s7, 1
      %p38 = por %p36, %p37
      %p39 = scmp.ne.s32.totalorder %s31, %s34
      %p40 = scmp.eq.s32.totalorder %s7, 0
      %p41 = por %p39, %p40
      %p42 = scmp.ne.s32.totalorder %s31, %s34
      %p43 = scmp.eq.s32.totalorder %s12, 1
      %p44 = por %p42, %p43
      %p45 = scmp.ne.s32.totalorder %s34, %s35
      %p46 = scmp.eq.s32.totalorder %s12, 0
      %p47 = por %p45, %p46
      %p48 = scmp.ne.s32.totalorder %s34, %s35
      %p49 = scmp.eq.s32.totalorder %s13, 1
      %p50 = por %p48, %p49
      %p52 = scmp.ne.s32.totalorder %s35, %s51
      %p53 = scmp.eq.s32.totalorder %s13, 0
      %p54 = por %p52, %p53
      %s55 = ssub.s32 %s14, %s26
      %p56 = scmp.eq.s32.totalorder %s55, 0
      %s58 = sadd.s32 %s57, 1
      %s59 = scalar_select %p56, %s57, %s58
      %p62 = pneg %p56
      %p63 = scmp.eq.s32.totalorder %s7, 1
      %p64 = por %p62, %p63
      %p65 = scmp.ne.s32.totalorder %s57, %s60
      %p66 = scmp.eq.s32.totalorder %s7, 0
      %p67 = por %p65, %p66
      %p68 = scmp.ne.s32.totalorder %s57, %s60
      %p69 = scmp.eq.s32.totalorder %s12, 1
      %p70 = por %p68, %p69
      %p71 = scmp.ne.s32.totalorder %s60, %s61
      %p72 = scmp.eq.s32.totalorder %s12, 0
      %p73 = por %p71, %p72
      %p74 = scmp.ne.s32.totalorder %s60, %s61
      %p75 = scmp.eq.s32.totalorder %s13, 1
      %p76 = por %p74, %p75
      %p78 = scmp.ne.s32.totalorder %s61, %s77
      %p79 = scmp.eq.s32.totalorder %s13, 0
      %p80 = por %p78, %p79
      %p81 = scmp.le.s32.totalorder 1, %s7
      %p82 = scmp.lt.s32.totalorder %s7, 3
      %p83 = pnand %p81, %p82
      %p84 = pneg %p83
      // Predicated region
      $region9: #{binary_rkl_dirichlet_mediator_loss.1} parent=5 // pred_check
        _
      $region10: #{binary_rkl_dirichlet_mediator_loss.1} parent=5 // pred_check_branch
        %86 = sbr.rel (%p83) target = $region12
      $region11: #{binary_rkl_dirichlet_mediator_loss.1} parent=5 // pred_region
        %s87 = ssub.s32 %s7, 1
      $region12: #{binary_rkl_dirichlet_mediator_loss.1} parent=5 // pred_fallthru
        _
      %p88 = scmp.lt.s32.totalorder %s7, 2
      // Predicated region
      $region13: #{binary_rkl_dirichlet_mediator_loss.1} parent=5 // pred_check
        %p89 = pneg %p88
      $region14: #{binary_rkl_dirichlet_mediator_loss.1} parent=5 // pred_check_branch
        %91 = sbr.rel (%p89) target = $region16
      $region15: #{binary_rkl_dirichlet_mediator_loss.1} parent=5 // pred_region
        // Predicated region
        $region17: #{binary_rkl_dirichlet_mediator_loss.1} parent=15 // pred_check
          %p92 = pneg %p41
        $region18: #{binary_rkl_dirichlet_mediator_loss.1} parent=15 // pred_check_branch
          %94 = sbr.rel (%p92) target = $region20
        $region19: #{binary_rkl_dirichlet_mediator_loss.1} parent=15 // pred_region
          %s95 = sand.u32 %s31, 1
          %s96 = sand.u32 %s31, 1
          %s97 = smul.addr %s96, 3072
          %s98 = scalar_lea.vmem [#allocation3], %s97
          %s99 = sadd.s32 %s14, %s15
          %s100 = smul.u32 8, %s99
          %s101 = smul.addr %s100, 16
          %s102 = smul.addr %s101, 8
          %s103 = scalar_lea.vmem %s0, %s102
          // Predicated region
          $region21: #{binary_rkl_dirichlet_mediator_loss.1} parent=19 // pred_check
            _
          $region22: #{binary_rkl_dirichlet_mediator_loss.1} parent=19 // pred_check_branch
            %105 = sbr.rel (0) target = $region24
          $region23: #{binary_rkl_dirichlet_mediator_loss.1} parent=19 // pred_region
            // Predicated region
            $region25: #{binary_rkl_dirichlet_mediator_loss.1} parent=23 // pred_check
              _
            $region26: #{binary_rkl_dirichlet_mediator_loss.1} parent=23 // pred_check_branch
              %107 = sbr.rel (0) target = $region28
            $region27: #{binary_rkl_dirichlet_mediator_loss.1} parent=23 // pred_region
              loop: start=0, step=1, limit=1
              $region29: #{binary_rkl_dirichlet_mediator_loss.1} parent=27 // loop_pre_header
                _
              $region30: #{binary_rkl_dirichlet_mediator_loss.1} parent=27 // loop_header
                %s109 = sphi 0, %s113
                %p110 = scmp.ge.s32.totalorder %s109, 1
                %s114 = sphi %s103, %s103
                %s115 = sphi %s98, %s98
              $region31: #{binary_rkl_dirichlet_mediator_loss.1} parent=27 // loop_header_branch
                %112 = sbr.rel (%p110) target = $region35
              $region32: #{binary_rkl_dirichlet_mediator_loss.1} parent=27 // loop_body
                %v116 = vld [vmem:[%s114] sm:$0xff]
                %117 = vst [vmem:[%s115] sm:$0xff] %v116
                %v118 = vld [vmem:[%s114 + $0x8] sm:$0xff]
                %119 = vst [vmem:[%s115 + $0x8] sm:$0xff] %v118
                %v120 = vld [vmem:[%s114 + $0x10] sm:$0xff]
                %121 = vst [vmem:[%s115 + $0x10] sm:$0xff] %v120
                %v122 = vld [vmem:[%s114 + $0x18] sm:$0xff]
                %123 = vst [vmem:[%s115 + $0x18] sm:$0xff] %v122
                %v124 = vld [vmem:[%s114 + $0x20] sm:$0xff]
                %125 = vst [vmem:[%s115 + $0x20] sm:$0xff] %v124
                %v126 = vld [vmem:[%s114 + $0x28] sm:$0xff]
                %127 = vst [vmem:[%s115 + $0x28] sm:$0xff] %v126
                %v128 = vld [vmem:[%s114 + $0x30] sm:$0xff]
                %129 = vst [vmem:[%s115 + $0x30] sm:$0xff] %v128
                %v130 = vld [vmem:[%s114 + $0x38] sm:$0xff]
                %131 = vst [vmem:[%s115 + $0x38] sm:$0xff] %v130
                %v132 = vld [vmem:[%s114 + $0x40] sm:$0xff]
                %133 = vst [vmem:[%s115 + $0x40] sm:$0xff] %v132
                %v134 = vld [vmem:[%s114 + $0x48] sm:$0xff]
                %135 = vst [vmem:[%s115 + $0x48] sm:$0xff] %v134
                %v136 = vld [vmem:[%s114 + $0x50] sm:$0xff]
                %137 = vst [vmem:[%s115 + $0x50] sm:$0xff] %v136
                %v138 = vld [vmem:[%s114 + $0x58] sm:$0xff]
                %139 = vst [vmem:[%s115 + $0x58] sm:$0xff] %v138
                %v140 = vld [vmem:[%s114 + $0x60] sm:$0xff]
                %141 = vst [vmem:[%s115 + $0x60] sm:$0xff] %v140
                %v142 = vld [vmem:[%s114 + $0x68] sm:$0xff]
                %143 = vst [vmem:[%s115 + $0x68] sm:$0xff] %v142
                %v144 = vld [vmem:[%s114 + $0x70] sm:$0xff]
                %145 = vst [vmem:[%s115 + $0x70] sm:$0xff] %v144
                %v146 = vld [vmem:[%s114 + $0x78] sm:$0xff]
                %147 = vst [vmem:[%s115 + $0x78] sm:$0xff] %v146
                %v148 = vld [vmem:[%s114 + $0x80] sm:$0xff]
                %149 = vst [vmem:[%s115 + $0x80] sm:$0xff] %v148
                %v150 = vld [vmem:[%s114 + $0x88] sm:$0xff]
                %151 = vst [vmem:[%s115 + $0x88] sm:$0xff] %v150
                %v152 = vld [vmem:[%s114 + $0x90] sm:$0xff]
                %153 = vst [vmem:[%s115 + $0x90] sm:$0xff] %v152
                %v154 = vld [vmem:[%s114 + $0x98] sm:$0xff]
                %155 = vst [vmem:[%s115 + $0x98] sm:$0xff] %v154
                %v156 = vld [vmem:[%s114 + $0xa0] sm:$0xff]
                %157 = vst [vmem:[%s115 + $0xa0] sm:$0xff] %v156
                %v158 = vld [vmem:[%s114 + $0xa8] sm:$0xff]
                %159 = vst [vmem:[%s115 + $0xa8] sm:$0xff] %v158
                %v160 = vld [vmem:[%s114 + $0xb0] sm:$0xff]
                %161 = vst [vmem:[%s115 + $0xb0] sm:$0xff] %v160
                %v162 = vld [vmem:[%s114 + $0xb8] sm:$0xff]
                %163 = vst [vmem:[%s115 + $0xb8] sm:$0xff] %v162
                %v164 = vld [vmem:[%s114 + $0xc0] sm:$0xff]
                %165 = vst [vmem:[%s115 + $0xc0] sm:$0xff] %v164
                %v166 = vld [vmem:[%s114 + $0xc8] sm:$0xff]
                %167 = vst [vmem:[%s115 + $0xc8] sm:$0xff] %v166
                %v168 = vld [vmem:[%s114 + $0xd0] sm:$0xff]
                %169 = vst [vmem:[%s115 + $0xd0] sm:$0xff] %v168
                %v170 = vld [vmem:[%s114 + $0xd8] sm:$0xff]
                %171 = vst [vmem:[%s115 + $0xd8] sm:$0xff] %v170
                %v172 = vld [vmem:[%s114 + $0xe0] sm:$0xff]
                %173 = vst [vmem:[%s115 + $0xe0] sm:$0xff] %v172
                %v174 = vld [vmem:[%s114 + $0xe8] sm:$0xff]
                %175 = vst [vmem:[%s115 + $0xe8] sm:$0xff] %v174
                %v176 = vld [vmem:[%s114 + $0xf0] sm:$0xff]
                %177 = vst [vmem:[%s115 + $0xf0] sm:$0xff] %v176
                %v178 = vld [vmem:[%s114 + $0xf8] sm:$0xff]
                %179 = vst [vmem:[%s115 + $0xf8] sm:$0xff] %v178
                %v180 = vld [vmem:[%s114 + $0x100] sm:$0xff]
                %181 = vst [vmem:[%s115 + $0x100] sm:$0xff] %v180
                %v182 = vld [vmem:[%s114 + $0x108] sm:$0xff]
                %183 = vst [vmem:[%s115 + $0x108] sm:$0xff] %v182
                %v184 = vld [vmem:[%s114 + $0x110] sm:$0xff]
                %185 = vst [vmem:[%s115 + $0x110] sm:$0xff] %v184
                %v186 = vld [vmem:[%s114 + $0x118] sm:$0xff]
                %187 = vst [vmem:[%s115 + $0x118] sm:$0xff] %v186
                %v188 = vld [vmem:[%s114 + $0x120] sm:$0xff]
                %189 = vst [vmem:[%s115 + $0x120] sm:$0xff] %v188
                %v190 = vld [vmem:[%s114 + $0x128] sm:$0xff]
                %191 = vst [vmem:[%s115 + $0x128] sm:$0xff] %v190
                %v192 = vld [vmem:[%s114 + $0x130] sm:$0xff]
                %193 = vst [vmem:[%s115 + $0x130] sm:$0xff] %v192
                %v194 = vld [vmem:[%s114 + $0x138] sm:$0xff]
                %195 = vst [vmem:[%s115 + $0x138] sm:$0xff] %v194
                %v196 = vld [vmem:[%s114 + $0x140] sm:$0xff]
                %197 = vst [vmem:[%s115 + $0x140] sm:$0xff] %v196
                %v198 = vld [vmem:[%s114 + $0x148] sm:$0xff]
                %199 = vst [vmem:[%s115 + $0x148] sm:$0xff] %v198
                %v200 = vld [vmem:[%s114 + $0x150] sm:$0xff]
                %201 = vst [vmem:[%s115 + $0x150] sm:$0xff] %v200
                %v202 = vld [vmem:[%s114 + $0x158] sm:$0xff]
                %203 = vst [vmem:[%s115 + $0x158] sm:$0xff] %v202
                %v204 = vld [vmem:[%s114 + $0x160] sm:$0xff]
                %205 = vst [vmem:[%s115 + $0x160] sm:$0xff] %v204
                %v206 = vld [vmem:[%s114 + $0x168] sm:$0xff]
                %207 = vst [vmem:[%s115 + $0x168] sm:$0xff] %v206
                %v208 = vld [vmem:[%s114 + $0x170] sm:$0xff]
                %209 = vst [vmem:[%s115 + $0x170] sm:$0xff] %v208
                %v210 = vld [vmem:[%s114 + $0x178] sm:$0xff]
                %211 = vst [vmem:[%s115 + $0x178] sm:$0xff] %v210
                %v212 = vld [vmem:[%s114 + $0x180] sm:$0xff]
                %213 = vst [vmem:[%s115 + $0x180] sm:$0xff] %v212
                %v214 = vld [vmem:[%s114 + $0x188] sm:$0xff]
                %215 = vst [vmem:[%s115 + $0x188] sm:$0xff] %v214
                %v216 = vld [vmem:[%s114 + $0x190] sm:$0xff]
                %217 = vst [vmem:[%s115 + $0x190] sm:$0xff] %v216
                %v218 = vld [vmem:[%s114 + $0x198] sm:$0xff]
                %219 = vst [vmem:[%s115 + $0x198] sm:$0xff] %v218
                %v220 = vld [vmem:[%s114 + $0x1a0] sm:$0xff]
                %221 = vst [vmem:[%s115 + $0x1a0] sm:$0xff] %v220
                %v222 = vld [vmem:[%s114 + $0x1a8] sm:$0xff]
                %223 = vst [vmem:[%s115 + $0x1a8] sm:$0xff] %v222
                %v224 = vld [vmem:[%s114 + $0x1b0] sm:$0xff]
                %225 = vst [vmem:[%s115 + $0x1b0] sm:$0xff] %v224
                %v226 = vld [vmem:[%s114 + $0x1b8] sm:$0xff]
                %227 = vst [vmem:[%s115 + $0x1b8] sm:$0xff] %v226
                %v228 = vld [vmem:[%s114 + $0x1c0] sm:$0xff]
                %229 = vst [vmem:[%s115 + $0x1c0] sm:$0xff] %v228
                %v230 = vld [vmem:[%s114 + $0x1c8] sm:$0xff]
                %231 = vst [vmem:[%s115 + $0x1c8] sm:$0xff] %v230
                %v232 = vld [vmem:[%s114 + $0x1d0] sm:$0xff]
                %233 = vst [vmem:[%s115 + $0x1d0] sm:$0xff] %v232
                %v234 = vld [vmem:[%s114 + $0x1d8] sm:$0xff]
                %235 = vst [vmem:[%s115 + $0x1d8] sm:$0xff] %v234
                %v236 = vld [vmem:[%s114 + $0x1e0] sm:$0xff]
                %237 = vst [vmem:[%s115 + $0x1e0] sm:$0xff] %v236
                %v238 = vld [vmem:[%s114 + $0x1e8] sm:$0xff]
                %239 = vst [vmem:[%s115 + $0x1e8] sm:$0xff] %v238
                %v240 = vld [vmem:[%s114 + $0x1f0] sm:$0xff]
                %241 = vst [vmem:[%s115 + $0x1f0] sm:$0xff] %v240
                %v242 = vld [vmem:[%s114 + $0x1f8] sm:$0xff]
                %243 = vst [vmem:[%s115 + $0x1f8] sm:$0xff] %v242
                %v244 = vld [vmem:[%s114 + $0x200] sm:$0xff]
                %245 = vst [vmem:[%s115 + $0x200] sm:$0xff] %v244
                %v246 = vld [vmem:[%s114 + $0x208] sm:$0xff]
                %247 = vst [vmem:[%s115 + $0x208] sm:$0xff] %v246
                %v248 = vld [vmem:[%s114 + $0x210] sm:$0xff]
                %249 = vst [vmem:[%s115 + $0x210] sm:$0xff] %v248
                %v250 = vld [vmem:[%s114 + $0x218] sm:$0xff]
                %251 = vst [vmem:[%s115 + $0x218] sm:$0xff] %v250
                %v252 = vld [vmem:[%s114 + $0x220] sm:$0xff]
                %253 = vst [vmem:[%s115 + $0x220] sm:$0xff] %v252
                %v254 = vld [vmem:[%s114 + $0x228] sm:$0xff]
                %255 = vst [vmem:[%s115 + $0x228] sm:$0xff] %v254
                %v256 = vld [vmem:[%s114 + $0x230] sm:$0xff]
                %257 = vst [vmem:[%s115 + $0x230] sm:$0xff] %v256
                %v258 = vld [vmem:[%s114 + $0x238] sm:$0xff]
                %259 = vst [vmem:[%s115 + $0x238] sm:$0xff] %v258
                %v260 = vld [vmem:[%s114 + $0x240] sm:$0xff]
                %261 = vst [vmem:[%s115 + $0x240] sm:$0xff] %v260
                %v262 = vld [vmem:[%s114 + $0x248] sm:$0xff]
                %263 = vst [vmem:[%s115 + $0x248] sm:$0xff] %v262
                %v264 = vld [vmem:[%s114 + $0x250] sm:$0xff]
                %265 = vst [vmem:[%s115 + $0x250] sm:$0xff] %v264
                %v266 = vld [vmem:[%s114 + $0x258] sm:$0xff]
                %267 = vst [vmem:[%s115 + $0x258] sm:$0xff] %v266
                %v268 = vld [vmem:[%s114 + $0x260] sm:$0xff]
                %269 = vst [vmem:[%s115 + $0x260] sm:$0xff] %v268
                %v270 = vld [vmem:[%s114 + $0x268] sm:$0xff]
                %271 = vst [vmem:[%s115 + $0x268] sm:$0xff] %v270
                %v272 = vld [vmem:[%s114 + $0x270] sm:$0xff]
                %273 = vst [vmem:[%s115 + $0x270] sm:$0xff] %v272
                %v274 = vld [vmem:[%s114 + $0x278] sm:$0xff]
                %275 = vst [vmem:[%s115 + $0x278] sm:$0xff] %v274
                %v276 = vld [vmem:[%s114 + $0x280] sm:$0xff]
                %277 = vst [vmem:[%s115 + $0x280] sm:$0xff] %v276
                %v278 = vld [vmem:[%s114 + $0x288] sm:$0xff]
                %279 = vst [vmem:[%s115 + $0x288] sm:$0xff] %v278
                %v280 = vld [vmem:[%s114 + $0x290] sm:$0xff]
                %281 = vst [vmem:[%s115 + $0x290] sm:$0xff] %v280
                %v282 = vld [vmem:[%s114 + $0x298] sm:$0xff]
                %283 = vst [vmem:[%s115 + $0x298] sm:$0xff] %v282
                %v284 = vld [vmem:[%s114 + $0x2a0] sm:$0xff]
                %285 = vst [vmem:[%s115 + $0x2a0] sm:$0xff] %v284
                %v286 = vld [vmem:[%s114 + $0x2a8] sm:$0xff]
                %287 = vst [vmem:[%s115 + $0x2a8] sm:$0xff] %v286
                %v288 = vld [vmem:[%s114 + $0x2b0] sm:$0xff]
                %289 = vst [vmem:[%s115 + $0x2b0] sm:$0xff] %v288
                %v290 = vld [vmem:[%s114 + $0x2b8] sm:$0xff]
                %291 = vst [vmem:[%s115 + $0x2b8] sm:$0xff] %v290
                %v292 = vld [vmem:[%s114 + $0x2c0] sm:$0xff]
                %293 = vst [vmem:[%s115 + $0x2c0] sm:$0xff] %v292
                %v294 = vld [vmem:[%s114 + $0x2c8] sm:$0xff]
                %295 = vst [vmem:[%s115 + $0x2c8] sm:$0xff] %v294
                %v296 = vld [vmem:[%s114 + $0x2d0] sm:$0xff]
                %297 = vst [vmem:[%s115 + $0x2d0] sm:$0xff] %v296
                %v298 = vld [vmem:[%s114 + $0x2d8] sm:$0xff]
                %299 = vst [vmem:[%s115 + $0x2d8] sm:$0xff] %v298
                %v300 = vld [vmem:[%s114 + $0x2e0] sm:$0xff]
                %301 = vst [vmem:[%s115 + $0x2e0] sm:$0xff] %v300
                %v302 = vld [vmem:[%s114 + $0x2e8] sm:$0xff]
                %303 = vst [vmem:[%s115 + $0x2e8] sm:$0xff] %v302
                %v304 = vld [vmem:[%s114 + $0x2f0] sm:$0xff]
                %305 = vst [vmem:[%s115 + $0x2f0] sm:$0xff] %v304
                %v306 = vld [vmem:[%s114 + $0x2f8] sm:$0xff]
                %307 = vst [vmem:[%s115 + $0x2f8] sm:$0xff] %v306
                %v308 = vld [vmem:[%s114 + $0x300] sm:$0xff]
                %309 = vst [vmem:[%s115 + $0x300] sm:$0xff] %v308
                %v310 = vld [vmem:[%s114 + $0x308] sm:$0xff]
                %311 = vst [vmem:[%s115 + $0x308] sm:$0xff] %v310
                %v312 = vld [vmem:[%s114 + $0x310] sm:$0xff]
                %313 = vst [vmem:[%s115 + $0x310] sm:$0xff] %v312
                %v314 = vld [vmem:[%s114 + $0x318] sm:$0xff]
                %315 = vst [vmem:[%s115 + $0x318] sm:$0xff] %v314
                %v316 = vld [vmem:[%s114 + $0x320] sm:$0xff]
                %317 = vst [vmem:[%s115 + $0x320] sm:$0xff] %v316
                %v318 = vld [vmem:[%s114 + $0x328] sm:$0xff]
                %319 = vst [vmem:[%s115 + $0x328] sm:$0xff] %v318
                %v320 = vld [vmem:[%s114 + $0x330] sm:$0xff]
                %321 = vst [vmem:[%s115 + $0x330] sm:$0xff] %v320
                %v322 = vld [vmem:[%s114 + $0x338] sm:$0xff]
                %323 = vst [vmem:[%s115 + $0x338] sm:$0xff] %v322
                %v324 = vld [vmem:[%s114 + $0x340] sm:$0xff]
                %325 = vst [vmem:[%s115 + $0x340] sm:$0xff] %v324
                %v326 = vld [vmem:[%s114 + $0x348] sm:$0xff]
                %327 = vst [vmem:[%s115 + $0x348] sm:$0xff] %v326
                %v328 = vld [vmem:[%s114 + $0x350] sm:$0xff]
                %329 = vst [vmem:[%s115 + $0x350] sm:$0xff] %v328
                %v330 = vld [vmem:[%s114 + $0x358] sm:$0xff]
                %331 = vst [vmem:[%s115 + $0x358] sm:$0xff] %v330
                %v332 = vld [vmem:[%s114 + $0x360] sm:$0xff]
                %333 = vst [vmem:[%s115 + $0x360] sm:$0xff] %v332
                %v334 = vld [vmem:[%s114 + $0x368] sm:$0xff]
                %335 = vst [vmem:[%s115 + $0x368] sm:$0xff] %v334
                %v336 = vld [vmem:[%s114 + $0x370] sm:$0xff]
                %337 = vst [vmem:[%s115 + $0x370] sm:$0xff] %v336
                %v338 = vld [vmem:[%s114 + $0x378] sm:$0xff]
                %339 = vst [vmem:[%s115 + $0x378] sm:$0xff] %v338
                %v340 = vld [vmem:[%s114 + $0x380] sm:$0xff]
                %341 = vst [vmem:[%s115 + $0x380] sm:$0xff] %v340
                %v342 = vld [vmem:[%s114 + $0x388] sm:$0xff]
                %343 = vst [vmem:[%s115 + $0x388] sm:$0xff] %v342
                %v344 = vld [vmem:[%s114 + $0x390] sm:$0xff]
                %345 = vst [vmem:[%s115 + $0x390] sm:$0xff] %v344
                %v346 = vld [vmem:[%s114 + $0x398] sm:$0xff]
                %347 = vst [vmem:[%s115 + $0x398] sm:$0xff] %v346
                %v348 = vld [vmem:[%s114 + $0x3a0] sm:$0xff]
                %349 = vst [vmem:[%s115 + $0x3a0] sm:$0xff] %v348
                %v350 = vld [vmem:[%s114 + $0x3a8] sm:$0xff]
                %351 = vst [vmem:[%s115 + $0x3a8] sm:$0xff] %v350
                %v352 = vld [vmem:[%s114 + $0x3b0] sm:$0xff]
                %353 = vst [vmem:[%s115 + $0x3b0] sm:$0xff] %v352
                %v354 = vld [vmem:[%s114 + $0x3b8] sm:$0xff]
                %355 = vst [vmem:[%s115 + $0x3b8] sm:$0xff] %v354
                %v356 = vld [vmem:[%s114 + $0x3c0] sm:$0xff]
                %357 = vst [vmem:[%s115 + $0x3c0] sm:$0xff] %v356
                %v358 = vld [vmem:[%s114 + $0x3c8] sm:$0xff]
                %359 = vst [vmem:[%s115 + $0x3c8] sm:$0xff] %v358
                %v360 = vld [vmem:[%s114 + $0x3d0] sm:$0xff]
                %361 = vst [vmem:[%s115 + $0x3d0] sm:$0xff] %v360
                %v362 = vld [vmem:[%s114 + $0x3d8] sm:$0xff]
                %363 = vst [vmem:[%s115 + $0x3d8] sm:$0xff] %v362
                %v364 = vld [vmem:[%s114 + $0x3e0] sm:$0xff]
                %365 = vst [vmem:[%s115 + $0x3e0] sm:$0xff] %v364
                %v366 = vld [vmem:[%s114 + $0x3e8] sm:$0xff]
                %367 = vst [vmem:[%s115 + $0x3e8] sm:$0xff] %v366
                %v368 = vld [vmem:[%s114 + $0x3f0] sm:$0xff]
                %369 = vst [vmem:[%s115 + $0x3f0] sm:$0xff] %v368
                %v370 = vld [vmem:[%s114 + $0x3f8] sm:$0xff]
                %371 = vst [vmem:[%s115 + $0x3f8] sm:$0xff] %v370
                %v372 = vld [vmem:[%s114 + $0x800] sm:$0xff]
                %373 = vst [vmem:[%s115 + $0x400] sm:$0xff] %v372
                %v374 = vld [vmem:[%s114 + $0x808] sm:$0xff]
                %375 = vst [vmem:[%s115 + $0x408] sm:$0xff] %v374
                %v376 = vld [vmem:[%s114 + $0x810] sm:$0xff]
                %377 = vst [vmem:[%s115 + $0x410] sm:$0xff] %v376
                %v378 = vld [vmem:[%s114 + $0x818] sm:$0xff]
                %379 = vst [vmem:[%s115 + $0x418] sm:$0xff] %v378
                %v380 = vld [vmem:[%s114 + $0x820] sm:$0xff]
                %381 = vst [vmem:[%s115 + $0x420] sm:$0xff] %v380
                %v382 = vld [vmem:[%s114 + $0x828] sm:$0xff]
                %383 = vst [vmem:[%s115 + $0x428] sm:$0xff] %v382
                %v384 = vld [vmem:[%s114 + $0x830] sm:$0xff]
                %385 = vst [vmem:[%s115 + $0x430] sm:$0xff] %v384
                %v386 = vld [vmem:[%s114 + $0x838] sm:$0xff]
                %387 = vst [vmem:[%s115 + $0x438] sm:$0xff] %v386
                %v388 = vld [vmem:[%s114 + $0x840] sm:$0xff]
                %389 = vst [vmem:[%s115 + $0x440] sm:$0xff] %v388
                %v390 = vld [vmem:[%s114 + $0x848] sm:$0xff]
                %391 = vst [vmem:[%s115 + $0x448] sm:$0xff] %v390
                %v392 = vld [vmem:[%s114 + $0x850] sm:$0xff]
                %393 = vst [vmem:[%s115 + $0x450] sm:$0xff] %v392
                %v394 = vld [vmem:[%s114 + $0x858] sm:$0xff]
                %395 = vst [vmem:[%s115 + $0x458] sm:$0xff] %v394
                %v396 = vld [vmem:[%s114 + $0x860] sm:$0xff]
                %397 = vst [vmem:[%s115 + $0x460] sm:$0xff] %v396
                %v398 = vld [vmem:[%s114 + $0x868] sm:$0xff]
                %399 = vst [vmem:[%s115 + $0x468] sm:$0xff] %v398
                %v400 = vld [vmem:[%s114 + $0x870] sm:$0xff]
                %401 = vst [vmem:[%s115 + $0x470] sm:$0xff] %v400
                %v402 = vld [vmem:[%s114 + $0x878] sm:$0xff]
                %403 = vst [vmem:[%s115 + $0x478] sm:$0xff] %v402
                %v404 = vld [vmem:[%s114 + $0x880] sm:$0xff]
                %405 = vst [vmem:[%s115 + $0x480] sm:$0xff] %v404
                %v406 = vld [vmem:[%s114 + $0x888] sm:$0xff]
                %407 = vst [vmem:[%s115 + $0x488] sm:$0xff] %v406
                %v408 = vld [vmem:[%s114 + $0x890] sm:$0xff]
                %409 = vst [vmem:[%s115 + $0x490] sm:$0xff] %v408
                %v410 = vld [vmem:[%s114 + $0x898] sm:$0xff]
                %411 = vst [vmem:[%s115 + $0x498] sm:$0xff] %v410
                %v412 = vld [vmem:[%s114 + $0x8a0] sm:$0xff]
                %413 = vst [vmem:[%s115 + $0x4a0] sm:$0xff] %v412
                %v414 = vld [vmem:[%s114 + $0x8a8] sm:$0xff]
                %415 = vst [vmem:[%s115 + $0x4a8] sm:$0xff] %v414
                %v416 = vld [vmem:[%s114 + $0x8b0] sm:$0xff]
                %417 = vst [vmem:[%s115 + $0x4b0] sm:$0xff] %v416
                %v418 = vld [vmem:[%s114 + $0x8b8] sm:$0xff]
                %419 = vst [vmem:[%s115 + $0x4b8] sm:$0xff] %v418
                %v420 = vld [vmem:[%s114 + $0x8c0] sm:$0xff]
                %421 = vst [vmem:[%s115 + $0x4c0] sm:$0xff] %v420
                %v422 = vld [vmem:[%s114 + $0x8c8] sm:$0xff]
                %423 = vst [vmem:[%s115 + $0x4c8] sm:$0xff] %v422
                %v424 = vld [vmem:[%s114 + $0x8d0] sm:$0xff]
                %425 = vst [vmem:[%s115 + $0x4d0] sm:$0xff] %v424
                %v426 = vld [vmem:[%s114 + $0x8d8] sm:$0xff]
                %427 = vst [vmem:[%s115 + $0x4d8] sm:$0xff] %v426
                %v428 = vld [vmem:[%s114 + $0x8e0] sm:$0xff]
                %429 = vst [vmem:[%s115 + $0x4e0] sm:$0xff] %v428
                %v430 = vld [vmem:[%s114 + $0x8e8] sm:$0xff]
                %431 = vst [vmem:[%s115 + $0x4e8] sm:$0xff] %v430
                %v432 = vld [vmem:[%s114 + $0x8f0] sm:$0xff]
                %433 = vst [vmem:[%s115 + $0x4f0] sm:$0xff] %v432
                %v434 = vld [vmem:[%s114 + $0x8f8] sm:$0xff]
                %435 = vst [vmem:[%s115 + $0x4f8] sm:$0xff] %v434
                %v436 = vld [vmem:[%s114 + $0x900] sm:$0xff]
                %437 = vst [vmem:[%s115 + $0x500] sm:$0xff] %v436
                %v438 = vld [vmem:[%s114 + $0x908] sm:$0xff]
                %439 = vst [vmem:[%s115 + $0x508] sm:$0xff] %v438
                %v440 = vld [vmem:[%s114 + $0x910] sm:$0xff]
                %441 = vst [vmem:[%s115 + $0x510] sm:$0xff] %v440
                %v442 = vld [vmem:[%s114 + $0x918] sm:$0xff]
                %443 = vst [vmem:[%s115 + $0x518] sm:$0xff] %v442
                %v444 = vld [vmem:[%s114 + $0x920] sm:$0xff]
                %445 = vst [vmem:[%s115 + $0x520] sm:$0xff] %v444
                %v446 = vld [vmem:[%s114 + $0x928] sm:$0xff]
                %447 = vst [vmem:[%s115 + $0x528] sm:$0xff] %v446
                %v448 = vld [vmem:[%s114 + $0x930] sm:$0xff]
                %449 = vst [vmem:[%s115 + $0x530] sm:$0xff] %v448
                %v450 = vld [vmem:[%s114 + $0x938] sm:$0xff]
                %451 = vst [vmem:[%s115 + $0x538] sm:$0xff] %v450
                %v452 = vld [vmem:[%s114 + $0x940] sm:$0xff]
                %453 = vst [vmem:[%s115 + $0x540] sm:$0xff] %v452
                %v454 = vld [vmem:[%s114 + $0x948] sm:$0xff]
                %455 = vst [vmem:[%s115 + $0x548] sm:$0xff] %v454
                %v456 = vld [vmem:[%s114 + $0x950] sm:$0xff]
                %457 = vst [vmem:[%s115 + $0x550] sm:$0xff] %v456
                %v458 = vld [vmem:[%s114 + $0x958] sm:$0xff]
                %459 = vst [vmem:[%s115 + $0x558] sm:$0xff] %v458
                %v460 = vld [vmem:[%s114 + $0x960] sm:$0xff]
                %461 = vst [vmem:[%s115 + $0x560] sm:$0xff] %v460
                %v462 = vld [vmem:[%s114 + $0x968] sm:$0xff]
                %463 = vst [vmem:[%s115 + $0x568] sm:$0xff] %v462
                %v464 = vld [vmem:[%s114 + $0x970] sm:$0xff]
                %465 = vst [vmem:[%s115 + $0x570] sm:$0xff] %v464
                %v466 = vld [vmem:[%s114 + $0x978] sm:$0xff]
                %467 = vst [vmem:[%s115 + $0x578] sm:$0xff] %v466
                %v468 = vld [vmem:[%s114 + $0x980] sm:$0xff]
                %469 = vst [vmem:[%s115 + $0x580] sm:$0xff] %v468
                %v470 = vld [vmem:[%s114 + $0x988] sm:$0xff]
                %471 = vst [vmem:[%s115 + $0x588] sm:$0xff] %v470
                %v472 = vld [vmem:[%s114 + $0x990] sm:$0xff]
                %473 = vst [vmem:[%s115 + $0x590] sm:$0xff] %v472
                %v474 = vld [vmem:[%s114 + $0x998] sm:$0xff]
                %475 = vst [vmem:[%s115 + $0x598] sm:$0xff] %v474
                %v476 = vld [vmem:[%s114 + $0x9a0] sm:$0xff]
                %477 = vst [vmem:[%s115 + $0x5a0] sm:$0xff] %v476
                %v478 = vld [vmem:[%s114 + $0x9a8] sm:$0xff]
                %479 = vst [vmem:[%s115 + $0x5a8] sm:$0xff] %v478
                %v480 = vld [vmem:[%s114 + $0x9b0] sm:$0xff]
                %481 = vst [vmem:[%s115 + $0x5b0] sm:$0xff] %v480
                %v482 = vld [vmem:[%s114 + $0x9b8] sm:$0xff]
                %483 = vst [vmem:[%s115 + $0x5b8] sm:$0xff] %v482
                %v484 = vld [vmem:[%s114 + $0x9c0] sm:$0xff]
                %485 = vst [vmem:[%s115 + $0x5c0] sm:$0xff] %v484
                %v486 = vld [vmem:[%s114 + $0x9c8] sm:$0xff]
                %487 = vst [vmem:[%s115 + $0x5c8] sm:$0xff] %v486
                %v488 = vld [vmem:[%s114 + $0x9d0] sm:$0xff]
                %489 = vst [vmem:[%s115 + $0x5d0] sm:$0xff] %v488
                %v490 = vld [vmem:[%s114 + $0x9d8] sm:$0xff]
                %491 = vst [vmem:[%s115 + $0x5d8] sm:$0xff] %v490
                %v492 = vld [vmem:[%s114 + $0x9e0] sm:$0xff]
                %493 = vst [vmem:[%s115 + $0x5e0] sm:$0xff] %v492
                %v494 = vld [vmem:[%s114 + $0x9e8] sm:$0xff]
                %495 = vst [vmem:[%s115 + $0x5e8] sm:$0xff] %v494
                %v496 = vld [vmem:[%s114 + $0x9f0] sm:$0xff]
                %497 = vst [vmem:[%s115 + $0x5f0] sm:$0xff] %v496
                %v498 = vld [vmem:[%s114 + $0x9f8] sm:$0xff]
                %499 = vst [vmem:[%s115 + $0x5f8] sm:$0xff] %v498
                %v500 = vld [vmem:[%s114 + $0xa00] sm:$0xff]
                %501 = vst [vmem:[%s115 + $0x600] sm:$0xff] %v500
                %v502 = vld [vmem:[%s114 + $0xa08] sm:$0xff]
                %503 = vst [vmem:[%s115 + $0x608] sm:$0xff] %v502
                %v504 = vld [vmem:[%s114 + $0xa10] sm:$0xff]
                %505 = vst [vmem:[%s115 + $0x610] sm:$0xff] %v504
                %v506 = vld [vmem:[%s114 + $0xa18] sm:$0xff]
                %507 = vst [vmem:[%s115 + $0x618] sm:$0xff] %v506
                %v508 = vld [vmem:[%s114 + $0xa20] sm:$0xff]
                %509 = vst [vmem:[%s115 + $0x620] sm:$0xff] %v508
                %v510 = vld [vmem:[%s114 + $0xa28] sm:$0xff]
                %511 = vst [vmem:[%s115 + $0x628] sm:$0xff] %v510
                %v512 = vld [vmem:[%s114 + $0xa30] sm:$0xff]
                %513 = vst [vmem:[%s115 + $0x630] sm:$0xff] %v512
                %v514 = vld [vmem:[%s114 + $0xa38] sm:$0xff]
                %515 = vst [vmem:[%s115 + $0x638] sm:$0xff] %v514
                %v516 = vld [vmem:[%s114 + $0xa40] sm:$0xff]
                %517 = vst [vmem:[%s115 + $0x640] sm:$0xff] %v516
                %v518 = vld [vmem:[%s114 + $0xa48] sm:$0xff]
                %519 = vst [vmem:[%s115 + $0x648] sm:$0xff] %v518
                %v520 = vld [vmem:[%s114 + $0xa50] sm:$0xff]
                %521 = vst [vmem:[%s115 + $0x650] sm:$0xff] %v520
                %v522 = vld [vmem:[%s114 + $0xa58] sm:$0xff]
                %523 = vst [vmem:[%s115 + $0x658] sm:$0xff] %v522
                %v524 = vld [vmem:[%s114 + $0xa60] sm:$0xff]
                %525 = vst [vmem:[%s115 + $0x660] sm:$0xff] %v524
                %v526 = vld [vmem:[%s114 + $0xa68] sm:$0xff]
                %527 = vst [vmem:[%s115 + $0x668] sm:$0xff] %v526
                %v528 = vld [vmem:[%s114 + $0xa70] sm:$0xff]
                %529 = vst [vmem:[%s115 + $0x670] sm:$0xff] %v528
                %v530 = vld [vmem:[%s114 + $0xa78] sm:$0xff]
                %531 = vst [vmem:[%s115 + $0x678] sm:$0xff] %v530
                %v532 = vld [vmem:[%s114 + $0xa80] sm:$0xff]
                %533 = vst [vmem:[%s115 + $0x680] sm:$0xff] %v532
                %v534 = vld [vmem:[%s114 + $0xa88] sm:$0xff]
                %535 = vst [vmem:[%s115 + $0x688] sm:$0xff] %v534
                %v536 = vld [vmem:[%s114 + $0xa90] sm:$0xff]
                %537 = vst [vmem:[%s115 + $0x690] sm:$0xff] %v536
                %v538 = vld [vmem:[%s114 + $0xa98] sm:$0xff]
                %539 = vst [vmem:[%s115 + $0x698] sm:$0xff] %v538
                %v540 = vld [vmem:[%s114 + $0xaa0] sm:$0xff]
                %541 = vst [vmem:[%s115 + $0x6a0] sm:$0xff] %v540
                %v542 = vld [vmem:[%s114 + $0xaa8] sm:$0xff]
                %543 = vst [vmem:[%s115 + $0x6a8] sm:$0xff] %v542
                %v544 = vld [vmem:[%s114 + $0xab0] sm:$0xff]
                %545 = vst [vmem:[%s115 + $0x6b0] sm:$0xff] %v544
                %v546 = vld [vmem:[%s114 + $0xab8] sm:$0xff]
                %547 = vst [vmem:[%s115 + $0x6b8] sm:$0xff] %v546
                %v548 = vld [vmem:[%s114 + $0xac0] sm:$0xff]
                %549 = vst [vmem:[%s115 + $0x6c0] sm:$0xff] %v548
                %v550 = vld [vmem:[%s114 + $0xac8] sm:$0xff]
                %551 = vst [vmem:[%s115 + $0x6c8] sm:$0xff] %v550
                %v552 = vld [vmem:[%s114 + $0xad0] sm:$0xff]
                %553 = vst [vmem:[%s115 + $0x6d0] sm:$0xff] %v552
                %v554 = vld [vmem:[%s114 + $0xad8] sm:$0xff]
                %555 = vst [vmem:[%s115 + $0x6d8] sm:$0xff] %v554
                %v556 = vld [vmem:[%s114 + $0xae0] sm:$0xff]
                %557 = vst [vmem:[%s115 + $0x6e0] sm:$0xff] %v556
                %v558 = vld [vmem:[%s114 + $0xae8] sm:$0xff]
                %559 = vst [vmem:[%s115 + $0x6e8] sm:$0xff] %v558
                %v560 = vld [vmem:[%s114 + $0xaf0] sm:$0xff]
                %561 = vst [vmem:[%s115 + $0x6f0] sm:$0xff] %v560
                %v562 = vld [vmem:[%s114 + $0xaf8] sm:$0xff]
                %563 = vst [vmem:[%s115 + $0x6f8] sm:$0xff] %v562
                %v564 = vld [vmem:[%s114 + $0xb00] sm:$0xff]
                %565 = vst [vmem:[%s115 + $0x700] sm:$0xff] %v564
                %v566 = vld [vmem:[%s114 + $0xb08] sm:$0xff]
                %567 = vst [vmem:[%s115 + $0x708] sm:$0xff] %v566
                %v568 = vld [vmem:[%s114 + $0xb10] sm:$0xff]
                %569 = vst [vmem:[%s115 + $0x710] sm:$0xff] %v568
                %v570 = vld [vmem:[%s114 + $0xb18] sm:$0xff]
                %571 = vst [vmem:[%s115 + $0x718] sm:$0xff] %v570
                %v572 = vld [vmem:[%s114 + $0xb20] sm:$0xff]
                %573 = vst [vmem:[%s115 + $0x720] sm:$0xff] %v572
                %v574 = vld [vmem:[%s114 + $0xb28] sm:$0xff]
                %575 = vst [vmem:[%s115 + $0x728] sm:$0xff] %v574
                %v576 = vld [vmem:[%s114 + $0xb30] sm:$0xff]
                %577 = vst [vmem:[%s115 + $0x730] sm:$0xff] %v576
                %v578 = vld [vmem:[%s114 + $0xb38] sm:$0xff]
                %579 = vst [vmem:[%s115 + $0x738] sm:$0xff] %v578
                %v580 = vld [vmem:[%s114 + $0xb40] sm:$0xff]
                %581 = vst [vmem:[%s115 + $0x740] sm:$0xff] %v580
                %v582 = vld [vmem:[%s114 + $0xb48] sm:$0xff]
                %583 = vst [vmem:[%s115 + $0x748] sm:$0xff] %v582
                %v584 = vld [vmem:[%s114 + $0xb50] sm:$0xff]
                %585 = vst [vmem:[%s115 + $0x750] sm:$0xff] %v584
                %v586 = vld [vmem:[%s114 + $0xb58] sm:$0xff]
                %587 = vst [vmem:[%s115 + $0x758] sm:$0xff] %v586
                %v588 = vld [vmem:[%s114 + $0xb60] sm:$0xff]
                %589 = vst [vmem:[%s115 + $0x760] sm:$0xff] %v588
                %v590 = vld [vmem:[%s114 + $0xb68] sm:$0xff]
                %591 = vst [vmem:[%s115 + $0x768] sm:$0xff] %v590
                %v592 = vld [vmem:[%s114 + $0xb70] sm:$0xff]
                %593 = vst [vmem:[%s115 + $0x770] sm:$0xff] %v592
                %v594 = vld [vmem:[%s114 + $0xb78] sm:$0xff]
                %595 = vst [vmem:[%s115 + $0x778] sm:$0xff] %v594
                %v596 = vld [vmem:[%s114 + $0xb80] sm:$0xff]
                %597 = vst [vmem:[%s115 + $0x780] sm:$0xff] %v596
                %v598 = vld [vmem:[%s114 + $0xb88] sm:$0xff]
                %599 = vst [vmem:[%s115 + $0x788] sm:$0xff] %v598
                %v600 = vld [vmem:[%s114 + $0xb90] sm:$0xff]
                %601 = vst [vmem:[%s115 + $0x790] sm:$0xff] %v600
                %v602 = vld [vmem:[%s114 + $0xb98] sm:$0xff]
                %603 = vst [vmem:[%s115 + $0x798] sm:$0xff] %v602
                %v604 = vld [vmem:[%s114 + $0xba0] sm:$0xff]
                %605 = vst [vmem:[%s115 + $0x7a0] sm:$0xff] %v604
                %v606 = vld [vmem:[%s114 + $0xba8] sm:$0xff]
                %607 = vst [vmem:[%s115 + $0x7a8] sm:$0xff] %v606
                %v608 = vld [vmem:[%s114 + $0xbb0] sm:$0xff]
                %609 = vst [vmem:[%s115 + $0x7b0] sm:$0xff] %v608
                %v610 = vld [vmem:[%s114 + $0xbb8] sm:$0xff]
                %611 = vst [vmem:[%s115 + $0x7b8] sm:$0xff] %v610
                %v612 = vld [vmem:[%s114 + $0xbc0] sm:$0xff]
                %613 = vst [vmem:[%s115 + $0x7c0] sm:$0xff] %v612
                %v614 = vld [vmem:[%s114 + $0xbc8] sm:$0xff]
                %615 = vst [vmem:[%s115 + $0x7c8] sm:$0xff] %v614
                %v616 = vld [vmem:[%s114 + $0xbd0] sm:$0xff]
                %617 = vst [vmem:[%s115 + $0x7d0] sm:$0xff] %v616
                %v618 = vld [vmem:[%s114 + $0xbd8] sm:$0xff]
                %619 = vst [vmem:[%s115 + $0x7d8] sm:$0xff] %v618
                %v620 = vld [vmem:[%s114 + $0xbe0] sm:$0xff]
                %621 = vst [vmem:[%s115 + $0x7e0] sm:$0xff] %v620
                %v622 = vld [vmem:[%s114 + $0xbe8] sm:$0xff]
                %623 = vst [vmem:[%s115 + $0x7e8] sm:$0xff] %v622
                %v624 = vld [vmem:[%s114 + $0xbf0] sm:$0xff]
                %625 = vst [vmem:[%s115 + $0x7f0] sm:$0xff] %v624
                %v626 = vld [vmem:[%s114 + $0xbf8] sm:$0xff]
                %627 = vst [vmem:[%s115 + $0x7f8] sm:$0xff] %v626
                %v628 = vld [vmem:[%s114 + $0x1000] sm:$0xff]
                %629 = vst [vmem:[%s115 + $0x800] sm:$0xff] %v628
                %v630 = vld [vmem:[%s114 + $0x1008] sm:$0xff]
                %631 = vst [vmem:[%s115 + $0x808] sm:$0xff] %v630
                %v632 = vld [vmem:[%s114 + $0x1010] sm:$0xff]
                %633 = vst [vmem:[%s115 + $0x810] sm:$0xff] %v632
                %v634 = vld [vmem:[%s114 + $0x1018] sm:$0xff]
                %635 = vst [vmem:[%s115 + $0x818] sm:$0xff] %v634
                %v636 = vld [vmem:[%s114 + $0x1020] sm:$0xff]
                %637 = vst [vmem:[%s115 + $0x820] sm:$0xff] %v636
                %v638 = vld [vmem:[%s114 + $0x1028] sm:$0xff]
                %639 = vst [vmem:[%s115 + $0x828] sm:$0xff] %v638
                %v640 = vld [vmem:[%s114 + $0x1030] sm:$0xff]
                %641 = vst [vmem:[%s115 + $0x830] sm:$0xff] %v640
                %v642 = vld [vmem:[%s114 + $0x1038] sm:$0xff]
                %643 = vst [vmem:[%s115 + $0x838] sm:$0xff] %v642
                %v644 = vld [vmem:[%s114 + $0x1040] sm:$0xff]
                %645 = vst [vmem:[%s115 + $0x840] sm:$0xff] %v644
                %v646 = vld [vmem:[%s114 + $0x1048] sm:$0xff]
                %647 = vst [vmem:[%s115 + $0x848] sm:$0xff] %v646
                %v648 = vld [vmem:[%s114 + $0x1050] sm:$0xff]
                %649 = vst [vmem:[%s115 + $0x850] sm:$0xff] %v648
                %v650 = vld [vmem:[%s114 + $0x1058] sm:$0xff]
                %651 = vst [vmem:[%s115 + $0x858] sm:$0xff] %v650
                %v652 = vld [vmem:[%s114 + $0x1060] sm:$0xff]
                %653 = vst [vmem:[%s115 + $0x860] sm:$0xff] %v652
                %v654 = vld [vmem:[%s114 + $0x1068] sm:$0xff]
                %655 = vst [vmem:[%s115 + $0x868] sm:$0xff] %v654
                %v656 = vld [vmem:[%s114 + $0x1070] sm:$0xff]
                %657 = vst [vmem:[%s115 + $0x870] sm:$0xff] %v656
                %v658 = vld [vmem:[%s114 + $0x1078] sm:$0xff]
                %659 = vst [vmem:[%s115 + $0x878] sm:$0xff] %v658
                %v660 = vld [vmem:[%s114 + $0x1080] sm:$0xff]
                %661 = vst [vmem:[%s115 + $0x880] sm:$0xff] %v660
                %v662 = vld [vmem:[%s114 + $0x1088] sm:$0xff]
                %663 = vst [vmem:[%s115 + $0x888] sm:$0xff] %v662
                %v664 = vld [vmem:[%s114 + $0x1090] sm:$0xff]
                %665 = vst [vmem:[%s115 + $0x890] sm:$0xff] %v664
                %v666 = vld [vmem:[%s114 + $0x1098] sm:$0xff]
                %667 = vst [vmem:[%s115 + $0x898] sm:$0xff] %v666
                %v668 = vld [vmem:[%s114 + $0x10a0] sm:$0xff]
                %669 = vst [vmem:[%s115 + $0x8a0] sm:$0xff] %v668
                %v670 = vld [vmem:[%s114 + $0x10a8] sm:$0xff]
                %671 = vst [vmem:[%s115 + $0x8a8] sm:$0xff] %v670
                %v672 = vld [vmem:[%s114 + $0x10b0] sm:$0xff]
                %673 = vst [vmem:[%s115 + $0x8b0] sm:$0xff] %v672
                %v674 = vld [vmem:[%s114 + $0x10b8] sm:$0xff]
                %675 = vst [vmem:[%s115 + $0x8b8] sm:$0xff] %v674
                %v676 = vld [vmem:[%s114 + $0x10c0] sm:$0xff]
                %677 = vst [vmem:[%s115 + $0x8c0] sm:$0xff] %v676
                %v678 = vld [vmem:[%s114 + $0x10c8] sm:$0xff]
                %679 = vst [vmem:[%s115 + $0x8c8] sm:$0xff] %v678
                %v680 = vld [vmem:[%s114 + $0x10d0] sm:$0xff]
                %681 = vst [vmem:[%s115 + $0x8d0] sm:$0xff] %v680
                %v682 = vld [vmem:[%s114 + $0x10d8] sm:$0xff]
                %683 = vst [vmem:[%s115 + $0x8d8] sm:$0xff] %v682
                %v684 = vld [vmem:[%s114 + $0x10e0] sm:$0xff]
                %685 = vst [vmem:[%s115 + $0x8e0] sm:$0xff] %v684
                %v686 = vld [vmem:[%s114 + $0x10e8] sm:$0xff]
                %687 = vst [vmem:[%s115 + $0x8e8] sm:$0xff] %v686
                %v688 = vld [vmem:[%s114 + $0x10f0] sm:$0xff]
                %689 = vst [vmem:[%s115 + $0x8f0] sm:$0xff] %v688
                %v690 = vld [vmem:[%s114 + $0x10f8] sm:$0xff]
                %691 = vst [vmem:[%s115 + $0x8f8] sm:$0xff] %v690
                %v692 = vld [vmem:[%s114 + $0x1100] sm:$0xff]
                %693 = vst [vmem:[%s115 + $0x900] sm:$0xff] %v692
                %v694 = vld [vmem:[%s114 + $0x1108] sm:$0xff]
                %695 = vst [vmem:[%s115 + $0x908] sm:$0xff] %v694
                %v696 = vld [vmem:[%s114 + $0x1110] sm:$0xff]
                %697 = vst [vmem:[%s115 + $0x910] sm:$0xff] %v696
                %v698 = vld [vmem:[%s114 + $0x1118] sm:$0xff]
                %699 = vst [vmem:[%s115 + $0x918] sm:$0xff] %v698
                %v700 = vld [vmem:[%s114 + $0x1120] sm:$0xff]
                %701 = vst [vmem:[%s115 + $0x920] sm:$0xff] %v700
                %v702 = vld [vmem:[%s114 + $0x1128] sm:$0xff]
                %703 = vst [vmem:[%s115 + $0x928] sm:$0xff] %v702
                %v704 = vld [vmem:[%s114 + $0x1130] sm:$0xff]
                %705 = vst [vmem:[%s115 + $0x930] sm:$0xff] %v704
                %v706 = vld [vmem:[%s114 + $0x1138] sm:$0xff]
                %707 = vst [vmem:[%s115 + $0x938] sm:$0xff] %v706
                %v708 = vld [vmem:[%s114 + $0x1140] sm:$0xff]
                %709 = vst [vmem:[%s115 + $0x940] sm:$0xff] %v708
                %v710 = vld [vmem:[%s114 + $0x1148] sm:$0xff]
                %711 = vst [vmem:[%s115 + $0x948] sm:$0xff] %v710
                %v712 = vld [vmem:[%s114 + $0x1150] sm:$0xff]
                %713 = vst [vmem:[%s115 + $0x950] sm:$0xff] %v712
                %v714 = vld [vmem:[%s114 + $0x1158] sm:$0xff]
                %715 = vst [vmem:[%s115 + $0x958] sm:$0xff] %v714
                %v716 = vld [vmem:[%s114 + $0x1160] sm:$0xff]
                %717 = vst [vmem:[%s115 + $0x960] sm:$0xff] %v716
                %v718 = vld [vmem:[%s114 + $0x1168] sm:$0xff]
                %719 = vst [vmem:[%s115 + $0x968] sm:$0xff] %v718
                %v720 = vld [vmem:[%s114 + $0x1170] sm:$0xff]
                %721 = vst [vmem:[%s115 + $0x970] sm:$0xff] %v720
                %v722 = vld [vmem:[%s114 + $0x1178] sm:$0xff]
                %723 = vst [vmem:[%s115 + $0x978] sm:$0xff] %v722
                %v724 = vld [vmem:[%s114 + $0x1180] sm:$0xff]
                %725 = vst [vmem:[%s115 + $0x980] sm:$0xff] %v724
                %v726 = vld [vmem:[%s114 + $0x1188] sm:$0xff]
                %727 = vst [vmem:[%s115 + $0x988] sm:$0xff] %v726
                %v728 = vld [vmem:[%s114 + $0x1190] sm:$0xff]
                %729 = vst [vmem:[%s115 + $0x990] sm:$0xff] %v728
                %v730 = vld [vmem:[%s114 + $0x1198] sm:$0xff]
                %731 = vst [vmem:[%s115 + $0x998] sm:$0xff] %v730
                %v732 = vld [vmem:[%s114 + $0x11a0] sm:$0xff]
                %733 = vst [vmem:[%s115 + $0x9a0] sm:$0xff] %v732
                %v734 = vld [vmem:[%s114 + $0x11a8] sm:$0xff]
                %735 = vst [vmem:[%s115 + $0x9a8] sm:$0xff] %v734
                %v736 = vld [vmem:[%s114 + $0x11b0] sm:$0xff]
                %737 = vst [vmem:[%s115 + $0x9b0] sm:$0xff] %v736
                %v738 = vld [vmem:[%s114 + $0x11b8] sm:$0xff]
                %739 = vst [vmem:[%s115 + $0x9b8] sm:$0xff] %v738
                %v740 = vld [vmem:[%s114 + $0x11c0] sm:$0xff]
                %741 = vst [vmem:[%s115 + $0x9c0] sm:$0xff] %v740
                %v742 = vld [vmem:[%s114 + $0x11c8] sm:$0xff]
                %743 = vst [vmem:[%s115 + $0x9c8] sm:$0xff] %v742
                %v744 = vld [vmem:[%s114 + $0x11d0] sm:$0xff]
                %745 = vst [vmem:[%s115 + $0x9d0] sm:$0xff] %v744
                %v746 = vld [vmem:[%s114 + $0x11d8] sm:$0xff]
                %747 = vst [vmem:[%s115 + $0x9d8] sm:$0xff] %v746
                %v748 = vld [vmem:[%s114 + $0x11e0] sm:$0xff]
                %749 = vst [vmem:[%s115 + $0x9e0] sm:$0xff] %v748
                %v750 = vld [vmem:[%s114 + $0x11e8] sm:$0xff]
                %751 = vst [vmem:[%s115 + $0x9e8] sm:$0xff] %v750
                %v752 = vld [vmem:[%s114 + $0x11f0] sm:$0xff]
                %753 = vst [vmem:[%s115 + $0x9f0] sm:$0xff] %v752
                %v754 = vld [vmem:[%s114 + $0x11f8] sm:$0xff]
                %755 = vst [vmem:[%s115 + $0x9f8] sm:$0xff] %v754
                %v756 = vld [vmem:[%s114 + $0x1200] sm:$0xff]
                %757 = vst [vmem:[%s115 + $0xa00] sm:$0xff] %v756
                %v758 = vld [vmem:[%s114 + $0x1208] sm:$0xff]
                %759 = vst [vmem:[%s115 + $0xa08] sm:$0xff] %v758
                %v760 = vld [vmem:[%s114 + $0x1210] sm:$0xff]
                %761 = vst [vmem:[%s115 + $0xa10] sm:$0xff] %v760
                %v762 = vld [vmem:[%s114 + $0x1218] sm:$0xff]
                %763 = vst [vmem:[%s115 + $0xa18] sm:$0xff] %v762
                %v764 = vld [vmem:[%s114 + $0x1220] sm:$0xff]
                %765 = vst [vmem:[%s115 + $0xa20] sm:$0xff] %v764
                %v766 = vld [vmem:[%s114 + $0x1228] sm:$0xff]
                %767 = vst [vmem:[%s115 + $0xa28] sm:$0xff] %v766
                %v768 = vld [vmem:[%s114 + $0x1230] sm:$0xff]
                %769 = vst [vmem:[%s115 + $0xa30] sm:$0xff] %v768
                %v770 = vld [vmem:[%s114 + $0x1238] sm:$0xff]
                %771 = vst [vmem:[%s115 + $0xa38] sm:$0xff] %v770
                %v772 = vld [vmem:[%s114 + $0x1240] sm:$0xff]
                %773 = vst [vmem:[%s115 + $0xa40] sm:$0xff] %v772
                %v774 = vld [vmem:[%s114 + $0x1248] sm:$0xff]
                %775 = vst [vmem:[%s115 + $0xa48] sm:$0xff] %v774
                %v776 = vld [vmem:[%s114 + $0x1250] sm:$0xff]
                %777 = vst [vmem:[%s115 + $0xa50] sm:$0xff] %v776
                %v778 = vld [vmem:[%s114 + $0x1258] sm:$0xff]
                %779 = vst [vmem:[%s115 + $0xa58] sm:$0xff] %v778
                %v780 = vld [vmem:[%s114 + $0x1260] sm:$0xff]
                %781 = vst [vmem:[%s115 + $0xa60] sm:$0xff] %v780
                %v782 = vld [vmem:[%s114 + $0x1268] sm:$0xff]
                %783 = vst [vmem:[%s115 + $0xa68] sm:$0xff] %v782
                %v784 = vld [vmem:[%s114 + $0x1270] sm:$0xff]
                %785 = vst [vmem:[%s115 + $0xa70] sm:$0xff] %v784
                %v786 = vld [vmem:[%s114 + $0x1278] sm:$0xff]
                %787 = vst [vmem:[%s115 + $0xa78] sm:$0xff] %v786
                %v788 = vld [vmem:[%s114 + $0x1280] sm:$0xff]
                %789 = vst [vmem:[%s115 + $0xa80] sm:$0xff] %v788
                %v790 = vld [vmem:[%s114 + $0x1288] sm:$0xff]
                %791 = vst [vmem:[%s115 + $0xa88] sm:$0xff] %v790
                %v792 = vld [vmem:[%s114 + $0x1290] sm:$0xff]
                %793 = vst [vmem:[%s115 + $0xa90] sm:$0xff] %v792
                %v794 = vld [vmem:[%s114 + $0x1298] sm:$0xff]
                %795 = vst [vmem:[%s115 + $0xa98] sm:$0xff] %v794
                %v796 = vld [vmem:[%s114 + $0x12a0] sm:$0xff]
                %797 = vst [vmem:[%s115 + $0xaa0] sm:$0xff] %v796
                %v798 = vld [vmem:[%s114 + $0x12a8] sm:$0xff]
                %799 = vst [vmem:[%s115 + $0xaa8] sm:$0xff] %v798
                %v800 = vld [vmem:[%s114 + $0x12b0] sm:$0xff]
                %801 = vst [vmem:[%s115 + $0xab0] sm:$0xff] %v800
                %v802 = vld [vmem:[%s114 + $0x12b8] sm:$0xff]
                %803 = vst [vmem:[%s115 + $0xab8] sm:$0xff] %v802
                %v804 = vld [vmem:[%s114 + $0x12c0] sm:$0xff]
                %805 = vst [vmem:[%s115 + $0xac0] sm:$0xff] %v804
                %v806 = vld [vmem:[%s114 + $0x12c8] sm:$0xff]
                %807 = vst [vmem:[%s115 + $0xac8] sm:$0xff] %v806
                %v808 = vld [vmem:[%s114 + $0x12d0] sm:$0xff]
                %809 = vst [vmem:[%s115 + $0xad0] sm:$0xff] %v808
                %v810 = vld [vmem:[%s114 + $0x12d8] sm:$0xff]
                %811 = vst [vmem:[%s115 + $0xad8] sm:$0xff] %v810
                %v812 = vld [vmem:[%s114 + $0x12e0] sm:$0xff]
                %813 = vst [vmem:[%s115 + $0xae0] sm:$0xff] %v812
                %v814 = vld [vmem:[%s114 + $0x12e8] sm:$0xff]
                %815 = vst [vmem:[%s115 + $0xae8] sm:$0xff] %v814
                %v816 = vld [vmem:[%s114 + $0x12f0] sm:$0xff]
                %817 = vst [vmem:[%s115 + $0xaf0] sm:$0xff] %v816
                %v818 = vld [vmem:[%s114 + $0x12f8] sm:$0xff]
                %819 = vst [vmem:[%s115 + $0xaf8] sm:$0xff] %v818
                %v820 = vld [vmem:[%s114 + $0x1300] sm:$0xff]
                %821 = vst [vmem:[%s115 + $0xb00] sm:$0xff] %v820
                %v822 = vld [vmem:[%s114 + $0x1308] sm:$0xff]
                %823 = vst [vmem:[%s115 + $0xb08] sm:$0xff] %v822
                %v824 = vld [vmem:[%s114 + $0x1310] sm:$0xff]
                %825 = vst [vmem:[%s115 + $0xb10] sm:$0xff] %v824
                %v826 = vld [vmem:[%s114 + $0x1318] sm:$0xff]
                %827 = vst [vmem:[%s115 + $0xb18] sm:$0xff] %v826
                %v828 = vld [vmem:[%s114 + $0x1320] sm:$0xff]
                %829 = vst [vmem:[%s115 + $0xb20] sm:$0xff] %v828
                %v830 = vld [vmem:[%s114 + $0x1328] sm:$0xff]
                %831 = vst [vmem:[%s115 + $0xb28] sm:$0xff] %v830
                %v832 = vld [vmem:[%s114 + $0x1330] sm:$0xff]
                %833 = vst [vmem:[%s115 + $0xb30] sm:$0xff] %v832
                %v834 = vld [vmem:[%s114 + $0x1338] sm:$0xff]
                %835 = vst [vmem:[%s115 + $0xb38] sm:$0xff] %v834
                %v836 = vld [vmem:[%s114 + $0x1340] sm:$0xff]
                %837 = vst [vmem:[%s115 + $0xb40] sm:$0xff] %v836
                %v838 = vld [vmem:[%s114 + $0x1348] sm:$0xff]
                %839 = vst [vmem:[%s115 + $0xb48] sm:$0xff] %v838
                %v840 = vld [vmem:[%s114 + $0x1350] sm:$0xff]
                %841 = vst [vmem:[%s115 + $0xb50] sm:$0xff] %v840
                %v842 = vld [vmem:[%s114 + $0x1358] sm:$0xff]
                %843 = vst [vmem:[%s115 + $0xb58] sm:$0xff] %v842
                %v844 = vld [vmem:[%s114 + $0x1360] sm:$0xff]
                %845 = vst [vmem:[%s115 + $0xb60] sm:$0xff] %v844
                %v846 = vld [vmem:[%s114 + $0x1368] sm:$0xff]
                %847 = vst [vmem:[%s115 + $0xb68] sm:$0xff] %v846
                %v848 = vld [vmem:[%s114 + $0x1370] sm:$0xff]
                %849 = vst [vmem:[%s115 + $0xb70] sm:$0xff] %v848
                %v850 = vld [vmem:[%s114 + $0x1378] sm:$0xff]
                %851 = vst [vmem:[%s115 + $0xb78] sm:$0xff] %v850
                %v852 = vld [vmem:[%s114 + $0x1380] sm:$0xff]
                %853 = vst [vmem:[%s115 + $0xb80] sm:$0xff] %v852
                %v854 = vld [vmem:[%s114 + $0x1388] sm:$0xff]
                %855 = vst [vmem:[%s115 + $0xb88] sm:$0xff] %v854
                %v856 = vld [vmem:[%s114 + $0x1390] sm:$0xff]
                %857 = vst [vmem:[%s115 + $0xb90] sm:$0xff] %v856
                %v858 = vld [vmem:[%s114 + $0x1398] sm:$0xff]
                %859 = vst [vmem:[%s115 + $0xb98] sm:$0xff] %v858
                %v860 = vld [vmem:[%s114 + $0x13a0] sm:$0xff]
                %861 = vst [vmem:[%s115 + $0xba0] sm:$0xff] %v860
                %v862 = vld [vmem:[%s114 + $0x13a8] sm:$0xff]
                %863 = vst [vmem:[%s115 + $0xba8] sm:$0xff] %v862
                %v864 = vld [vmem:[%s114 + $0x13b0] sm:$0xff]
                %865 = vst [vmem:[%s115 + $0xbb0] sm:$0xff] %v864
                %v866 = vld [vmem:[%s114 + $0x13b8] sm:$0xff]
                %867 = vst [vmem:[%s115 + $0xbb8] sm:$0xff] %v866
                %v868 = vld [vmem:[%s114 + $0x13c0] sm:$0xff]
                %869 = vst [vmem:[%s115 + $0xbc0] sm:$0xff] %v868
                %v870 = vld [vmem:[%s114 + $0x13c8] sm:$0xff]
                %871 = vst [vmem:[%s115 + $0xbc8] sm:$0xff] %v870
                %v872 = vld [vmem:[%s114 + $0x13d0] sm:$0xff]
                %873 = vst [vmem:[%s115 + $0xbd0] sm:$0xff] %v872
                %v874 = vld [vmem:[%s114 + $0x13d8] sm:$0xff]
                %875 = vst [vmem:[%s115 + $0xbd8] sm:$0xff] %v874
                %v876 = vld [vmem:[%s114 + $0x13e0] sm:$0xff]
                %877 = vst [vmem:[%s115 + $0xbe0] sm:$0xff] %v876
                %v878 = vld [vmem:[%s114 + $0x13e8] sm:$0xff]
                %879 = vst [vmem:[%s115 + $0xbe8] sm:$0xff] %v878
                %v880 = vld [vmem:[%s114 + $0x13f0] sm:$0xff]
                %881 = vst [vmem:[%s115 + $0xbf0] sm:$0xff] %v880
                %v882 = vld [vmem:[%s114 + $0x13f8] sm:$0xff]
                %883 = vst [vmem:[%s115 + $0xbf8] sm:$0xff] %v882
              $region33: #{binary_rkl_dirichlet_mediator_loss.1} parent=27 // loop_footer
                %s113 = sadd.s32 1, %s109
              $region34: #{binary_rkl_dirichlet_mediator_loss.1} parent=27 // loop_footer_branch
                %108 = sbr.rel target = $region30
              $region35: #{binary_rkl_dirichlet_mediator_loss.1} parent=27 // loop_exit
                _
            $region28: #{binary_rkl_dirichlet_mediator_loss.1} parent=23 // pred_fallthru
              _
            // Predicated region
            $region36: #{binary_rkl_dirichlet_mediator_loss.1} parent=23 // pred_check
              _
            $region37: #{binary_rkl_dirichlet_mediator_loss.1} parent=23 // pred_check_branch
              %885 = sbr.rel target = $region39
            $region38: #{binary_rkl_dirichlet_mediator_loss.1} parent=23 // pred_region
              _
            $region39: #{binary_rkl_dirichlet_mediator_loss.1} parent=23 // pred_fallthru
              _
          $region24: #{binary_rkl_dirichlet_mediator_loss.1} parent=19 // pred_fallthru
            _
          %886 = vnop
        $region20: #{binary_rkl_dirichlet_mediator_loss.1} parent=15 // pred_fallthru
          _
      $region16: #{binary_rkl_dirichlet_mediator_loss.1} parent=5 // pred_fallthru
        _
      %p887 = scmp.le.s32.totalorder 1, %s7
      %p888 = scmp.lt.s32.totalorder %s7, 3
      %p889 = pnand %p887, %p888
      %p890 = pneg %p889
      // Predicated region
      $region40: #{binary_rkl_dirichlet_mediator_loss.1} parent=5 // pred_check
        _
      $region41: #{binary_rkl_dirichlet_mediator_loss.1} parent=5 // pred_check_branch
        %892 = sbr.rel (%p889) target = $region43
      $region42: #{binary_rkl_dirichlet_mediator_loss.1} parent=5 // pred_region
        %s893 = ssub.s32 %s7, 1
        %s894 = sand.u32 %s34, 1
        %s895 = sand.u32 %s34, 1
        %s896 = smul.addr %s895, 3072
        %s897 = scalar_lea.vmem [#allocation3], %s896
        // Predicated region
        $region44: #{binary_rkl_dirichlet_mediator_loss.1} parent=42 // pred_check
          %p898 = pneg %p47
        $region45: #{binary_rkl_dirichlet_mediator_loss.1} parent=42 // pred_check_branch
          %900 = sbr.rel (%p898) target = $region47
        $region46: #{binary_rkl_dirichlet_mediator_loss.1} parent=42 // pred_region
          _
        $region47: #{binary_rkl_dirichlet_mediator_loss.1} parent=42 // pred_fallthru
          _
        %s901 = sand.u32 %s34, 1
        %s902 = sand.u32 %s34, 1
        %s903 = smul.addr %s902, 3072
        %s904 = scalar_lea.vmem [#allocation3], %s903
        %p905 = pneg %p47
        %p906 = pneg %p44
        %p907 = pneg %p73
        %p908 = pneg %p70
        %s909 = smul.u32 16, %s16
        %p910 = scmp.lt.s32.totalorder %s909, 31
        %s911 = scalar_select %p910, %s909, 31
        %s912 = scalar_lea.vmem %s1, %s911
        %s913 = sadd.s32 %s16, %s17
        %s914 = smul.u32 8, %s913
        %s915 = smul.u32 16, %s16
        %p916 = scmp.lt.s32.totalorder %s915, 31
        %s917 = scalar_select %p916, %s915, 31
        %s918 = scalar_lea.vmem %s1, %s917
        %s919 = smul.u32 16, %s16
        %p920 = scmp.eq.s32.totalorder %s17, 0
        // Predicated region
        $region48: #{binary_rkl_dirichlet_mediator_loss.1} parent=42 // pred_check
          %p921 = pneg %p920
        $region49: #{binary_rkl_dirichlet_mediator_loss.1} parent=42 // pred_check_branch
          %923 = sbr.rel (%p921) target = $region51
        $region50: #{binary_rkl_dirichlet_mediator_loss.1} parent=42 // pred_region
          %924 = vst [vmem:[#allocation2] sm:$0xff] 0.0
          %925 = vst [vmem:[#allocation2 + $0x8] sm:$0xff] 0.0
          %926 = vst [vmem:[#allocation2 + $0x10] sm:$0xff] 0.0
          %927 = vst [vmem:[#allocation2 + $0x18] sm:$0xff] 0.0
          %928 = vst [vmem:[#allocation2 + $0x20] sm:$0xff] 0.0
          %929 = vst [vmem:[#allocation2 + $0x28] sm:$0xff] 0.0
          %930 = vst [vmem:[#allocation2 + $0x30] sm:$0xff] 0.0
          %931 = vst [vmem:[#allocation2 + $0x38] sm:$0xff] 0.0
          %932 = vst [vmem:[#allocation2 + $0x40] sm:$0xff] 0.0
          %933 = vst [vmem:[#allocation2 + $0x48] sm:$0xff] 0.0
          %934 = vst [vmem:[#allocation2 + $0x50] sm:$0xff] 0.0
          %935 = vst [vmem:[#allocation2 + $0x58] sm:$0xff] 0.0
          %936 = vst [vmem:[#allocation2 + $0x60] sm:$0xff] 0.0
          %937 = vst [vmem:[#allocation2 + $0x68] sm:$0xff] 0.0
          %938 = vst [vmem:[#allocation2 + $0x70] sm:$0xff] 0.0
          %939 = vst [vmem:[#allocation2 + $0x78] sm:$0xff] 0.0
        $region51: #{binary_rkl_dirichlet_mediator_loss.1} parent=42 // pred_fallthru
          _
        loop: start=0, step=1, limit=8
        $region52: #{binary_rkl_dirichlet_mediator_loss.1} parent=42 // loop_pre_header
          _
        $region53: #{binary_rkl_dirichlet_mediator_loss.1} parent=42 // loop_header
          %s941 = sphi 0, %s945
          %p942 = scmp.ge.s32.totalorder %s941, 8
        $region54: #{binary_rkl_dirichlet_mediator_loss.1} parent=42 // loop_header_branch
          %944 = sbr.rel (%p942) target = $region58
        $region55: #{binary_rkl_dirichlet_mediator_loss.1} parent=42 // loop_body
          %s946 = smul.u32 %s941, 8
          %s947 = sshra.s32 %s946, 3
          %s948 = sand.u32 %s946, 7
          %s949 = smul.u32 %s947, 16
          %s950 = smul.addr %s949, 8
          %s951 = scalar_lea.vmem %s897, %s950 [#allocation3]
          %v952 = vld [vmem:[%s951] sm:$0xff]
          %v953 = vld [vmem:[%s951 + $0x8] sm:$0xff]
          %v954 = vld [vmem:[%s951 + $0x10] sm:$0xff]
          %v955 = vld [vmem:[%s951 + $0x18] sm:$0xff]
          %v956 = vld [vmem:[%s951 + $0x20] sm:$0xff]
          %v957 = vld [vmem:[%s951 + $0x28] sm:$0xff]
          %v958 = vld [vmem:[%s951 + $0x30] sm:$0xff]
          %v959 = vld [vmem:[%s951 + $0x38] sm:$0xff]
          %v960 = vld [vmem:[%s951 + $0x40] sm:$0xff]
          %v961 = vld [vmem:[%s951 + $0x48] sm:$0xff]
          %v962 = vld [vmem:[%s951 + $0x50] sm:$0xff]
          %v963 = vld [vmem:[%s951 + $0x58] sm:$0xff]
          %v964 = vld [vmem:[%s951 + $0x60] sm:$0xff]
          %v965 = vld [vmem:[%s951 + $0x68] sm:$0xff]
          %v966 = vld [vmem:[%s951 + $0x70] sm:$0xff]
          %v967 = vld [vmem:[%s951 + $0x78] sm:$0xff]
          %s968 = sadd.s32 %s949, 128
          %s969 = smul.addr %s968, 8
          %s970 = scalar_lea.vmem %s897, %s969 [#allocation3]
          %v971 = vld [vmem:[%s970] sm:$0xff]
          %v972 = vld [vmem:[%s970 + $0x8] sm:$0xff]
          %v973 = vld [vmem:[%s970 + $0x10] sm:$0xff]
          %v974 = vld [vmem:[%s970 + $0x18] sm:$0xff]
          %v975 = vld [vmem:[%s970 + $0x20] sm:$0xff]
          %v976 = vld [vmem:[%s970 + $0x28] sm:$0xff]
          %v977 = vld [vmem:[%s970 + $0x30] sm:$0xff]
          %v978 = vld [vmem:[%s970 + $0x38] sm:$0xff]
          %v979 = vld [vmem:[%s970 + $0x40] sm:$0xff]
          %v980 = vld [vmem:[%s970 + $0x48] sm:$0xff]
          %v981 = vld [vmem:[%s970 + $0x50] sm:$0xff]
          %v982 = vld [vmem:[%s970 + $0x58] sm:$0xff]
          %v983 = vld [vmem:[%s970 + $0x60] sm:$0xff]
          %v984 = vld [vmem:[%s970 + $0x68] sm:$0xff]
          %v985 = vld [vmem:[%s970 + $0x70] sm:$0xff]
          %v986 = vld [vmem:[%s970 + $0x78] sm:$0xff]
          %s987 = sadd.s32 %s949, 256
          %s988 = smul.addr %s987, 8
          %s989 = scalar_lea.vmem %s897, %s988 [#allocation3]
          %v990 = vld [vmem:[%s989] sm:$0xff]
          %v991 = vld [vmem:[%s989 + $0x8] sm:$0xff]
          %v992 = vld [vmem:[%s989 + $0x10] sm:$0xff]
          %v993 = vld [vmem:[%s989 + $0x18] sm:$0xff]
          %v994 = vld [vmem:[%s989 + $0x20] sm:$0xff]
          %v995 = vld [vmem:[%s989 + $0x28] sm:$0xff]
          %v996 = vld [vmem:[%s989 + $0x30] sm:$0xff]
          %v997 = vld [vmem:[%s989 + $0x38] sm:$0xff]
          %v998 = vld [vmem:[%s989 + $0x40] sm:$0xff]
          %v999 = vld [vmem:[%s989 + $0x48] sm:$0xff]
          %v1000 = vld [vmem:[%s989 + $0x50] sm:$0xff]
          %v1001 = vld [vmem:[%s989 + $0x58] sm:$0xff]
          %v1002 = vld [vmem:[%s989 + $0x60] sm:$0xff]
          %v1003 = vld [vmem:[%s989 + $0x68] sm:$0xff]
          %v1004 = vld [vmem:[%s989 + $0x70] sm:$0xff]
          %v1005 = vld [vmem:[%s989 + $0x78] sm:$0xff]
          %v1006 = vmul.f32 %v952, 1.442695
          %v1007 = vpow.pop %v1006
          %v1008 = vmul.f32 %v953, 1.442695
          %v1009 = vpow.pop %v1008
          %v1010 = vmul.f32 %v954, 1.442695
          %v1011 = vpow.pop %v1010
          %v1012 = vmul.f32 %v955, 1.442695
          %v1013 = vpow.pop %v1012
          %v1014 = vmul.f32 %v956, 1.442695
          %v1015 = vpow.pop %v1014
          %v1016 = vmul.f32 %v957, 1.442695
          %v1017 = vpow.pop %v1016
          %v1018 = vmul.f32 %v958, 1.442695
          %v1019 = vpow.pop %v1018
          %v1020 = vmul.f32 %v959, 1.442695
          %v1021 = vpow.pop %v1020
          %v1022 = vmul.f32 %v960, 1.442695
          %v1023 = vpow.pop %v1022
          %v1024 = vmul.f32 %v961, 1.442695
          %v1025 = vpow.pop %v1024
          %v1026 = vmul.f32 %v962, 1.442695
          %v1027 = vpow.pop %v1026
          %v1028 = vmul.f32 %v963, 1.442695
          %v1029 = vpow.pop %v1028
          %v1030 = vmul.f32 %v964, 1.442695
          %v1031 = vpow.pop %v1030
          %v1032 = vmul.f32 %v965, 1.442695
          %v1033 = vpow.pop %v1032
          %v1034 = vmul.f32 %v966, 1.442695
          %v1035 = vpow.pop %v1034
          %v1036 = vmul.f32 %v967, 1.442695
          %v1037 = vpow.pop %v1036
          %v1038 = vadd.f32 %v1007, 1.0
          %v1039 = vadd.f32 %v1009, 1.0
          %v1040 = vadd.f32 %v1011, 1.0
          %v1041 = vadd.f32 %v1013, 1.0
          %v1042 = vadd.f32 %v1015, 1.0
          %v1043 = vadd.f32 %v1017, 1.0
          %v1044 = vadd.f32 %v1019, 1.0
          %v1045 = vadd.f32 %v1021, 1.0
          %v1046 = vadd.f32 %v1023, 1.0
          %v1047 = vadd.f32 %v1025, 1.0
          %v1048 = vadd.f32 %v1027, 1.0
          %v1049 = vadd.f32 %v1029, 1.0
          %v1050 = vadd.f32 %v1031, 1.0
          %v1051 = vadd.f32 %v1033, 1.0
          %v1052 = vadd.f32 %v1035, 1.0
          %v1053 = vadd.f32 %v1037, 1.0
          %v1054 = vmin.f32 %v1038, 1e+18
          %v1055 = vmin.f32 %v1039, 1e+18
          %v1056 = vmin.f32 %v1040, 1e+18
          %v1057 = vmin.f32 %v1041, 1e+18
          %v1058 = vmin.f32 %v1042, 1e+18
          %v1059 = vmin.f32 %v1043, 1e+18
          %v1060 = vmin.f32 %v1044, 1e+18
          %v1061 = vmin.f32 %v1045, 1e+18
          %v1062 = vmin.f32 %v1046, 1e+18
          %v1063 = vmin.f32 %v1047, 1e+18
          %v1064 = vmin.f32 %v1048, 1e+18
          %v1065 = vmin.f32 %v1049, 1e+18
          %v1066 = vmin.f32 %v1050, 1e+18
          %v1067 = vmin.f32 %v1051, 1e+18
          %v1068 = vmin.f32 %v1052, 1e+18
          %v1069 = vmin.f32 %v1053, 1e+18
          %v1070 = vsub.f32 0.0, %v952
          %v1071 = vsub.f32 0.0, %v953
          %v1072 = vsub.f32 0.0, %v954
          %v1073 = vsub.f32 0.0, %v955
          %v1074 = vsub.f32 0.0, %v956
          %v1075 = vsub.f32 0.0, %v957
          %v1076 = vsub.f32 0.0, %v958
          %v1077 = vsub.f32 0.0, %v959
          %v1078 = vsub.f32 0.0, %v960
          %v1079 = vsub.f32 0.0, %v961
          %v1080 = vsub.f32 0.0, %v962
          %v1081 = vsub.f32 0.0, %v963
          %v1082 = vsub.f32 0.0, %v964
          %v1083 = vsub.f32 0.0, %v965
          %v1084 = vsub.f32 0.0, %v966
          %v1085 = vsub.f32 0.0, %v967
          %v1086 = vmul.f32 %v1070, 1.442695
          %v1087 = vpow.pop %v1086
          %v1088 = vmul.f32 %v1071, 1.442695
          %v1089 = vpow.pop %v1088
          %v1090 = vmul.f32 %v1072, 1.442695
          %v1091 = vpow.pop %v1090
          %v1092 = vmul.f32 %v1073, 1.442695
          %v1093 = vpow.pop %v1092
          %v1094 = vmul.f32 %v1074, 1.442695
          %v1095 = vpow.pop %v1094
          %v1096 = vmul.f32 %v1075, 1.442695
          %v1097 = vpow.pop %v1096
          %v1098 = vmul.f32 %v1076, 1.442695
          %v1099 = vpow.pop %v1098
          %v1100 = vmul.f32 %v1077, 1.442695
          %v1101 = vpow.pop %v1100
          %v1102 = vmul.f32 %v1078, 1.442695
          %v1103 = vpow.pop %v1102
          %v1104 = vmul.f32 %v1079, 1.442695
          %v1105 = vpow.pop %v1104
          %v1106 = vmul.f32 %v1080, 1.442695
          %v1107 = vpow.pop %v1106
          %v1108 = vmul.f32 %v1081, 1.442695
          %v1109 = vpow.pop %v1108
          %v1110 = vmul.f32 %v1082, 1.442695
          %v1111 = vpow.pop %v1110
          %v1112 = vmul.f32 %v1083, 1.442695
          %v1113 = vpow.pop %v1112
          %v1114 = vmul.f32 %v1084, 1.442695
          %v1115 = vpow.pop %v1114
          %v1116 = vmul.f32 %v1085, 1.442695
          %v1117 = vpow.pop %v1116
          %v1118 = vadd.f32 %v1087, 1.0
          %v1119 = vadd.f32 %v1089, 1.0
          %v1120 = vadd.f32 %v1091, 1.0
          %v1121 = vadd.f32 %v1093, 1.0
          %v1122 = vadd.f32 %v1095, 1.0
          %v1123 = vadd.f32 %v1097, 1.0
          %v1124 = vadd.f32 %v1099, 1.0
          %v1125 = vadd.f32 %v1101, 1.0
          %v1126 = vadd.f32 %v1103, 1.0
          %v1127 = vadd.f32 %v1105, 1.0
          %v1128 = vadd.f32 %v1107, 1.0
          %v1129 = vadd.f32 %v1109, 1.0
          %v1130 = vadd.f32 %v1111, 1.0
          %v1131 = vadd.f32 %v1113, 1.0
          %v1132 = vadd.f32 %v1115, 1.0
          %v1133 = vadd.f32 %v1117, 1.0
          %v1134 = vmin.f32 %v1118, 1e+18
          %v1135 = vmin.f32 %v1119, 1e+18
          %v1136 = vmin.f32 %v1120, 1e+18
          %v1137 = vmin.f32 %v1121, 1e+18
          %v1138 = vmin.f32 %v1122, 1e+18
          %v1139 = vmin.f32 %v1123, 1e+18
          %v1140 = vmin.f32 %v1124, 1e+18
          %v1141 = vmin.f32 %v1125, 1e+18
          %v1142 = vmin.f32 %v1126, 1e+18
          %v1143 = vmin.f32 %v1127, 1e+18
          %v1144 = vmin.f32 %v1128, 1e+18
          %v1145 = vmin.f32 %v1129, 1e+18
          %v1146 = vmin.f32 %v1130, 1e+18
          %v1147 = vmin.f32 %v1131, 1e+18
          %v1148 = vmin.f32 %v1132, 1e+18
          %v1149 = vmin.f32 %v1133, 1e+18
          %v1150 = vadd.f32 %v1134, %v1054
          %v1151 = vadd.f32 %v1135, %v1055
          %v1152 = vadd.f32 %v1136, %v1056
          %v1153 = vadd.f32 %v1137, %v1057
          %v1154 = vadd.f32 %v1138, %v1058
          %v1155 = vadd.f32 %v1139, %v1059
          %v1156 = vadd.f32 %v1140, %v1060
          %v1157 = vadd.f32 %v1141, %v1061
          %v1158 = vadd.f32 %v1142, %v1062
          %v1159 = vadd.f32 %v1143, %v1063
          %v1160 = vadd.f32 %v1144, %v1064
          %v1161 = vadd.f32 %v1145, %v1065
          %v1162 = vadd.f32 %v1146, %v1066
          %v1163 = vadd.f32 %v1147, %v1067
          %v1164 = vadd.f32 %v1148, %v1068
          %v1165 = vadd.f32 %v1149, %v1069
          %v1166 = vadd.f32 %v1134, 1.1920929e-07
          %v1167 = vadd.f32 %v1135, 1.1920929e-07
          %v1168 = vadd.f32 %v1136, 1.1920929e-07
          %v1169 = vadd.f32 %v1137, 1.1920929e-07
          %v1170 = vadd.f32 %v1138, 1.1920929e-07
          %v1171 = vadd.f32 %v1139, 1.1920929e-07
          %v1172 = vadd.f32 %v1140, 1.1920929e-07
          %v1173 = vadd.f32 %v1141, 1.1920929e-07
          %v1174 = vadd.f32 %v1142, 1.1920929e-07
          %v1175 = vadd.f32 %v1143, 1.1920929e-07
          %v1176 = vadd.f32 %v1144, 1.1920929e-07
          %v1177 = vadd.f32 %v1145, 1.1920929e-07
          %v1178 = vadd.f32 %v1146, 1.1920929e-07
          %v1179 = vadd.f32 %v1147, 1.1920929e-07
          %v1180 = vadd.f32 %v1148, 1.1920929e-07
          %v1181 = vadd.f32 %v1149, 1.1920929e-07
          %v1182 = vadd.f32 %v1166, 1.0
          %v1183 = vadd.f32 %v1167, 1.0
          %v1184 = vadd.f32 %v1168, 1.0
          %v1185 = vadd.f32 %v1169, 1.0
          %v1186 = vadd.f32 %v1170, 1.0
          %v1187 = vadd.f32 %v1171, 1.0
          %v1188 = vadd.f32 %v1172, 1.0
          %v1189 = vadd.f32 %v1173, 1.0
          %v1190 = vadd.f32 %v1174, 1.0
          %v1191 = vadd.f32 %v1175, 1.0
          %v1192 = vadd.f32 %v1176, 1.0
          %v1193 = vadd.f32 %v1177, 1.0
          %v1194 = vadd.f32 %v1178, 1.0
          %v1195 = vadd.f32 %v1179, 1.0
          %v1196 = vadd.f32 %v1180, 1.0
          %v1197 = vadd.f32 %v1181, 1.0
          %v1198 = vmul.f32 %v1166, %v1182
          %v1199 = vmul.f32 %v1167, %v1183
          %v1200 = vmul.f32 %v1168, %v1184
          %v1201 = vmul.f32 %v1169, %v1185
          %v1202 = vmul.f32 %v1170, %v1186
          %v1203 = vmul.f32 %v1171, %v1187
          %v1204 = vmul.f32 %v1172, %v1188
          %v1205 = vmul.f32 %v1173, %v1189
          %v1206 = vmul.f32 %v1174, %v1190
          %v1207 = vmul.f32 %v1175, %v1191
          %v1208 = vmul.f32 %v1176, %v1192
          %v1209 = vmul.f32 %v1177, %v1193
          %v1210 = vmul.f32 %v1178, %v1194
          %v1211 = vmul.f32 %v1179, %v1195
          %v1212 = vmul.f32 %v1180, %v1196
          %v1213 = vmul.f32 %v1181, %v1197
          %v1214 = vadd.f32 %v1166, %v1182
          %v1215 = vadd.f32 %v1167, %v1183
          %v1216 = vadd.f32 %v1168, %v1184
          %v1217 = vadd.f32 %v1169, %v1185
          %v1218 = vadd.f32 %v1170, %v1186
          %v1219 = vadd.f32 %v1171, %v1187
          %v1220 = vadd.f32 %v1172, %v1188
          %v1221 = vadd.f32 %v1173, %v1189
          %v1222 = vadd.f32 %v1174, %v1190
          %v1223 = vadd.f32 %v1175, %v1191
          %v1224 = vadd.f32 %v1176, %v1192
          %v1225 = vadd.f32 %v1177, %v1193
          %v1226 = vadd.f32 %v1178, %v1194
          %v1227 = vadd.f32 %v1179, %v1195
          %v1228 = vadd.f32 %v1180, %v1196
          %v1229 = vadd.f32 %v1181, %v1197
          %v1230 = vrcp.pop %v1198
          %v1231 = vmul.f32 %v1214, %v1230
          %v1232 = vrcp.pop %v1199
          %v1233 = vmul.f32 %v1215, %v1232
          %v1234 = vrcp.pop %v1200
          %v1235 = vmul.f32 %v1216, %v1234
          %v1236 = vrcp.pop %v1201
          %v1237 = vmul.f32 %v1217, %v1236
          %v1238 = vrcp.pop %v1202
          %v1239 = vmul.f32 %v1218, %v1238
          %v1240 = vrcp.pop %v1203
          %v1241 = vmul.f32 %v1219, %v1240
          %v1242 = vrcp.pop %v1204
          %v1243 = vmul.f32 %v1220, %v1242
          %v1244 = vrcp.pop %v1205
          %v1245 = vmul.f32 %v1221, %v1244
          %v1246 = vrcp.pop %v1206
          %v1247 = vmul.f32 %v1222, %v1246
          %v1248 = vrcp.pop %v1207
          %v1249 = vmul.f32 %v1223, %v1248
          %v1250 = vrcp.pop %v1208
          %v1251 = vmul.f32 %v1224, %v1250
          %v1252 = vrcp.pop %v1209
          %v1253 = vmul.f32 %v1225, %v1252
          %v1254 = vrcp.pop %v1210
          %v1255 = vmul.f32 %v1226, %v1254
          %v1256 = vrcp.pop %v1211
          %v1257 = vmul.f32 %v1227, %v1256
          %v1258 = vrcp.pop %v1212
          %v1259 = vmul.f32 %v1228, %v1258
          %v1260 = vrcp.pop %v1213
          %v1261 = vmul.f32 %v1229, %v1260
          %v1262 = vlog2.pop %v1198
          %v1263 = vmul.f32 %v1262, 0.6931472
          %v1264 = vlog2.pop %v1199
          %v1265 = vmul.f32 %v1264, 0.6931472
          %v1266 = vlog2.pop %v1200
          %v1267 = vmul.f32 %v1266, 0.6931472
          %v1268 = vlog2.pop %v1201
          %v1269 = vmul.f32 %v1268, 0.6931472
          %v1270 = vlog2.pop %v1202
          %v1271 = vmul.f32 %v1270, 0.6931472
          %v1272 = vlog2.pop %v1203
          %v1273 = vmul.f32 %v1272, 0.6931472
          %v1274 = vlog2.pop %v1204
          %v1275 = vmul.f32 %v1274, 0.6931472
          %v1276 = vlog2.pop %v1205
          %v1277 = vmul.f32 %v1276, 0.6931472
          %v1278 = vlog2.pop %v1206
          %v1279 = vmul.f32 %v1278, 0.6931472
          %v1280 = vlog2.pop %v1207
          %v1281 = vmul.f32 %v1280, 0.6931472
          %v1282 = vlog2.pop %v1208
          %v1283 = vmul.f32 %v1282, 0.6931472
          %v1284 = vlog2.pop %v1209
          %v1285 = vmul.f32 %v1284, 0.6931472
          %v1286 = vlog2.pop %v1210
          %v1287 = vmul.f32 %v1286, 0.6931472
          %v1288 = vlog2.pop %v1211
          %v1289 = vmul.f32 %v1288, 0.6931472
          %v1290 = vlog2.pop %v1212
          %v1291 = vmul.f32 %v1290, 0.6931472
          %v1292 = vlog2.pop %v1213
          %v1293 = vmul.f32 %v1292, 0.6931472
          %v1294 = vadd.f32 %v1166, 2.0
          %v1295 = vadd.f32 %v1167, 2.0
          %v1296 = vadd.f32 %v1168, 2.0
          %v1297 = vadd.f32 %v1169, 2.0
          %v1298 = vadd.f32 %v1170, 2.0
          %v1299 = vadd.f32 %v1171, 2.0
          %v1300 = vadd.f32 %v1172, 2.0
          %v1301 = vadd.f32 %v1173, 2.0
          %v1302 = vadd.f32 %v1174, 2.0
          %v1303 = vadd.f32 %v1175, 2.0
          %v1304 = vadd.f32 %v1176, 2.0
          %v1305 = vadd.f32 %v1177, 2.0
          %v1306 = vadd.f32 %v1178, 2.0
          %v1307 = vadd.f32 %v1179, 2.0
          %v1308 = vadd.f32 %v1180, 2.0
          %v1309 = vadd.f32 %v1181, 2.0
          %v1310 = vrcp.pop %v1294
          %v1311 = vmul.f32 1.0, %v1310
          %v1312 = vrcp.pop %v1295
          %v1313 = vmul.f32 1.0, %v1312
          %v1314 = vrcp.pop %v1296
          %v1315 = vmul.f32 1.0, %v1314
          %v1316 = vrcp.pop %v1297
          %v1317 = vmul.f32 1.0, %v1316
          %v1318 = vrcp.pop %v1298
          %v1319 = vmul.f32 1.0, %v1318
          %v1320 = vrcp.pop %v1299
          %v1321 = vmul.f32 1.0, %v1320
          %v1322 = vrcp.pop %v1300
          %v1323 = vmul.f32 1.0, %v1322
          %v1324 = vrcp.pop %v1301
          %v1325 = vmul.f32 1.0, %v1324
          %v1326 = vrcp.pop %v1302
          %v1327 = vmul.f32 1.0, %v1326
          %v1328 = vrcp.pop %v1303
          %v1329 = vmul.f32 1.0, %v1328
          %v1330 = vrcp.pop %v1304
          %v1331 = vmul.f32 1.0, %v1330
          %v1332 = vrcp.pop %v1305
          %v1333 = vmul.f32 1.0, %v1332
          %v1334 = vrcp.pop %v1306
          %v1335 = vmul.f32 1.0, %v1334
          %v1336 = vrcp.pop %v1307
          %v1337 = vmul.f32 1.0, %v1336
          %v1338 = vrcp.pop %v1308
          %v1339 = vmul.f32 1.0, %v1338
          %v1340 = vrcp.pop %v1309
          %v1341 = vmul.f32 1.0, %v1340
          %v1342 = vmul.f32 %v1311, %v1311
          %v1343 = vmul.f32 %v1313, %v1313
          %v1344 = vmul.f32 %v1315, %v1315
          %v1345 = vmul.f32 %v1317, %v1317
          %v1346 = vmul.f32 %v1319, %v1319
          %v1347 = vmul.f32 %v1321, %v1321
          %v1348 = vmul.f32 %v1323, %v1323
          %v1349 = vmul.f32 %v1325, %v1325
          %v1350 = vmul.f32 %v1327, %v1327
          %v1351 = vmul.f32 %v1329, %v1329
          %v1352 = vmul.f32 %v1331, %v1331
          %v1353 = vmul.f32 %v1333, %v1333
          %v1354 = vmul.f32 %v1335, %v1335
          %v1355 = vmul.f32 %v1337, %v1337
          %v1356 = vmul.f32 %v1339, %v1339
          %v1357 = vmul.f32 %v1341, %v1341
          %v1358 = vlog2.pop %v1294
          %v1359 = vmul.f32 %v1358, 0.6931472
          %v1360 = vlog2.pop %v1295
          %v1361 = vmul.f32 %v1360, 0.6931472
          %v1362 = vlog2.pop %v1296
          %v1363 = vmul.f32 %v1362, 0.6931472
          %v1364 = vlog2.pop %v1297
          %v1365 = vmul.f32 %v1364, 0.6931472
          %v1366 = vlog2.pop %v1298
          %v1367 = vmul.f32 %v1366, 0.6931472
          %v1368 = vlog2.pop %v1299
          %v1369 = vmul.f32 %v1368, 0.6931472
          %v1370 = vlog2.pop %v1300
          %v1371 = vmul.f32 %v1370, 0.6931472
          %v1372 = vlog2.pop %v1301
          %v1373 = vmul.f32 %v1372, 0.6931472
          %v1374 = vlog2.pop %v1302
          %v1375 = vmul.f32 %v1374, 0.6931472
          %v1376 = vlog2.pop %v1303
          %v1377 = vmul.f32 %v1376, 0.6931472
          %v1378 = vlog2.pop %v1304
          %v1379 = vmul.f32 %v1378, 0.6931472
          %v1380 = vlog2.pop %v1305
          %v1381 = vmul.f32 %v1380, 0.6931472
          %v1382 = vlog2.pop %v1306
          %v1383 = vmul.f32 %v1382, 0.6931472
          %v1384 = vlog2.pop %v1307
          %v1385 = vmul.f32 %v1384, 0.6931472
          %v1386 = vlog2.pop %v1308
          %v1387 = vmul.f32 %v1386, 0.6931472
          %v1388 = vlog2.pop %v1309
          %v1389 = vmul.f32 %v1388, 0.6931472
          %v1390 = vmul.f32 %v1311, 0.5
          %v1391 = vmul.f32 %v1313, 0.5
          %v1392 = vmul.f32 %v1315, 0.5
          %v1393 = vmul.f32 %v1317, 0.5
          %v1394 = vmul.f32 %v1319, 0.5
          %v1395 = vmul.f32 %v1321, 0.5
          %v1396 = vmul.f32 %v1323, 0.5
          %v1397 = vmul.f32 %v1325, 0.5
          %v1398 = vmul.f32 %v1327, 0.5
          %v1399 = vmul.f32 %v1329, 0.5
          %v1400 = vmul.f32 %v1331, 0.5
          %v1401 = vmul.f32 %v1333, 0.5
          %v1402 = vmul.f32 %v1335, 0.5
          %v1403 = vmul.f32 %v1337, 0.5
          %v1404 = vmul.f32 %v1339, 0.5
          %v1405 = vmul.f32 %v1341, 0.5
          %v1406 = vsub.f32 %v1359, %v1390
          %v1407 = vsub.f32 %v1361, %v1391
          %v1408 = vsub.f32 %v1363, %v1392
          %v1409 = vsub.f32 %v1365, %v1393
          %v1410 = vsub.f32 %v1367, %v1394
          %v1411 = vsub.f32 %v1369, %v1395
          %v1412 = vsub.f32 %v1371, %v1396
          %v1413 = vsub.f32 %v1373, %v1397
          %v1414 = vsub.f32 %v1375, %v1398
          %v1415 = vsub.f32 %v1377, %v1399
          %v1416 = vsub.f32 %v1379, %v1400
          %v1417 = vsub.f32 %v1381, %v1401
          %v1418 = vsub.f32 %v1383, %v1402
          %v1419 = vsub.f32 %v1385, %v1403
          %v1420 = vsub.f32 %v1387, %v1404
          %v1421 = vsub.f32 %v1389, %v1405
          %v1422 = vmul.f32 %v1342, 0.003968254
          %v1423 = vmul.f32 %v1343, 0.003968254
          %v1424 = vmul.f32 %v1344, 0.003968254
          %v1425 = vmul.f32 %v1345, 0.003968254
          %v1426 = vmul.f32 %v1346, 0.003968254
          %v1427 = vmul.f32 %v1347, 0.003968254
          %v1428 = vmul.f32 %v1348, 0.003968254
          %v1429 = vmul.f32 %v1349, 0.003968254
          %v1430 = vmul.f32 %v1350, 0.003968254
          %v1431 = vmul.f32 %v1351, 0.003968254
          %v1432 = vmul.f32 %v1352, 0.003968254
          %v1433 = vmul.f32 %v1353, 0.003968254
          %v1434 = vmul.f32 %v1354, 0.003968254
          %v1435 = vmul.f32 %v1355, 0.003968254
          %v1436 = vmul.f32 %v1356, 0.003968254
          %v1437 = vmul.f32 %v1357, 0.003968254
          %v1438 = vsub.f32 0.008333334, %v1422
          %v1439 = vsub.f32 0.008333334, %v1423
          %v1440 = vsub.f32 0.008333334, %v1424
          %v1441 = vsub.f32 0.008333334, %v1425
          %v1442 = vsub.f32 0.008333334, %v1426
          %v1443 = vsub.f32 0.008333334, %v1427
          %v1444 = vsub.f32 0.008333334, %v1428
          %v1445 = vsub.f32 0.008333334, %v1429
          %v1446 = vsub.f32 0.008333334, %v1430
          %v1447 = vsub.f32 0.008333334, %v1431
          %v1448 = vsub.f32 0.008333334, %v1432
          %v1449 = vsub.f32 0.008333334, %v1433
          %v1450 = vsub.f32 0.008333334, %v1434
          %v1451 = vsub.f32 0.008333334, %v1435
          %v1452 = vsub.f32 0.008333334, %v1436
          %v1453 = vsub.f32 0.008333334, %v1437
          %v1454 = vmul.f32 %v1342, %v1438
          %v1455 = vmul.f32 %v1343, %v1439
          %v1456 = vmul.f32 %v1344, %v1440
          %v1457 = vmul.f32 %v1345, %v1441
          %v1458 = vmul.f32 %v1346, %v1442
          %v1459 = vmul.f32 %v1347, %v1443
          %v1460 = vmul.f32 %v1348, %v1444
          %v1461 = vmul.f32 %v1349, %v1445
          %v1462 = vmul.f32 %v1350, %v1446
          %v1463 = vmul.f32 %v1351, %v1447
          %v1464 = vmul.f32 %v1352, %v1448
          %v1465 = vmul.f32 %v1353, %v1449
          %v1466 = vmul.f32 %v1354, %v1450
          %v1467 = vmul.f32 %v1355, %v1451
          %v1468 = vmul.f32 %v1356, %v1452
          %v1469 = vmul.f32 %v1357, %v1453
          %v1470 = vsub.f32 0.083333336, %v1454
          %v1471 = vsub.f32 0.083333336, %v1455
          %v1472 = vsub.f32 0.083333336, %v1456
          %v1473 = vsub.f32 0.083333336, %v1457
          %v1474 = vsub.f32 0.083333336, %v1458
          %v1475 = vsub.f32 0.083333336, %v1459
          %v1476 = vsub.f32 0.083333336, %v1460
          %v1477 = vsub.f32 0.083333336, %v1461
          %v1478 = vsub.f32 0.083333336, %v1462
          %v1479 = vsub.f32 0.083333336, %v1463
          %v1480 = vsub.f32 0.083333336, %v1464
          %v1481 = vsub.f32 0.083333336, %v1465
          %v1482 = vsub.f32 0.083333336, %v1466
          %v1483 = vsub.f32 0.083333336, %v1467
          %v1484 = vsub.f32 0.083333336, %v1468
          %v1485 = vsub.f32 0.083333336, %v1469
          %v1486 = vmul.f32 %v1342, %v1470
          %v1487 = vmul.f32 %v1343, %v1471
          %v1488 = vmul.f32 %v1344, %v1472
          %v1489 = vmul.f32 %v1345, %v1473
          %v1490 = vmul.f32 %v1346, %v1474
          %v1491 = vmul.f32 %v1347, %v1475
          %v1492 = vmul.f32 %v1348, %v1476
          %v1493 = vmul.f32 %v1349, %v1477
          %v1494 = vmul.f32 %v1350, %v1478
          %v1495 = vmul.f32 %v1351, %v1479
          %v1496 = vmul.f32 %v1352, %v1480
          %v1497 = vmul.f32 %v1353, %v1481
          %v1498 = vmul.f32 %v1354, %v1482
          %v1499 = vmul.f32 %v1355, %v1483
          %v1500 = vmul.f32 %v1356, %v1484
          %v1501 = vmul.f32 %v1357, %v1485
          %v1502 = vsub.f32 %v1406, %v1486
          %v1503 = vsub.f32 %v1407, %v1487
          %v1504 = vsub.f32 %v1408, %v1488
          %v1505 = vsub.f32 %v1409, %v1489
          %v1506 = vsub.f32 %v1410, %v1490
          %v1507 = vsub.f32 %v1411, %v1491
          %v1508 = vsub.f32 %v1412, %v1492
          %v1509 = vsub.f32 %v1413, %v1493
          %v1510 = vsub.f32 %v1414, %v1494
          %v1511 = vsub.f32 %v1415, %v1495
          %v1512 = vsub.f32 %v1416, %v1496
          %v1513 = vsub.f32 %v1417, %v1497
          %v1514 = vsub.f32 %v1418, %v1498
          %v1515 = vsub.f32 %v1419, %v1499
          %v1516 = vsub.f32 %v1420, %v1500
          %v1517 = vsub.f32 %v1421, %v1501
          %v1518 = vsub.f32 %v1502, %v1231
          %v1519 = vsub.f32 %v1503, %v1233
          %v1520 = vsub.f32 %v1504, %v1235
          %v1521 = vsub.f32 %v1505, %v1237
          %v1522 = vsub.f32 %v1506, %v1239
          %v1523 = vsub.f32 %v1507, %v1241
          %v1524 = vsub.f32 %v1508, %v1243
          %v1525 = vsub.f32 %v1509, %v1245
          %v1526 = vsub.f32 %v1510, %v1247
          %v1527 = vsub.f32 %v1511, %v1249
          %v1528 = vsub.f32 %v1512, %v1251
          %v1529 = vsub.f32 %v1513, %v1253
          %v1530 = vsub.f32 %v1514, %v1255
          %v1531 = vsub.f32 %v1515, %v1257
          %v1532 = vsub.f32 %v1516, %v1259
          %v1533 = vsub.f32 %v1517, %v1261
          %v1534 = vsub.f32 %v1294, 0.5
          %v1535 = vsub.f32 %v1295, 0.5
          %v1536 = vsub.f32 %v1296, 0.5
          %v1537 = vsub.f32 %v1297, 0.5
          %v1538 = vsub.f32 %v1298, 0.5
          %v1539 = vsub.f32 %v1299, 0.5
          %v1540 = vsub.f32 %v1300, 0.5
          %v1541 = vsub.f32 %v1301, 0.5
          %v1542 = vsub.f32 %v1302, 0.5
          %v1543 = vsub.f32 %v1303, 0.5
          %v1544 = vsub.f32 %v1304, 0.5
          %v1545 = vsub.f32 %v1305, 0.5
          %v1546 = vsub.f32 %v1306, 0.5
          %v1547 = vsub.f32 %v1307, 0.5
          %v1548 = vsub.f32 %v1308, 0.5
          %v1549 = vsub.f32 %v1309, 0.5
          %v1550 = vmul.f32 %v1534, %v1359
          %v1551 = vmul.f32 %v1535, %v1361
          %v1552 = vmul.f32 %v1536, %v1363
          %v1553 = vmul.f32 %v1537, %v1365
          %v1554 = vmul.f32 %v1538, %v1367
          %v1555 = vmul.f32 %v1539, %v1369
          %v1556 = vmul.f32 %v1540, %v1371
          %v1557 = vmul.f32 %v1541, %v1373
          %v1558 = vmul.f32 %v1542, %v1375
          %v1559 = vmul.f32 %v1543, %v1377
          %v1560 = vmul.f32 %v1544, %v1379
          %v1561 = vmul.f32 %v1545, %v1381
          %v1562 = vmul.f32 %v1546, %v1383
          %v1563 = vmul.f32 %v1547, %v1385
          %v1564 = vmul.f32 %v1548, %v1387
          %v1565 = vmul.f32 %v1549, %v1389
          %v1566 = vsub.f32 %v1550, %v1294
          %v1567 = vsub.f32 %v1551, %v1295
          %v1568 = vsub.f32 %v1552, %v1296
          %v1569 = vsub.f32 %v1553, %v1297
          %v1570 = vsub.f32 %v1554, %v1298
          %v1571 = vsub.f32 %v1555, %v1299
          %v1572 = vsub.f32 %v1556, %v1300
          %v1573 = vsub.f32 %v1557, %v1301
          %v1574 = vsub.f32 %v1558, %v1302
          %v1575 = vsub.f32 %v1559, %v1303
          %v1576 = vsub.f32 %v1560, %v1304
          %v1577 = vsub.f32 %v1561, %v1305
          %v1578 = vsub.f32 %v1562, %v1306
          %v1579 = vsub.f32 %v1563, %v1307
          %v1580 = vsub.f32 %v1564, %v1308
          %v1581 = vsub.f32 %v1565, %v1309
          %v1582 = vadd.f32 %v1566, 0.9189385
          %v1583 = vadd.f32 %v1567, 0.9189385
          %v1584 = vadd.f32 %v1568, 0.9189385
          %v1585 = vadd.f32 %v1569, 0.9189385
          %v1586 = vadd.f32 %v1570, 0.9189385
          %v1587 = vadd.f32 %v1571, 0.9189385
          %v1588 = vadd.f32 %v1572, 0.9189385
          %v1589 = vadd.f32 %v1573, 0.9189385
          %v1590 = vadd.f32 %v1574, 0.9189385
          %v1591 = vadd.f32 %v1575, 0.9189385
          %v1592 = vadd.f32 %v1576, 0.9189385
          %v1593 = vadd.f32 %v1577, 0.9189385
          %v1594 = vadd.f32 %v1578, 0.9189385
          %v1595 = vadd.f32 %v1579, 0.9189385
          %v1596 = vadd.f32 %v1580, 0.9189385
          %v1597 = vadd.f32 %v1581, 0.9189385
          %v1598 = vmul.f32 %v1342, 0.0007936508
          %v1599 = vmul.f32 %v1343, 0.0007936508
          %v1600 = vmul.f32 %v1344, 0.0007936508
          %v1601 = vmul.f32 %v1345, 0.0007936508
          %v1602 = vmul.f32 %v1346, 0.0007936508
          %v1603 = vmul.f32 %v1347, 0.0007936508
          %v1604 = vmul.f32 %v1348, 0.0007936508
          %v1605 = vmul.f32 %v1349, 0.0007936508
          %v1606 = vmul.f32 %v1350, 0.0007936508
          %v1607 = vmul.f32 %v1351, 0.0007936508
          %v1608 = vmul.f32 %v1352, 0.0007936508
          %v1609 = vmul.f32 %v1353, 0.0007936508
          %v1610 = vmul.f32 %v1354, 0.0007936508
          %v1611 = vmul.f32 %v1355, 0.0007936508
          %v1612 = vmul.f32 %v1356, 0.0007936508
          %v1613 = vmul.f32 %v1357, 0.0007936508
          %v1614 = vsub.f32 0.0027777778, %v1598
          %v1615 = vsub.f32 0.0027777778, %v1599
          %v1616 = vsub.f32 0.0027777778, %v1600
          %v1617 = vsub.f32 0.0027777778, %v1601
          %v1618 = vsub.f32 0.0027777778, %v1602
          %v1619 = vsub.f32 0.0027777778, %v1603
          %v1620 = vsub.f32 0.0027777778, %v1604
          %v1621 = vsub.f32 0.0027777778, %v1605
          %v1622 = vsub.f32 0.0027777778, %v1606
          %v1623 = vsub.f32 0.0027777778, %v1607
          %v1624 = vsub.f32 0.0027777778, %v1608
          %v1625 = vsub.f32 0.0027777778, %v1609
          %v1626 = vsub.f32 0.0027777778, %v1610
          %v1627 = vsub.f32 0.0027777778, %v1611
          %v1628 = vsub.f32 0.0027777778, %v1612
          %v1629 = vsub.f32 0.0027777778, %v1613
          %v1630 = vmul.f32 %v1342, %v1614
          %v1631 = vmul.f32 %v1343, %v1615
          %v1632 = vmul.f32 %v1344, %v1616
          %v1633 = vmul.f32 %v1345, %v1617
          %v1634 = vmul.f32 %v1346, %v1618
          %v1635 = vmul.f32 %v1347, %v1619
          %v1636 = vmul.f32 %v1348, %v1620
          %v1637 = vmul.f32 %v1349, %v1621
          %v1638 = vmul.f32 %v1350, %v1622
          %v1639 = vmul.f32 %v1351, %v1623
          %v1640 = vmul.f32 %v1352, %v1624
          %v1641 = vmul.f32 %v1353, %v1625
          %v1642 = vmul.f32 %v1354, %v1626
          %v1643 = vmul.f32 %v1355, %v1627
          %v1644 = vmul.f32 %v1356, %v1628
          %v1645 = vmul.f32 %v1357, %v1629
          %v1646 = vsub.f32 0.083333336, %v1630
          %v1647 = vsub.f32 0.083333336, %v1631
          %v1648 = vsub.f32 0.083333336, %v1632
          %v1649 = vsub.f32 0.083333336, %v1633
          %v1650 = vsub.f32 0.083333336, %v1634
          %v1651 = vsub.f32 0.083333336, %v1635
          %v1652 = vsub.f32 0.083333336, %v1636
          %v1653 = vsub.f32 0.083333336, %v1637
          %v1654 = vsub.f32 0.083333336, %v1638
          %v1655 = vsub.f32 0.083333336, %v1639
          %v1656 = vsub.f32 0.083333336, %v1640
          %v1657 = vsub.f32 0.083333336, %v1641
          %v1658 = vsub.f32 0.083333336, %v1642
          %v1659 = vsub.f32 0.083333336, %v1643
          %v1660 = vsub.f32 0.083333336, %v1644
          %v1661 = vsub.f32 0.083333336, %v1645
          %v1662 = vmul.f32 %v1311, %v1646
          %v1663 = vmul.f32 %v1313, %v1647
          %v1664 = vmul.f32 %v1315, %v1648
          %v1665 = vmul.f32 %v1317, %v1649
          %v1666 = vmul.f32 %v1319, %v1650
          %v1667 = vmul.f32 %v1321, %v1651
          %v1668 = vmul.f32 %v1323, %v1652
          %v1669 = vmul.f32 %v1325, %v1653
          %v1670 = vmul.f32 %v1327, %v1654
          %v1671 = vmul.f32 %v1329, %v1655
          %v1672 = vmul.f32 %v1331, %v1656
          %v1673 = vmul.f32 %v1333, %v1657
          %v1674 = vmul.f32 %v1335, %v1658
          %v1675 = vmul.f32 %v1337, %v1659
          %v1676 = vmul.f32 %v1339, %v1660
          %v1677 = vmul.f32 %v1341, %v1661
          %v1678 = vadd.f32 %v1582, %v1662
          %v1679 = vadd.f32 %v1583, %v1663
          %v1680 = vadd.f32 %v1584, %v1664
          %v1681 = vadd.f32 %v1585, %v1665
          %v1682 = vadd.f32 %v1586, %v1666
          %v1683 = vadd.f32 %v1587, %v1667
          %v1684 = vadd.f32 %v1588, %v1668
          %v1685 = vadd.f32 %v1589, %v1669
          %v1686 = vadd.f32 %v1590, %v1670
          %v1687 = vadd.f32 %v1591, %v1671
          %v1688 = vadd.f32 %v1592, %v1672
          %v1689 = vadd.f32 %v1593, %v1673
          %v1690 = vadd.f32 %v1594, %v1674
          %v1691 = vadd.f32 %v1595, %v1675
          %v1692 = vadd.f32 %v1596, %v1676
          %v1693 = vadd.f32 %v1597, %v1677
          %v1694 = vsub.f32 %v1678, %v1263
          %v1695 = vsub.f32 %v1679, %v1265
          %v1696 = vsub.f32 %v1680, %v1267
          %v1697 = vsub.f32 %v1681, %v1269
          %v1698 = vsub.f32 %v1682, %v1271
          %v1699 = vsub.f32 %v1683, %v1273
          %v1700 = vsub.f32 %v1684, %v1275
          %v1701 = vsub.f32 %v1685, %v1277
          %v1702 = vsub.f32 %v1686, %v1279
          %v1703 = vsub.f32 %v1687, %v1281
          %v1704 = vsub.f32 %v1688, %v1283
          %v1705 = vsub.f32 %v1689, %v1285
          %v1706 = vsub.f32 %v1690, %v1287
          %v1707 = vsub.f32 %v1691, %v1289
          %v1708 = vsub.f32 %v1692, %v1291
          %v1709 = vsub.f32 %v1693, %v1293
          %v1710 = vadd.f32 %v1054, 1.1920929e-07
          %v1711 = vadd.f32 %v1055, 1.1920929e-07
          %v1712 = vadd.f32 %v1056, 1.1920929e-07
          %v1713 = vadd.f32 %v1057, 1.1920929e-07
          %v1714 = vadd.f32 %v1058, 1.1920929e-07
          %v1715 = vadd.f32 %v1059, 1.1920929e-07
          %v1716 = vadd.f32 %v1060, 1.1920929e-07
          %v1717 = vadd.f32 %v1061, 1.1920929e-07
          %v1718 = vadd.f32 %v1062, 1.1920929e-07
          %v1719 = vadd.f32 %v1063, 1.1920929e-07
          %v1720 = vadd.f32 %v1064, 1.1920929e-07
          %v1721 = vadd.f32 %v1065, 1.1920929e-07
          %v1722 = vadd.f32 %v1066, 1.1920929e-07
          %v1723 = vadd.f32 %v1067, 1.1920929e-07
          %v1724 = vadd.f32 %v1068, 1.1920929e-07
          %v1725 = vadd.f32 %v1069, 1.1920929e-07
          %v1726 = vadd.f32 %v1710, 1.0
          %v1727 = vadd.f32 %v1711, 1.0
          %v1728 = vadd.f32 %v1712, 1.0
          %v1729 = vadd.f32 %v1713, 1.0
          %v1730 = vadd.f32 %v1714, 1.0
          %v1731 = vadd.f32 %v1715, 1.0
          %v1732 = vadd.f32 %v1716, 1.0
          %v1733 = vadd.f32 %v1717, 1.0
          %v1734 = vadd.f32 %v1718, 1.0
          %v1735 = vadd.f32 %v1719, 1.0
          %v1736 = vadd.f32 %v1720, 1.0
          %v1737 = vadd.f32 %v1721, 1.0
          %v1738 = vadd.f32 %v1722, 1.0
          %v1739 = vadd.f32 %v1723, 1.0
          %v1740 = vadd.f32 %v1724, 1.0
          %v1741 = vadd.f32 %v1725, 1.0
          %v1742 = vmul.f32 %v1710, %v1726
          %v1743 = vmul.f32 %v1711, %v1727
          %v1744 = vmul.f32 %v1712, %v1728
          %v1745 = vmul.f32 %v1713, %v1729
          %v1746 = vmul.f32 %v1714, %v1730
          %v1747 = vmul.f32 %v1715, %v1731
          %v1748 = vmul.f32 %v1716, %v1732
          %v1749 = vmul.f32 %v1717, %v1733
          %v1750 = vmul.f32 %v1718, %v1734
          %v1751 = vmul.f32 %v1719, %v1735
          %v1752 = vmul.f32 %v1720, %v1736
          %v1753 = vmul.f32 %v1721, %v1737
          %v1754 = vmul.f32 %v1722, %v1738
          %v1755 = vmul.f32 %v1723, %v1739
          %v1756 = vmul.f32 %v1724, %v1740
          %v1757 = vmul.f32 %v1725, %v1741
          %v1758 = vadd.f32 %v1710, %v1726
          %v1759 = vadd.f32 %v1711, %v1727
          %v1760 = vadd.f32 %v1712, %v1728
          %v1761 = vadd.f32 %v1713, %v1729
          %v1762 = vadd.f32 %v1714, %v1730
          %v1763 = vadd.f32 %v1715, %v1731
          %v1764 = vadd.f32 %v1716, %v1732
          %v1765 = vadd.f32 %v1717, %v1733
          %v1766 = vadd.f32 %v1718, %v1734
          %v1767 = vadd.f32 %v1719, %v1735
          %v1768 = vadd.f32 %v1720, %v1736
          %v1769 = vadd.f32 %v1721, %v1737
          %v1770 = vadd.f32 %v1722, %v1738
          %v1771 = vadd.f32 %v1723, %v1739
          %v1772 = vadd.f32 %v1724, %v1740
          %v1773 = vadd.f32 %v1725, %v1741
          %v1774 = vrcp.pop %v1742
          %v1775 = vmul.f32 %v1758, %v1774
          %v1776 = vrcp.pop %v1743
          %v1777 = vmul.f32 %v1759, %v1776
          %v1778 = vrcp.pop %v1744
          %v1779 = vmul.f32 %v1760, %v1778
          %v1780 = vrcp.pop %v1745
          %v1781 = vmul.f32 %v1761, %v1780
          %v1782 = vrcp.pop %v1746
          %v1783 = vmul.f32 %v1762, %v1782
          %v1784 = vrcp.pop %v1747
          %v1785 = vmul.f32 %v1763, %v1784
          %v1786 = vrcp.pop %v1748
          %v1787 = vmul.f32 %v1764, %v1786
          %v1788 = vrcp.pop %v1749
          %v1789 = vmul.f32 %v1765, %v1788
          %v1790 = vrcp.pop %v1750
          %v1791 = vmul.f32 %v1766, %v1790
          %v1792 = vrcp.pop %v1751
          %v1793 = vmul.f32 %v1767, %v1792
          %v1794 = vrcp.pop %v1752
          %v1795 = vmul.f32 %v1768, %v1794
          %v1796 = vrcp.pop %v1753
          %v1797 = vmul.f32 %v1769, %v1796
          %v1798 = vrcp.pop %v1754
          %v1799 = vmul.f32 %v1770, %v1798
          %v1800 = vrcp.pop %v1755
          %v1801 = vmul.f32 %v1771, %v1800
          %v1802 = vrcp.pop %v1756
          %v1803 = vmul.f32 %v1772, %v1802
          %v1804 = vrcp.pop %v1757
          %v1805 = vmul.f32 %v1773, %v1804
          %v1806 = vlog2.pop %v1742
          %v1807 = vmul.f32 %v1806, 0.6931472
          %v1808 = vlog2.pop %v1743
          %v1809 = vmul.f32 %v1808, 0.6931472
          %v1810 = vlog2.pop %v1744
          %v1811 = vmul.f32 %v1810, 0.6931472
          %v1812 = vlog2.pop %v1745
          %v1813 = vmul.f32 %v1812, 0.6931472
          %v1814 = vlog2.pop %v1746
          %v1815 = vmul.f32 %v1814, 0.6931472
          %v1816 = vlog2.pop %v1747
          %v1817 = vmul.f32 %v1816, 0.6931472
          %v1818 = vlog2.pop %v1748
          %v1819 = vmul.f32 %v1818, 0.6931472
          %v1820 = vlog2.pop %v1749
          %v1821 = vmul.f32 %v1820, 0.6931472
          %v1822 = vlog2.pop %v1750
          %v1823 = vmul.f32 %v1822, 0.6931472
          %v1824 = vlog2.pop %v1751
          %v1825 = vmul.f32 %v1824, 0.6931472
          %v1826 = vlog2.pop %v1752
          %v1827 = vmul.f32 %v1826, 0.6931472
          %v1828 = vlog2.pop %v1753
          %v1829 = vmul.f32 %v1828, 0.6931472
          %v1830 = vlog2.pop %v1754
          %v1831 = vmul.f32 %v1830, 0.6931472
          %v1832 = vlog2.pop %v1755
          %v1833 = vmul.f32 %v1832, 0.6931472
          %v1834 = vlog2.pop %v1756
          %v1835 = vmul.f32 %v1834, 0.6931472
          %v1836 = vlog2.pop %v1757
          %v1837 = vmul.f32 %v1836, 0.6931472
          %v1838 = vadd.f32 %v1710, 2.0
          %v1839 = vadd.f32 %v1711, 2.0
          %v1840 = vadd.f32 %v1712, 2.0
          %v1841 = vadd.f32 %v1713, 2.0
          %v1842 = vadd.f32 %v1714, 2.0
          %v1843 = vadd.f32 %v1715, 2.0
          %v1844 = vadd.f32 %v1716, 2.0
          %v1845 = vadd.f32 %v1717, 2.0
          %v1846 = vadd.f32 %v1718, 2.0
          %v1847 = vadd.f32 %v1719, 2.0
          %v1848 = vadd.f32 %v1720, 2.0
          %v1849 = vadd.f32 %v1721, 2.0
          %v1850 = vadd.f32 %v1722, 2.0
          %v1851 = vadd.f32 %v1723, 2.0
          %v1852 = vadd.f32 %v1724, 2.0
          %v1853 = vadd.f32 %v1725, 2.0
          %v1854 = vrcp.pop %v1838
          %v1855 = vmul.f32 1.0, %v1854
          %v1856 = vrcp.pop %v1839
          %v1857 = vmul.f32 1.0, %v1856
          %v1858 = vrcp.pop %v1840
          %v1859 = vmul.f32 1.0, %v1858
          %v1860 = vrcp.pop %v1841
          %v1861 = vmul.f32 1.0, %v1860
          %v1862 = vrcp.pop %v1842
          %v1863 = vmul.f32 1.0, %v1862
          %v1864 = vrcp.pop %v1843
          %v1865 = vmul.f32 1.0, %v1864
          %v1866 = vrcp.pop %v1844
          %v1867 = vmul.f32 1.0, %v1866
          %v1868 = vrcp.pop %v1845
          %v1869 = vmul.f32 1.0, %v1868
          %v1870 = vrcp.pop %v1846
          %v1871 = vmul.f32 1.0, %v1870
          %v1872 = vrcp.pop %v1847
          %v1873 = vmul.f32 1.0, %v1872
          %v1874 = vrcp.pop %v1848
          %v1875 = vmul.f32 1.0, %v1874
          %v1876 = vrcp.pop %v1849
          %v1877 = vmul.f32 1.0, %v1876
          %v1878 = vrcp.pop %v1850
          %v1879 = vmul.f32 1.0, %v1878
          %v1880 = vrcp.pop %v1851
          %v1881 = vmul.f32 1.0, %v1880
          %v1882 = vrcp.pop %v1852
          %v1883 = vmul.f32 1.0, %v1882
          %v1884 = vrcp.pop %v1853
          %v1885 = vmul.f32 1.0, %v1884
          %v1886 = vmul.f32 %v1855, %v1855
          %v1887 = vmul.f32 %v1857, %v1857
          %v1888 = vmul.f32 %v1859, %v1859
          %v1889 = vmul.f32 %v1861, %v1861
          %v1890 = vmul.f32 %v1863, %v1863
          %v1891 = vmul.f32 %v1865, %v1865
          %v1892 = vmul.f32 %v1867, %v1867
          %v1893 = vmul.f32 %v1869, %v1869
          %v1894 = vmul.f32 %v1871, %v1871
          %v1895 = vmul.f32 %v1873, %v1873
          %v1896 = vmul.f32 %v1875, %v1875
          %v1897 = vmul.f32 %v1877, %v1877
          %v1898 = vmul.f32 %v1879, %v1879
          %v1899 = vmul.f32 %v1881, %v1881
          %v1900 = vmul.f32 %v1883, %v1883
          %v1901 = vmul.f32 %v1885, %v1885
          %v1902 = vlog2.pop %v1838
          %v1903 = vmul.f32 %v1902, 0.6931472
          %v1904 = vlog2.pop %v1839
          %v1905 = vmul.f32 %v1904, 0.6931472
          %v1906 = vlog2.pop %v1840
          %v1907 = vmul.f32 %v1906, 0.6931472
          %v1908 = vlog2.pop %v1841
          %v1909 = vmul.f32 %v1908, 0.6931472
          %v1910 = vlog2.pop %v1842
          %v1911 = vmul.f32 %v1910, 0.6931472
          %v1912 = vlog2.pop %v1843
          %v1913 = vmul.f32 %v1912, 0.6931472
          %v1914 = vlog2.pop %v1844
          %v1915 = vmul.f32 %v1914, 0.6931472
          %v1916 = vlog2.pop %v1845
          %v1917 = vmul.f32 %v1916, 0.6931472
          %v1918 = vlog2.pop %v1846
          %v1919 = vmul.f32 %v1918, 0.6931472
          %v1920 = vlog2.pop %v1847
          %v1921 = vmul.f32 %v1920, 0.6931472
          %v1922 = vlog2.pop %v1848
          %v1923 = vmul.f32 %v1922, 0.6931472
          %v1924 = vlog2.pop %v1849
          %v1925 = vmul.f32 %v1924, 0.6931472
          %v1926 = vlog2.pop %v1850
          %v1927 = vmul.f32 %v1926, 0.6931472
          %v1928 = vlog2.pop %v1851
          %v1929 = vmul.f32 %v1928, 0.6931472
          %v1930 = vlog2.pop %v1852
          %v1931 = vmul.f32 %v1930, 0.6931472
          %v1932 = vlog2.pop %v1853
          %v1933 = vmul.f32 %v1932, 0.6931472
          %v1934 = vmul.f32 %v1855, 0.5
          %v1935 = vmul.f32 %v1857, 0.5
          %v1936 = vmul.f32 %v1859, 0.5
          %v1937 = vmul.f32 %v1861, 0.5
          %v1938 = vmul.f32 %v1863, 0.5
          %v1939 = vmul.f32 %v1865, 0.5
          %v1940 = vmul.f32 %v1867, 0.5
          %v1941 = vmul.f32 %v1869, 0.5
          %v1942 = vmul.f32 %v1871, 0.5
          %v1943 = vmul.f32 %v1873, 0.5
          %v1944 = vmul.f32 %v1875, 0.5
          %v1945 = vmul.f32 %v1877, 0.5
          %v1946 = vmul.f32 %v1879, 0.5
          %v1947 = vmul.f32 %v1881, 0.5
          %v1948 = vmul.f32 %v1883, 0.5
          %v1949 = vmul.f32 %v1885, 0.5
          %v1950 = vsub.f32 %v1903, %v1934
          %v1951 = vsub.f32 %v1905, %v1935
          %v1952 = vsub.f32 %v1907, %v1936
          %v1953 = vsub.f32 %v1909, %v1937
          %v1954 = vsub.f32 %v1911, %v1938
          %v1955 = vsub.f32 %v1913, %v1939
          %v1956 = vsub.f32 %v1915, %v1940
          %v1957 = vsub.f32 %v1917, %v1941
          %v1958 = vsub.f32 %v1919, %v1942
          %v1959 = vsub.f32 %v1921, %v1943
          %v1960 = vsub.f32 %v1923, %v1944
          %v1961 = vsub.f32 %v1925, %v1945
          %v1962 = vsub.f32 %v1927, %v1946
          %v1963 = vsub.f32 %v1929, %v1947
          %v1964 = vsub.f32 %v1931, %v1948
          %v1965 = vsub.f32 %v1933, %v1949
          %v1966 = vmul.f32 %v1886, 0.003968254
          %v1967 = vmul.f32 %v1887, 0.003968254
          %v1968 = vmul.f32 %v1888, 0.003968254
          %v1969 = vmul.f32 %v1889, 0.003968254
          %v1970 = vmul.f32 %v1890, 0.003968254
          %v1971 = vmul.f32 %v1891, 0.003968254
          %v1972 = vmul.f32 %v1892, 0.003968254
          %v1973 = vmul.f32 %v1893, 0.003968254
          %v1974 = vmul.f32 %v1894, 0.003968254
          %v1975 = vmul.f32 %v1895, 0.003968254
          %v1976 = vmul.f32 %v1896, 0.003968254
          %v1977 = vmul.f32 %v1897, 0.003968254
          %v1978 = vmul.f32 %v1898, 0.003968254
          %v1979 = vmul.f32 %v1899, 0.003968254
          %v1980 = vmul.f32 %v1900, 0.003968254
          %v1981 = vmul.f32 %v1901, 0.003968254
          %v1982 = vsub.f32 0.008333334, %v1966
          %v1983 = vsub.f32 0.008333334, %v1967
          %v1984 = vsub.f32 0.008333334, %v1968
          %v1985 = vsub.f32 0.008333334, %v1969
          %v1986 = vsub.f32 0.008333334, %v1970
          %v1987 = vsub.f32 0.008333334, %v1971
          %v1988 = vsub.f32 0.008333334, %v1972
          %v1989 = vsub.f32 0.008333334, %v1973
          %v1990 = vsub.f32 0.008333334, %v1974
          %v1991 = vsub.f32 0.008333334, %v1975
          %v1992 = vsub.f32 0.008333334, %v1976
          %v1993 = vsub.f32 0.008333334, %v1977
          %v1994 = vsub.f32 0.008333334, %v1978
          %v1995 = vsub.f32 0.008333334, %v1979
          %v1996 = vsub.f32 0.008333334, %v1980
          %v1997 = vsub.f32 0.008333334, %v1981
          %v1998 = vmul.f32 %v1886, %v1982
          %v1999 = vmul.f32 %v1887, %v1983
          %v2000 = vmul.f32 %v1888, %v1984
          %v2001 = vmul.f32 %v1889, %v1985
          %v2002 = vmul.f32 %v1890, %v1986
          %v2003 = vmul.f32 %v1891, %v1987
          %v2004 = vmul.f32 %v1892, %v1988
          %v2005 = vmul.f32 %v1893, %v1989
          %v2006 = vmul.f32 %v1894, %v1990
          %v2007 = vmul.f32 %v1895, %v1991
          %v2008 = vmul.f32 %v1896, %v1992
          %v2009 = vmul.f32 %v1897, %v1993
          %v2010 = vmul.f32 %v1898, %v1994
          %v2011 = vmul.f32 %v1899, %v1995
          %v2012 = vmul.f32 %v1900, %v1996
          %v2013 = vmul.f32 %v1901, %v1997
          %v2014 = vsub.f32 0.083333336, %v1998
          %v2015 = vsub.f32 0.083333336, %v1999
          %v2016 = vsub.f32 0.083333336, %v2000
          %v2017 = vsub.f32 0.083333336, %v2001
          %v2018 = vsub.f32 0.083333336, %v2002
          %v2019 = vsub.f32 0.083333336, %v2003
          %v2020 = vsub.f32 0.083333336, %v2004
          %v2021 = vsub.f32 0.083333336, %v2005
          %v2022 = vsub.f32 0.083333336, %v2006
          %v2023 = vsub.f32 0.083333336, %v2007
          %v2024 = vsub.f32 0.083333336, %v2008
          %v2025 = vsub.f32 0.083333336, %v2009
          %v2026 = vsub.f32 0.083333336, %v2010
          %v2027 = vsub.f32 0.083333336, %v2011
          %v2028 = vsub.f32 0.083333336, %v2012
          %v2029 = vsub.f32 0.083333336, %v2013
          %v2030 = vmul.f32 %v1886, %v2014
          %v2031 = vmul.f32 %v1887, %v2015
          %v2032 = vmul.f32 %v1888, %v2016
          %v2033 = vmul.f32 %v1889, %v2017
          %v2034 = vmul.f32 %v1890, %v2018
          %v2035 = vmul.f32 %v1891, %v2019
          %v2036 = vmul.f32 %v1892, %v2020
          %v2037 = vmul.f32 %v1893, %v2021
          %v2038 = vmul.f32 %v1894, %v2022
          %v2039 = vmul.f32 %v1895, %v2023
          %v2040 = vmul.f32 %v1896, %v2024
          %v2041 = vmul.f32 %v1897, %v2025
          %v2042 = vmul.f32 %v1898, %v2026
          %v2043 = vmul.f32 %v1899, %v2027
          %v2044 = vmul.f32 %v1900, %v2028
          %v2045 = vmul.f32 %v1901, %v2029
          %v2046 = vsub.f32 %v1950, %v2030
          %v2047 = vsub.f32 %v1951, %v2031
          %v2048 = vsub.f32 %v1952, %v2032
          %v2049 = vsub.f32 %v1953, %v2033
          %v2050 = vsub.f32 %v1954, %v2034
          %v2051 = vsub.f32 %v1955, %v2035
          %v2052 = vsub.f32 %v1956, %v2036
          %v2053 = vsub.f32 %v1957, %v2037
          %v2054 = vsub.f32 %v1958, %v2038
          %v2055 = vsub.f32 %v1959, %v2039
          %v2056 = vsub.f32 %v1960, %v2040
          %v2057 = vsub.f32 %v1961, %v2041
          %v2058 = vsub.f32 %v1962, %v2042
          %v2059 = vsub.f32 %v1963, %v2043
          %v2060 = vsub.f32 %v1964, %v2044
          %v2061 = vsub.f32 %v1965, %v2045
          %v2062 = vsub.f32 %v2046, %v1775
          %v2063 = vsub.f32 %v2047, %v1777
          %v2064 = vsub.f32 %v2048, %v1779
          %v2065 = vsub.f32 %v2049, %v1781
          %v2066 = vsub.f32 %v2050, %v1783
          %v2067 = vsub.f32 %v2051, %v1785
          %v2068 = vsub.f32 %v2052, %v1787
          %v2069 = vsub.f32 %v2053, %v1789
          %v2070 = vsub.f32 %v2054, %v1791
          %v2071 = vsub.f32 %v2055, %v1793
          %v2072 = vsub.f32 %v2056, %v1795
          %v2073 = vsub.f32 %v2057, %v1797
          %v2074 = vsub.f32 %v2058, %v1799
          %v2075 = vsub.f32 %v2059, %v1801
          %v2076 = vsub.f32 %v2060, %v1803
          %v2077 = vsub.f32 %v2061, %v1805
          %v2078 = vsub.f32 %v1838, 0.5
          %v2079 = vsub.f32 %v1839, 0.5
          %v2080 = vsub.f32 %v1840, 0.5
          %v2081 = vsub.f32 %v1841, 0.5
          %v2082 = vsub.f32 %v1842, 0.5
          %v2083 = vsub.f32 %v1843, 0.5
          %v2084 = vsub.f32 %v1844, 0.5
          %v2085 = vsub.f32 %v1845, 0.5
          %v2086 = vsub.f32 %v1846, 0.5
          %v2087 = vsub.f32 %v1847, 0.5
          %v2088 = vsub.f32 %v1848, 0.5
          %v2089 = vsub.f32 %v1849, 0.5
          %v2090 = vsub.f32 %v1850, 0.5
          %v2091 = vsub.f32 %v1851, 0.5
          %v2092 = vsub.f32 %v1852, 0.5
          %v2093 = vsub.f32 %v1853, 0.5
          %v2094 = vmul.f32 %v2078, %v1903
          %v2095 = vmul.f32 %v2079, %v1905
          %v2096 = vmul.f32 %v2080, %v1907
          %v2097 = vmul.f32 %v2081, %v1909
          %v2098 = vmul.f32 %v2082, %v1911
          %v2099 = vmul.f32 %v2083, %v1913
          %v2100 = vmul.f32 %v2084, %v1915
          %v2101 = vmul.f32 %v2085, %v1917
          %v2102 = vmul.f32 %v2086, %v1919
          %v2103 = vmul.f32 %v2087, %v1921
          %v2104 = vmul.f32 %v2088, %v1923
          %v2105 = vmul.f32 %v2089, %v1925
          %v2106 = vmul.f32 %v2090, %v1927
          %v2107 = vmul.f32 %v2091, %v1929
          %v2108 = vmul.f32 %v2092, %v1931
          %v2109 = vmul.f32 %v2093, %v1933
          %v2110 = vsub.f32 %v2094, %v1838
          %v2111 = vsub.f32 %v2095, %v1839
          %v2112 = vsub.f32 %v2096, %v1840
          %v2113 = vsub.f32 %v2097, %v1841
          %v2114 = vsub.f32 %v2098, %v1842
          %v2115 = vsub.f32 %v2099, %v1843
          %v2116 = vsub.f32 %v2100, %v1844
          %v2117 = vsub.f32 %v2101, %v1845
          %v2118 = vsub.f32 %v2102, %v1846
          %v2119 = vsub.f32 %v2103, %v1847
          %v2120 = vsub.f32 %v2104, %v1848
          %v2121 = vsub.f32 %v2105, %v1849
          %v2122 = vsub.f32 %v2106, %v1850
          %v2123 = vsub.f32 %v2107, %v1851
          %v2124 = vsub.f32 %v2108, %v1852
          %v2125 = vsub.f32 %v2109, %v1853
          %v2126 = vadd.f32 %v2110, 0.9189385
          %v2127 = vadd.f32 %v2111, 0.9189385
          %v2128 = vadd.f32 %v2112, 0.9189385
          %v2129 = vadd.f32 %v2113, 0.9189385
          %v2130 = vadd.f32 %v2114, 0.9189385
          %v2131 = vadd.f32 %v2115, 0.9189385
          %v2132 = vadd.f32 %v2116, 0.9189385
          %v2133 = vadd.f32 %v2117, 0.9189385
          %v2134 = vadd.f32 %v2118, 0.9189385
          %v2135 = vadd.f32 %v2119, 0.9189385
          %v2136 = vadd.f32 %v2120, 0.9189385
          %v2137 = vadd.f32 %v2121, 0.9189385
          %v2138 = vadd.f32 %v2122, 0.9189385
          %v2139 = vadd.f32 %v2123, 0.9189385
          %v2140 = vadd.f32 %v2124, 0.9189385
          %v2141 = vadd.f32 %v2125, 0.9189385
          %v2142 = vmul.f32 %v1886, 0.0007936508
          %v2143 = vmul.f32 %v1887, 0.0007936508
          %v2144 = vmul.f32 %v1888, 0.0007936508
          %v2145 = vmul.f32 %v1889, 0.0007936508
          %v2146 = vmul.f32 %v1890, 0.0007936508
          %v2147 = vmul.f32 %v1891, 0.0007936508
          %v2148 = vmul.f32 %v1892, 0.0007936508
          %v2149 = vmul.f32 %v1893, 0.0007936508
          %v2150 = vmul.f32 %v1894, 0.0007936508
          %v2151 = vmul.f32 %v1895, 0.0007936508
          %v2152 = vmul.f32 %v1896, 0.0007936508
          %v2153 = vmul.f32 %v1897, 0.0007936508
          %v2154 = vmul.f32 %v1898, 0.0007936508
          %v2155 = vmul.f32 %v1899, 0.0007936508
          %v2156 = vmul.f32 %v1900, 0.0007936508
          %v2157 = vmul.f32 %v1901, 0.0007936508
          %v2158 = vsub.f32 0.0027777778, %v2142
          %v2159 = vsub.f32 0.0027777778, %v2143
          %v2160 = vsub.f32 0.0027777778, %v2144
          %v2161 = vsub.f32 0.0027777778, %v2145
          %v2162 = vsub.f32 0.0027777778, %v2146
          %v2163 = vsub.f32 0.0027777778, %v2147
          %v2164 = vsub.f32 0.0027777778, %v2148
          %v2165 = vsub.f32 0.0027777778, %v2149
          %v2166 = vsub.f32 0.0027777778, %v2150
          %v2167 = vsub.f32 0.0027777778, %v2151
          %v2168 = vsub.f32 0.0027777778, %v2152
          %v2169 = vsub.f32 0.0027777778, %v2153
          %v2170 = vsub.f32 0.0027777778, %v2154
          %v2171 = vsub.f32 0.0027777778, %v2155
          %v2172 = vsub.f32 0.0027777778, %v2156
          %v2173 = vsub.f32 0.0027777778, %v2157
          %v2174 = vmul.f32 %v1886, %v2158
          %v2175 = vmul.f32 %v1887, %v2159
          %v2176 = vmul.f32 %v1888, %v2160
          %v2177 = vmul.f32 %v1889, %v2161
          %v2178 = vmul.f32 %v1890, %v2162
          %v2179 = vmul.f32 %v1891, %v2163
          %v2180 = vmul.f32 %v1892, %v2164
          %v2181 = vmul.f32 %v1893, %v2165
          %v2182 = vmul.f32 %v1894, %v2166
          %v2183 = vmul.f32 %v1895, %v2167
          %v2184 = vmul.f32 %v1896, %v2168
          %v2185 = vmul.f32 %v1897, %v2169
          %v2186 = vmul.f32 %v1898, %v2170
          %v2187 = vmul.f32 %v1899, %v2171
          %v2188 = vmul.f32 %v1900, %v2172
          %v2189 = vmul.f32 %v1901, %v2173
          %v2190 = vsub.f32 0.083333336, %v2174
          %v2191 = vsub.f32 0.083333336, %v2175
          %v2192 = vsub.f32 0.083333336, %v2176
          %v2193 = vsub.f32 0.083333336, %v2177
          %v2194 = vsub.f32 0.083333336, %v2178
          %v2195 = vsub.f32 0.083333336, %v2179
          %v2196 = vsub.f32 0.083333336, %v2180
          %v2197 = vsub.f32 0.083333336, %v2181
          %v2198 = vsub.f32 0.083333336, %v2182
          %v2199 = vsub.f32 0.083333336, %v2183
          %v2200 = vsub.f32 0.083333336, %v2184
          %v2201 = vsub.f32 0.083333336, %v2185
          %v2202 = vsub.f32 0.083333336, %v2186
          %v2203 = vsub.f32 0.083333336, %v2187
          %v2204 = vsub.f32 0.083333336, %v2188
          %v2205 = vsub.f32 0.083333336, %v2189
          %v2206 = vmul.f32 %v1855, %v2190
          %v2207 = vmul.f32 %v1857, %v2191
          %v2208 = vmul.f32 %v1859, %v2192
          %v2209 = vmul.f32 %v1861, %v2193
          %v2210 = vmul.f32 %v1863, %v2194
          %v2211 = vmul.f32 %v1865, %v2195
          %v2212 = vmul.f32 %v1867, %v2196
          %v2213 = vmul.f32 %v1869, %v2197
          %v2214 = vmul.f32 %v1871, %v2198
          %v2215 = vmul.f32 %v1873, %v2199
          %v2216 = vmul.f32 %v1875, %v2200
          %v2217 = vmul.f32 %v1877, %v2201
          %v2218 = vmul.f32 %v1879, %v2202
          %v2219 = vmul.f32 %v1881, %v2203
          %v2220 = vmul.f32 %v1883, %v2204
          %v2221 = vmul.f32 %v1885, %v2205
          %v2222 = vadd.f32 %v2126, %v2206
          %v2223 = vadd.f32 %v2127, %v2207
          %v2224 = vadd.f32 %v2128, %v2208
          %v2225 = vadd.f32 %v2129, %v2209
          %v2226 = vadd.f32 %v2130, %v2210
          %v2227 = vadd.f32 %v2131, %v2211
          %v2228 = vadd.f32 %v2132, %v2212
          %v2229 = vadd.f32 %v2133, %v2213
          %v2230 = vadd.f32 %v2134, %v2214
          %v2231 = vadd.f32 %v2135, %v2215
          %v2232 = vadd.f32 %v2136, %v2216
          %v2233 = vadd.f32 %v2137, %v2217
          %v2234 = vadd.f32 %v2138, %v2218
          %v2235 = vadd.f32 %v2139, %v2219
          %v2236 = vadd.f32 %v2140, %v2220
          %v2237 = vadd.f32 %v2141, %v2221
          %v2238 = vsub.f32 %v2222, %v1807
          %v2239 = vsub.f32 %v2223, %v1809
          %v2240 = vsub.f32 %v2224, %v1811
          %v2241 = vsub.f32 %v2225, %v1813
          %v2242 = vsub.f32 %v2226, %v1815
          %v2243 = vsub.f32 %v2227, %v1817
          %v2244 = vsub.f32 %v2228, %v1819
          %v2245 = vsub.f32 %v2229, %v1821
          %v2246 = vsub.f32 %v2230, %v1823
          %v2247 = vsub.f32 %v2231, %v1825
          %v2248 = vsub.f32 %v2232, %v1827
          %v2249 = vsub.f32 %v2233, %v1829
          %v2250 = vsub.f32 %v2234, %v1831
          %v2251 = vsub.f32 %v2235, %v1833
          %v2252 = vsub.f32 %v2236, %v1835
          %v2253 = vsub.f32 %v2237, %v1837
          %v2254 = vadd.f32 %v1150, 1.1920929e-07
          %v2255 = vadd.f32 %v1151, 1.1920929e-07
          %v2256 = vadd.f32 %v1152, 1.1920929e-07
          %v2257 = vadd.f32 %v1153, 1.1920929e-07
          %v2258 = vadd.f32 %v1154, 1.1920929e-07
          %v2259 = vadd.f32 %v1155, 1.1920929e-07
          %v2260 = vadd.f32 %v1156, 1.1920929e-07
          %v2261 = vadd.f32 %v1157, 1.1920929e-07
          %v2262 = vadd.f32 %v1158, 1.1920929e-07
          %v2263 = vadd.f32 %v1159, 1.1920929e-07
          %v2264 = vadd.f32 %v1160, 1.1920929e-07
          %v2265 = vadd.f32 %v1161, 1.1920929e-07
          %v2266 = vadd.f32 %v1162, 1.1920929e-07
          %v2267 = vadd.f32 %v1163, 1.1920929e-07
          %v2268 = vadd.f32 %v1164, 1.1920929e-07
          %v2269 = vadd.f32 %v1165, 1.1920929e-07
          %v2270 = vadd.f32 %v2254, 1.0
          %v2271 = vadd.f32 %v2255, 1.0
          %v2272 = vadd.f32 %v2256, 1.0
          %v2273 = vadd.f32 %v2257, 1.0
          %v2274 = vadd.f32 %v2258, 1.0
          %v2275 = vadd.f32 %v2259, 1.0
          %v2276 = vadd.f32 %v2260, 1.0
          %v2277 = vadd.f32 %v2261, 1.0
          %v2278 = vadd.f32 %v2262, 1.0
          %v2279 = vadd.f32 %v2263, 1.0
          %v2280 = vadd.f32 %v2264, 1.0
          %v2281 = vadd.f32 %v2265, 1.0
          %v2282 = vadd.f32 %v2266, 1.0
          %v2283 = vadd.f32 %v2267, 1.0
          %v2284 = vadd.f32 %v2268, 1.0
          %v2285 = vadd.f32 %v2269, 1.0
          %v2286 = vmul.f32 %v2254, %v2270
          %v2287 = vmul.f32 %v2255, %v2271
          %v2288 = vmul.f32 %v2256, %v2272
          %v2289 = vmul.f32 %v2257, %v2273
          %v2290 = vmul.f32 %v2258, %v2274
          %v2291 = vmul.f32 %v2259, %v2275
          %v2292 = vmul.f32 %v2260, %v2276
          %v2293 = vmul.f32 %v2261, %v2277
          %v2294 = vmul.f32 %v2262, %v2278
          %v2295 = vmul.f32 %v2263, %v2279
          %v2296 = vmul.f32 %v2264, %v2280
          %v2297 = vmul.f32 %v2265, %v2281
          %v2298 = vmul.f32 %v2266, %v2282
          %v2299 = vmul.f32 %v2267, %v2283
          %v2300 = vmul.f32 %v2268, %v2284
          %v2301 = vmul.f32 %v2269, %v2285
          %v2302 = vadd.f32 %v2254, %v2270
          %v2303 = vadd.f32 %v2255, %v2271
          %v2304 = vadd.f32 %v2256, %v2272
          %v2305 = vadd.f32 %v2257, %v2273
          %v2306 = vadd.f32 %v2258, %v2274
          %v2307 = vadd.f32 %v2259, %v2275
          %v2308 = vadd.f32 %v2260, %v2276
          %v2309 = vadd.f32 %v2261, %v2277
          %v2310 = vadd.f32 %v2262, %v2278
          %v2311 = vadd.f32 %v2263, %v2279
          %v2312 = vadd.f32 %v2264, %v2280
          %v2313 = vadd.f32 %v2265, %v2281
          %v2314 = vadd.f32 %v2266, %v2282
          %v2315 = vadd.f32 %v2267, %v2283
          %v2316 = vadd.f32 %v2268, %v2284
          %v2317 = vadd.f32 %v2269, %v2285
          %v2318 = vrcp.pop %v2286
          %v2319 = vmul.f32 %v2302, %v2318
          %v2320 = vrcp.pop %v2287
          %v2321 = vmul.f32 %v2303, %v2320
          %v2322 = vrcp.pop %v2288
          %v2323 = vmul.f32 %v2304, %v2322
          %v2324 = vrcp.pop %v2289
          %v2325 = vmul.f32 %v2305, %v2324
          %v2326 = vrcp.pop %v2290
          %v2327 = vmul.f32 %v2306, %v2326
          %v2328 = vrcp.pop %v2291
          %v2329 = vmul.f32 %v2307, %v2328
          %v2330 = vrcp.pop %v2292
          %v2331 = vmul.f32 %v2308, %v2330
          %v2332 = vrcp.pop %v2293
          %v2333 = vmul.f32 %v2309, %v2332
          %v2334 = vrcp.pop %v2294
          %v2335 = vmul.f32 %v2310, %v2334
          %v2336 = vrcp.pop %v2295
          %v2337 = vmul.f32 %v2311, %v2336
          %v2338 = vrcp.pop %v2296
          %v2339 = vmul.f32 %v2312, %v2338
          %v2340 = vrcp.pop %v2297
          %v2341 = vmul.f32 %v2313, %v2340
          %v2342 = vrcp.pop %v2298
          %v2343 = vmul.f32 %v2314, %v2342
          %v2344 = vrcp.pop %v2299
          %v2345 = vmul.f32 %v2315, %v2344
          %v2346 = vrcp.pop %v2300
          %v2347 = vmul.f32 %v2316, %v2346
          %v2348 = vrcp.pop %v2301
          %v2349 = vmul.f32 %v2317, %v2348
          %v2350 = vlog2.pop %v2286
          %v2351 = vmul.f32 %v2350, 0.6931472
          %v2352 = vlog2.pop %v2287
          %v2353 = vmul.f32 %v2352, 0.6931472
          %v2354 = vlog2.pop %v2288
          %v2355 = vmul.f32 %v2354, 0.6931472
          %v2356 = vlog2.pop %v2289
          %v2357 = vmul.f32 %v2356, 0.6931472
          %v2358 = vlog2.pop %v2290
          %v2359 = vmul.f32 %v2358, 0.6931472
          %v2360 = vlog2.pop %v2291
          %v2361 = vmul.f32 %v2360, 0.6931472
          %v2362 = vlog2.pop %v2292
          %v2363 = vmul.f32 %v2362, 0.6931472
          %v2364 = vlog2.pop %v2293
          %v2365 = vmul.f32 %v2364, 0.6931472
          %v2366 = vlog2.pop %v2294
          %v2367 = vmul.f32 %v2366, 0.6931472
          %v2368 = vlog2.pop %v2295
          %v2369 = vmul.f32 %v2368, 0.6931472
          %v2370 = vlog2.pop %v2296
          %v2371 = vmul.f32 %v2370, 0.6931472
          %v2372 = vlog2.pop %v2297
          %v2373 = vmul.f32 %v2372, 0.6931472
          %v2374 = vlog2.pop %v2298
          %v2375 = vmul.f32 %v2374, 0.6931472
          %v2376 = vlog2.pop %v2299
          %v2377 = vmul.f32 %v2376, 0.6931472
          %v2378 = vlog2.pop %v2300
          %v2379 = vmul.f32 %v2378, 0.6931472
          %v2380 = vlog2.pop %v2301
          %v2381 = vmul.f32 %v2380, 0.6931472
          %v2382 = vadd.f32 %v2254, 2.0
          %v2383 = vadd.f32 %v2255, 2.0
          %v2384 = vadd.f32 %v2256, 2.0
          %v2385 = vadd.f32 %v2257, 2.0
          %v2386 = vadd.f32 %v2258, 2.0
          %v2387 = vadd.f32 %v2259, 2.0
          %v2388 = vadd.f32 %v2260, 2.0
          %v2389 = vadd.f32 %v2261, 2.0
          %v2390 = vadd.f32 %v2262, 2.0
          %v2391 = vadd.f32 %v2263, 2.0
          %v2392 = vadd.f32 %v2264, 2.0
          %v2393 = vadd.f32 %v2265, 2.0
          %v2394 = vadd.f32 %v2266, 2.0
          %v2395 = vadd.f32 %v2267, 2.0
          %v2396 = vadd.f32 %v2268, 2.0
          %v2397 = vadd.f32 %v2269, 2.0
          %v2398 = vrcp.pop %v2382
          %v2399 = vmul.f32 1.0, %v2398
          %v2400 = vrcp.pop %v2383
          %v2401 = vmul.f32 1.0, %v2400
          %v2402 = vrcp.pop %v2384
          %v2403 = vmul.f32 1.0, %v2402
          %v2404 = vrcp.pop %v2385
          %v2405 = vmul.f32 1.0, %v2404
          %v2406 = vrcp.pop %v2386
          %v2407 = vmul.f32 1.0, %v2406
          %v2408 = vrcp.pop %v2387
          %v2409 = vmul.f32 1.0, %v2408
          %v2410 = vrcp.pop %v2388
          %v2411 = vmul.f32 1.0, %v2410
          %v2412 = vrcp.pop %v2389
          %v2413 = vmul.f32 1.0, %v2412
          %v2414 = vrcp.pop %v2390
          %v2415 = vmul.f32 1.0, %v2414
          %v2416 = vrcp.pop %v2391
          %v2417 = vmul.f32 1.0, %v2416
          %v2418 = vrcp.pop %v2392
          %v2419 = vmul.f32 1.0, %v2418
          %v2420 = vrcp.pop %v2393
          %v2421 = vmul.f32 1.0, %v2420
          %v2422 = vrcp.pop %v2394
          %v2423 = vmul.f32 1.0, %v2422
          %v2424 = vrcp.pop %v2395
          %v2425 = vmul.f32 1.0, %v2424
          %v2426 = vrcp.pop %v2396
          %v2427 = vmul.f32 1.0, %v2426
          %v2428 = vrcp.pop %v2397
          %v2429 = vmul.f32 1.0, %v2428
          %v2430 = vmul.f32 %v2399, %v2399
          %v2431 = vmul.f32 %v2401, %v2401
          %v2432 = vmul.f32 %v2403, %v2403
          %v2433 = vmul.f32 %v2405, %v2405
          %v2434 = vmul.f32 %v2407, %v2407
          %v2435 = vmul.f32 %v2409, %v2409
          %v2436 = vmul.f32 %v2411, %v2411
          %v2437 = vmul.f32 %v2413, %v2413
          %v2438 = vmul.f32 %v2415, %v2415
          %v2439 = vmul.f32 %v2417, %v2417
          %v2440 = vmul.f32 %v2419, %v2419
          %v2441 = vmul.f32 %v2421, %v2421
          %v2442 = vmul.f32 %v2423, %v2423
          %v2443 = vmul.f32 %v2425, %v2425
          %v2444 = vmul.f32 %v2427, %v2427
          %v2445 = vmul.f32 %v2429, %v2429
          %v2446 = vlog2.pop %v2382
          %v2447 = vmul.f32 %v2446, 0.6931472
          %v2448 = vlog2.pop %v2383
          %v2449 = vmul.f32 %v2448, 0.6931472
          %v2450 = vlog2.pop %v2384
          %v2451 = vmul.f32 %v2450, 0.6931472
          %v2452 = vlog2.pop %v2385
          %v2453 = vmul.f32 %v2452, 0.6931472
          %v2454 = vlog2.pop %v2386
          %v2455 = vmul.f32 %v2454, 0.6931472
          %v2456 = vlog2.pop %v2387
          %v2457 = vmul.f32 %v2456, 0.6931472
          %v2458 = vlog2.pop %v2388
          %v2459 = vmul.f32 %v2458, 0.6931472
          %v2460 = vlog2.pop %v2389
          %v2461 = vmul.f32 %v2460, 0.6931472
          %v2462 = vlog2.pop %v2390
          %v2463 = vmul.f32 %v2462, 0.6931472
          %v2464 = vlog2.pop %v2391
          %v2465 = vmul.f32 %v2464, 0.6931472
          %v2466 = vlog2.pop %v2392
          %v2467 = vmul.f32 %v2466, 0.6931472
          %v2468 = vlog2.pop %v2393
          %v2469 = vmul.f32 %v2468, 0.6931472
          %v2470 = vlog2.pop %v2394
          %v2471 = vmul.f32 %v2470, 0.6931472
          %v2472 = vlog2.pop %v2395
          %v2473 = vmul.f32 %v2472, 0.6931472
          %v2474 = vlog2.pop %v2396
          %v2475 = vmul.f32 %v2474, 0.6931472
          %v2476 = vlog2.pop %v2397
          %v2477 = vmul.f32 %v2476, 0.6931472
          %v2478 = vmul.f32 %v2399, 0.5
          %v2479 = vmul.f32 %v2401, 0.5
          %v2480 = vmul.f32 %v2403, 0.5
          %v2481 = vmul.f32 %v2405, 0.5
          %v2482 = vmul.f32 %v2407, 0.5
          %v2483 = vmul.f32 %v2409, 0.5
          %v2484 = vmul.f32 %v2411, 0.5
          %v2485 = vmul.f32 %v2413, 0.5
          %v2486 = vmul.f32 %v2415, 0.5
          %v2487 = vmul.f32 %v2417, 0.5
          %v2488 = vmul.f32 %v2419, 0.5
          %v2489 = vmul.f32 %v2421, 0.5
          %v2490 = vmul.f32 %v2423, 0.5
          %v2491 = vmul.f32 %v2425, 0.5
          %v2492 = vmul.f32 %v2427, 0.5
          %v2493 = vmul.f32 %v2429, 0.5
          %v2494 = vsub.f32 %v2447, %v2478
          %v2495 = vsub.f32 %v2449, %v2479
          %v2496 = vsub.f32 %v2451, %v2480
          %v2497 = vsub.f32 %v2453, %v2481
          %v2498 = vsub.f32 %v2455, %v2482
          %v2499 = vsub.f32 %v2457, %v2483
          %v2500 = vsub.f32 %v2459, %v2484
          %v2501 = vsub.f32 %v2461, %v2485
          %v2502 = vsub.f32 %v2463, %v2486
          %v2503 = vsub.f32 %v2465, %v2487
          %v2504 = vsub.f32 %v2467, %v2488
          %v2505 = vsub.f32 %v2469, %v2489
          %v2506 = vsub.f32 %v2471, %v2490
          %v2507 = vsub.f32 %v2473, %v2491
          %v2508 = vsub.f32 %v2475, %v2492
          %v2509 = vsub.f32 %v2477, %v2493
          %v2510 = vmul.f32 %v2430, 0.003968254
          %v2511 = vmul.f32 %v2431, 0.003968254
          %v2512 = vmul.f32 %v2432, 0.003968254
          %v2513 = vmul.f32 %v2433, 0.003968254
          %v2514 = vmul.f32 %v2434, 0.003968254
          %v2515 = vmul.f32 %v2435, 0.003968254
          %v2516 = vmul.f32 %v2436, 0.003968254
          %v2517 = vmul.f32 %v2437, 0.003968254
          %v2518 = vmul.f32 %v2438, 0.003968254
          %v2519 = vmul.f32 %v2439, 0.003968254
          %v2520 = vmul.f32 %v2440, 0.003968254
          %v2521 = vmul.f32 %v2441, 0.003968254
          %v2522 = vmul.f32 %v2442, 0.003968254
          %v2523 = vmul.f32 %v2443, 0.003968254
          %v2524 = vmul.f32 %v2444, 0.003968254
          %v2525 = vmul.f32 %v2445, 0.003968254
          %v2526 = vsub.f32 0.008333334, %v2510
          %v2527 = vsub.f32 0.008333334, %v2511
          %v2528 = vsub.f32 0.008333334, %v2512
          %v2529 = vsub.f32 0.008333334, %v2513
          %v2530 = vsub.f32 0.008333334, %v2514
          %v2531 = vsub.f32 0.008333334, %v2515
          %v2532 = vsub.f32 0.008333334, %v2516
          %v2533 = vsub.f32 0.008333334, %v2517
          %v2534 = vsub.f32 0.008333334, %v2518
          %v2535 = vsub.f32 0.008333334, %v2519
          %v2536 = vsub.f32 0.008333334, %v2520
          %v2537 = vsub.f32 0.008333334, %v2521
          %v2538 = vsub.f32 0.008333334, %v2522
          %v2539 = vsub.f32 0.008333334, %v2523
          %v2540 = vsub.f32 0.008333334, %v2524
          %v2541 = vsub.f32 0.008333334, %v2525
          %v2542 = vmul.f32 %v2430, %v2526
          %v2543 = vmul.f32 %v2431, %v2527
          %v2544 = vmul.f32 %v2432, %v2528
          %v2545 = vmul.f32 %v2433, %v2529
          %v2546 = vmul.f32 %v2434, %v2530
          %v2547 = vmul.f32 %v2435, %v2531
          %v2548 = vmul.f32 %v2436, %v2532
          %v2549 = vmul.f32 %v2437, %v2533
          %v2550 = vmul.f32 %v2438, %v2534
          %v2551 = vmul.f32 %v2439, %v2535
          %v2552 = vmul.f32 %v2440, %v2536
          %v2553 = vmul.f32 %v2441, %v2537
          %v2554 = vmul.f32 %v2442, %v2538
          %v2555 = vmul.f32 %v2443, %v2539
          %v2556 = vmul.f32 %v2444, %v2540
          %v2557 = vmul.f32 %v2445, %v2541
          %v2558 = vsub.f32 0.083333336, %v2542
          %v2559 = vsub.f32 0.083333336, %v2543
          %v2560 = vsub.f32 0.083333336, %v2544
          %v2561 = vsub.f32 0.083333336, %v2545
          %v2562 = vsub.f32 0.083333336, %v2546
          %v2563 = vsub.f32 0.083333336, %v2547
          %v2564 = vsub.f32 0.083333336, %v2548
          %v2565 = vsub.f32 0.083333336, %v2549
          %v2566 = vsub.f32 0.083333336, %v2550
          %v2567 = vsub.f32 0.083333336, %v2551
          %v2568 = vsub.f32 0.083333336, %v2552
          %v2569 = vsub.f32 0.083333336, %v2553
          %v2570 = vsub.f32 0.083333336, %v2554
          %v2571 = vsub.f32 0.083333336, %v2555
          %v2572 = vsub.f32 0.083333336, %v2556
          %v2573 = vsub.f32 0.083333336, %v2557
          %v2574 = vmul.f32 %v2430, %v2558
          %v2575 = vmul.f32 %v2431, %v2559
          %v2576 = vmul.f32 %v2432, %v2560
          %v2577 = vmul.f32 %v2433, %v2561
          %v2578 = vmul.f32 %v2434, %v2562
          %v2579 = vmul.f32 %v2435, %v2563
          %v2580 = vmul.f32 %v2436, %v2564
          %v2581 = vmul.f32 %v2437, %v2565
          %v2582 = vmul.f32 %v2438, %v2566
          %v2583 = vmul.f32 %v2439, %v2567
          %v2584 = vmul.f32 %v2440, %v2568
          %v2585 = vmul.f32 %v2441, %v2569
          %v2586 = vmul.f32 %v2442, %v2570
          %v2587 = vmul.f32 %v2443, %v2571
          %v2588 = vmul.f32 %v2444, %v2572
          %v2589 = vmul.f32 %v2445, %v2573
          %v2590 = vsub.f32 %v2494, %v2574
          %v2591 = vsub.f32 %v2495, %v2575
          %v2592 = vsub.f32 %v2496, %v2576
          %v2593 = vsub.f32 %v2497, %v2577
          %v2594 = vsub.f32 %v2498, %v2578
          %v2595 = vsub.f32 %v2499, %v2579
          %v2596 = vsub.f32 %v2500, %v2580
          %v2597 = vsub.f32 %v2501, %v2581
          %v2598 = vsub.f32 %v2502, %v2582
          %v2599 = vsub.f32 %v2503, %v2583
          %v2600 = vsub.f32 %v2504, %v2584
          %v2601 = vsub.f32 %v2505, %v2585
          %v2602 = vsub.f32 %v2506, %v2586
          %v2603 = vsub.f32 %v2507, %v2587
          %v2604 = vsub.f32 %v2508, %v2588
          %v2605 = vsub.f32 %v2509, %v2589
          %v2606 = vsub.f32 %v2590, %v2319
          %v2607 = vsub.f32 %v2591, %v2321
          %v2608 = vsub.f32 %v2592, %v2323
          %v2609 = vsub.f32 %v2593, %v2325
          %v2610 = vsub.f32 %v2594, %v2327
          %v2611 = vsub.f32 %v2595, %v2329
          %v2612 = vsub.f32 %v2596, %v2331
          %v2613 = vsub.f32 %v2597, %v2333
          %v2614 = vsub.f32 %v2598, %v2335
          %v2615 = vsub.f32 %v2599, %v2337
          %v2616 = vsub.f32 %v2600, %v2339
          %v2617 = vsub.f32 %v2601, %v2341
          %v2618 = vsub.f32 %v2602, %v2343
          %v2619 = vsub.f32 %v2603, %v2345
          %v2620 = vsub.f32 %v2604, %v2347
          %v2621 = vsub.f32 %v2605, %v2349
          %v2622 = vsub.f32 %v2382, 0.5
          %v2623 = vsub.f32 %v2383, 0.5
          %v2624 = vsub.f32 %v2384, 0.5
          %v2625 = vsub.f32 %v2385, 0.5
          %v2626 = vsub.f32 %v2386, 0.5
          %v2627 = vsub.f32 %v2387, 0.5
          %v2628 = vsub.f32 %v2388, 0.5
          %v2629 = vsub.f32 %v2389, 0.5
          %v2630 = vsub.f32 %v2390, 0.5
          %v2631 = vsub.f32 %v2391, 0.5
          %v2632 = vsub.f32 %v2392, 0.5
          %v2633 = vsub.f32 %v2393, 0.5
          %v2634 = vsub.f32 %v2394, 0.5
          %v2635 = vsub.f32 %v2395, 0.5
          %v2636 = vsub.f32 %v2396, 0.5
          %v2637 = vsub.f32 %v2397, 0.5
          %v2638 = vmul.f32 %v2622, %v2447
          %v2639 = vmul.f32 %v2623, %v2449
          %v2640 = vmul.f32 %v2624, %v2451
          %v2641 = vmul.f32 %v2625, %v2453
          %v2642 = vmul.f32 %v2626, %v2455
          %v2643 = vmul.f32 %v2627, %v2457
          %v2644 = vmul.f32 %v2628, %v2459
          %v2645 = vmul.f32 %v2629, %v2461
          %v2646 = vmul.f32 %v2630, %v2463
          %v2647 = vmul.f32 %v2631, %v2465
          %v2648 = vmul.f32 %v2632, %v2467
          %v2649 = vmul.f32 %v2633, %v2469
          %v2650 = vmul.f32 %v2634, %v2471
          %v2651 = vmul.f32 %v2635, %v2473
          %v2652 = vmul.f32 %v2636, %v2475
          %v2653 = vmul.f32 %v2637, %v2477
          %v2654 = vsub.f32 %v2638, %v2382
          %v2655 = vsub.f32 %v2639, %v2383
          %v2656 = vsub.f32 %v2640, %v2384
          %v2657 = vsub.f32 %v2641, %v2385
          %v2658 = vsub.f32 %v2642, %v2386
          %v2659 = vsub.f32 %v2643, %v2387
          %v2660 = vsub.f32 %v2644, %v2388
          %v2661 = vsub.f32 %v2645, %v2389
          %v2662 = vsub.f32 %v2646, %v2390
          %v2663 = vsub.f32 %v2647, %v2391
          %v2664 = vsub.f32 %v2648, %v2392
          %v2665 = vsub.f32 %v2649, %v2393
          %v2666 = vsub.f32 %v2650, %v2394
          %v2667 = vsub.f32 %v2651, %v2395
          %v2668 = vsub.f32 %v2652, %v2396
          %v2669 = vsub.f32 %v2653, %v2397
          %v2670 = vadd.f32 %v2654, 0.9189385
          %v2671 = vadd.f32 %v2655, 0.9189385
          %v2672 = vadd.f32 %v2656, 0.9189385
          %v2673 = vadd.f32 %v2657, 0.9189385
          %v2674 = vadd.f32 %v2658, 0.9189385
          %v2675 = vadd.f32 %v2659, 0.9189385
          %v2676 = vadd.f32 %v2660, 0.9189385
          %v2677 = vadd.f32 %v2661, 0.9189385
          %v2678 = vadd.f32 %v2662, 0.9189385
          %v2679 = vadd.f32 %v2663, 0.9189385
          %v2680 = vadd.f32 %v2664, 0.9189385
          %v2681 = vadd.f32 %v2665, 0.9189385
          %v2682 = vadd.f32 %v2666, 0.9189385
          %v2683 = vadd.f32 %v2667, 0.9189385
          %v2684 = vadd.f32 %v2668, 0.9189385
          %v2685 = vadd.f32 %v2669, 0.9189385
          %v2686 = vmul.f32 %v2430, 0.0007936508
          %v2687 = vmul.f32 %v2431, 0.0007936508
          %v2688 = vmul.f32 %v2432, 0.0007936508
          %v2689 = vmul.f32 %v2433, 0.0007936508
          %v2690 = vmul.f32 %v2434, 0.0007936508
          %v2691 = vmul.f32 %v2435, 0.0007936508
          %v2692 = vmul.f32 %v2436, 0.0007936508
          %v2693 = vmul.f32 %v2437, 0.0007936508
          %v2694 = vmul.f32 %v2438, 0.0007936508
          %v2695 = vmul.f32 %v2439, 0.0007936508
          %v2696 = vmul.f32 %v2440, 0.0007936508
          %v2697 = vmul.f32 %v2441, 0.0007936508
          %v2698 = vmul.f32 %v2442, 0.0007936508
          %v2699 = vmul.f32 %v2443, 0.0007936508
          %v2700 = vmul.f32 %v2444, 0.0007936508
          %v2701 = vmul.f32 %v2445, 0.0007936508
          %v2702 = vsub.f32 0.0027777778, %v2686
          %v2703 = vsub.f32 0.0027777778, %v2687
          %v2704 = vsub.f32 0.0027777778, %v2688
          %v2705 = vsub.f32 0.0027777778, %v2689
          %v2706 = vsub.f32 0.0027777778, %v2690
          %v2707 = vsub.f32 0.0027777778, %v2691
          %v2708 = vsub.f32 0.0027777778, %v2692
          %v2709 = vsub.f32 0.0027777778, %v2693
          %v2710 = vsub.f32 0.0027777778, %v2694
          %v2711 = vsub.f32 0.0027777778, %v2695
          %v2712 = vsub.f32 0.0027777778, %v2696
          %v2713 = vsub.f32 0.0027777778, %v2697
          %v2714 = vsub.f32 0.0027777778, %v2698
          %v2715 = vsub.f32 0.0027777778, %v2699
          %v2716 = vsub.f32 0.0027777778, %v2700
          %v2717 = vsub.f32 0.0027777778, %v2701
          %v2718 = vmul.f32 %v2430, %v2702
          %v2719 = vmul.f32 %v2431, %v2703
          %v2720 = vmul.f32 %v2432, %v2704
          %v2721 = vmul.f32 %v2433, %v2705
          %v2722 = vmul.f32 %v2434, %v2706
          %v2723 = vmul.f32 %v2435, %v2707
          %v2724 = vmul.f32 %v2436, %v2708
          %v2725 = vmul.f32 %v2437, %v2709
          %v2726 = vmul.f32 %v2438, %v2710
          %v2727 = vmul.f32 %v2439, %v2711
          %v2728 = vmul.f32 %v2440, %v2712
          %v2729 = vmul.f32 %v2441, %v2713
          %v2730 = vmul.f32 %v2442, %v2714
          %v2731 = vmul.f32 %v2443, %v2715
          %v2732 = vmul.f32 %v2444, %v2716
          %v2733 = vmul.f32 %v2445, %v2717
          %v2734 = vsub.f32 0.083333336, %v2718
          %v2735 = vsub.f32 0.083333336, %v2719
          %v2736 = vsub.f32 0.083333336, %v2720
          %v2737 = vsub.f32 0.083333336, %v2721
          %v2738 = vsub.f32 0.083333336, %v2722
          %v2739 = vsub.f32 0.083333336, %v2723
          %v2740 = vsub.f32 0.083333336, %v2724
          %v2741 = vsub.f32 0.083333336, %v2725
          %v2742 = vsub.f32 0.083333336, %v2726
          %v2743 = vsub.f32 0.083333336, %v2727
          %v2744 = vsub.f32 0.083333336, %v2728
          %v2745 = vsub.f32 0.083333336, %v2729
          %v2746 = vsub.f32 0.083333336, %v2730
          %v2747 = vsub.f32 0.083333336, %v2731
          %v2748 = vsub.f32 0.083333336, %v2732
          %v2749 = vsub.f32 0.083333336, %v2733
          %v2750 = vmul.f32 %v2399, %v2734
          %v2751 = vmul.f32 %v2401, %v2735
          %v2752 = vmul.f32 %v2403, %v2736
          %v2753 = vmul.f32 %v2405, %v2737
          %v2754 = vmul.f32 %v2407, %v2738
          %v2755 = vmul.f32 %v2409, %v2739
          %v2756 = vmul.f32 %v2411, %v2740
          %v2757 = vmul.f32 %v2413, %v2741
          %v2758 = vmul.f32 %v2415, %v2742
          %v2759 = vmul.f32 %v2417, %v2743
          %v2760 = vmul.f32 %v2419, %v2744
          %v2761 = vmul.f32 %v2421, %v2745
          %v2762 = vmul.f32 %v2423, %v2746
          %v2763 = vmul.f32 %v2425, %v2747
          %v2764 = vmul.f32 %v2427, %v2748
          %v2765 = vmul.f32 %v2429, %v2749
          %v2766 = vadd.f32 %v2670, %v2750
          %v2767 = vadd.f32 %v2671, %v2751
          %v2768 = vadd.f32 %v2672, %v2752
          %v2769 = vadd.f32 %v2673, %v2753
          %v2770 = vadd.f32 %v2674, %v2754
          %v2771 = vadd.f32 %v2675, %v2755
          %v2772 = vadd.f32 %v2676, %v2756
          %v2773 = vadd.f32 %v2677, %v2757
          %v2774 = vadd.f32 %v2678, %v2758
          %v2775 = vadd.f32 %v2679, %v2759
          %v2776 = vadd.f32 %v2680, %v2760
          %v2777 = vadd.f32 %v2681, %v2761
          %v2778 = vadd.f32 %v2682, %v2762
          %v2779 = vadd.f32 %v2683, %v2763
          %v2780 = vadd.f32 %v2684, %v2764
          %v2781 = vadd.f32 %v2685, %v2765
          %v2782 = vsub.f32 %v2766, %v2351
          %v2783 = vsub.f32 %v2767, %v2353
          %v2784 = vsub.f32 %v2768, %v2355
          %v2785 = vsub.f32 %v2769, %v2357
          %v2786 = vsub.f32 %v2770, %v2359
          %v2787 = vsub.f32 %v2771, %v2361
          %v2788 = vsub.f32 %v2772, %v2363
          %v2789 = vsub.f32 %v2773, %v2365
          %v2790 = vsub.f32 %v2774, %v2367
          %v2791 = vsub.f32 %v2775, %v2369
          %v2792 = vsub.f32 %v2776, %v2371
          %v2793 = vsub.f32 %v2777, %v2373
          %v2794 = vsub.f32 %v2778, %v2375
          %v2795 = vsub.f32 %v2779, %v2377
          %v2796 = vsub.f32 %v2780, %v2379
          %v2797 = vsub.f32 %v2781, %v2381
          %v2798 = vsub.f32 %v1518, %v2606
          %v2799 = vsub.f32 %v1519, %v2607
          %v2800 = vsub.f32 %v1520, %v2608
          %v2801 = vsub.f32 %v1521, %v2609
          %v2802 = vsub.f32 %v1522, %v2610
          %v2803 = vsub.f32 %v1523, %v2611
          %v2804 = vsub.f32 %v1524, %v2612
          %v2805 = vsub.f32 %v1525, %v2613
          %v2806 = vsub.f32 %v1526, %v2614
          %v2807 = vsub.f32 %v1527, %v2615
          %v2808 = vsub.f32 %v1528, %v2616
          %v2809 = vsub.f32 %v1529, %v2617
          %v2810 = vsub.f32 %v1530, %v2618
          %v2811 = vsub.f32 %v1531, %v2619
          %v2812 = vsub.f32 %v1532, %v2620
          %v2813 = vsub.f32 %v1533, %v2621
          %v2814 = vsub.f32 %v2062, %v2606
          %v2815 = vsub.f32 %v2063, %v2607
          %v2816 = vsub.f32 %v2064, %v2608
          %v2817 = vsub.f32 %v2065, %v2609
          %v2818 = vsub.f32 %v2066, %v2610
          %v2819 = vsub.f32 %v2067, %v2611
          %v2820 = vsub.f32 %v2068, %v2612
          %v2821 = vsub.f32 %v2069, %v2613
          %v2822 = vsub.f32 %v2070, %v2614
          %v2823 = vsub.f32 %v2071, %v2615
          %v2824 = vsub.f32 %v2072, %v2616
          %v2825 = vsub.f32 %v2073, %v2617
          %v2826 = vsub.f32 %v2074, %v2618
          %v2827 = vsub.f32 %v2075, %v2619
          %v2828 = vsub.f32 %v2076, %v2620
          %v2829 = vsub.f32 %v2077, %v2621
          %v2830 = vsub.f32 1.0, %v971
          %v2831 = vsub.f32 1.0, %v972
          %v2832 = vsub.f32 1.0, %v973
          %v2833 = vsub.f32 1.0, %v974
          %v2834 = vsub.f32 1.0, %v975
          %v2835 = vsub.f32 1.0, %v976
          %v2836 = vsub.f32 1.0, %v977
          %v2837 = vsub.f32 1.0, %v978
          %v2838 = vsub.f32 1.0, %v979
          %v2839 = vsub.f32 1.0, %v980
          %v2840 = vsub.f32 1.0, %v981
          %v2841 = vsub.f32 1.0, %v982
          %v2842 = vsub.f32 1.0, %v983
          %v2843 = vsub.f32 1.0, %v984
          %v2844 = vsub.f32 1.0, %v985
          %v2845 = vsub.f32 1.0, %v986
          %v2846 = vmul.f32 %v2830, %v2798
          %v2847 = vmul.f32 %v2831, %v2799
          %v2848 = vmul.f32 %v2832, %v2800
          %v2849 = vmul.f32 %v2833, %v2801
          %v2850 = vmul.f32 %v2834, %v2802
          %v2851 = vmul.f32 %v2835, %v2803
          %v2852 = vmul.f32 %v2836, %v2804
          %v2853 = vmul.f32 %v2837, %v2805
          %v2854 = vmul.f32 %v2838, %v2806
          %v2855 = vmul.f32 %v2839, %v2807
          %v2856 = vmul.f32 %v2840, %v2808
          %v2857 = vmul.f32 %v2841, %v2809
          %v2858 = vmul.f32 %v2842, %v2810
          %v2859 = vmul.f32 %v2843, %v2811
          %v2860 = vmul.f32 %v2844, %v2812
          %v2861 = vmul.f32 %v2845, %v2813
          %v2862 = vmul.f32 %v971, %v2814
          %v2863 = vmul.f32 %v972, %v2815
          %v2864 = vmul.f32 %v973, %v2816
          %v2865 = vmul.f32 %v974, %v2817
          %v2866 = vmul.f32 %v975, %v2818
          %v2867 = vmul.f32 %v976, %v2819
          %v2868 = vmul.f32 %v977, %v2820
          %v2869 = vmul.f32 %v978, %v2821
          %v2870 = vmul.f32 %v979, %v2822
          %v2871 = vmul.f32 %v980, %v2823
          %v2872 = vmul.f32 %v981, %v2824
          %v2873 = vmul.f32 %v982, %v2825
          %v2874 = vmul.f32 %v983, %v2826
          %v2875 = vmul.f32 %v984, %v2827
          %v2876 = vmul.f32 %v985, %v2828
          %v2877 = vmul.f32 %v986, %v2829
          %v2878 = vadd.f32 %v2846, %v2862
          %v2879 = vadd.f32 %v2847, %v2863
          %v2880 = vadd.f32 %v2848, %v2864
          %v2881 = vadd.f32 %v2849, %v2865
          %v2882 = vadd.f32 %v2850, %v2866
          %v2883 = vadd.f32 %v2851, %v2867
          %v2884 = vadd.f32 %v2852, %v2868
          %v2885 = vadd.f32 %v2853, %v2869
          %v2886 = vadd.f32 %v2854, %v2870
          %v2887 = vadd.f32 %v2855, %v2871
          %v2888 = vadd.f32 %v2856, %v2872
          %v2889 = vadd.f32 %v2857, %v2873
          %v2890 = vadd.f32 %v2858, %v2874
          %v2891 = vadd.f32 %v2859, %v2875
          %v2892 = vadd.f32 %v2860, %v2876
          %v2893 = vadd.f32 %v2861, %v2877
          %v2894 = vsub.f32 0.0, %v2878
          %v2895 = vsub.f32 0.0, %v2879
          %v2896 = vsub.f32 0.0, %v2880
          %v2897 = vsub.f32 0.0, %v2881
          %v2898 = vsub.f32 0.0, %v2882
          %v2899 = vsub.f32 0.0, %v2883
          %v2900 = vsub.f32 0.0, %v2884
          %v2901 = vsub.f32 0.0, %v2885
          %v2902 = vsub.f32 0.0, %v2886
          %v2903 = vsub.f32 0.0, %v2887
          %v2904 = vsub.f32 0.0, %v2888
          %v2905 = vsub.f32 0.0, %v2889
          %v2906 = vsub.f32 0.0, %v2890
          %v2907 = vsub.f32 0.0, %v2891
          %v2908 = vsub.f32 0.0, %v2892
          %v2909 = vsub.f32 0.0, %v2893
          %v2910 = vadd.f32 %v1694, %v2238
          %v2911 = vadd.f32 %v1695, %v2239
          %v2912 = vadd.f32 %v1696, %v2240
          %v2913 = vadd.f32 %v1697, %v2241
          %v2914 = vadd.f32 %v1698, %v2242
          %v2915 = vadd.f32 %v1699, %v2243
          %v2916 = vadd.f32 %v1700, %v2244
          %v2917 = vadd.f32 %v1701, %v2245
          %v2918 = vadd.f32 %v1702, %v2246
          %v2919 = vadd.f32 %v1703, %v2247
          %v2920 = vadd.f32 %v1704, %v2248
          %v2921 = vadd.f32 %v1705, %v2249
          %v2922 = vadd.f32 %v1706, %v2250
          %v2923 = vadd.f32 %v1707, %v2251
          %v2924 = vadd.f32 %v1708, %v2252
          %v2925 = vadd.f32 %v1709, %v2253
          %v2926 = vsub.f32 %v2910, %v2782
          %v2927 = vsub.f32 %v2911, %v2783
          %v2928 = vsub.f32 %v2912, %v2784
          %v2929 = vsub.f32 %v2913, %v2785
          %v2930 = vsub.f32 %v2914, %v2786
          %v2931 = vsub.f32 %v2915, %v2787
          %v2932 = vsub.f32 %v2916, %v2788
          %v2933 = vsub.f32 %v2917, %v2789
          %v2934 = vsub.f32 %v2918, %v2790
          %v2935 = vsub.f32 %v2919, %v2791
          %v2936 = vsub.f32 %v2920, %v2792
          %v2937 = vsub.f32 %v2921, %v2793
          %v2938 = vsub.f32 %v2922, %v2794
          %v2939 = vsub.f32 %v2923, %v2795
          %v2940 = vsub.f32 %v2924, %v2796
          %v2941 = vsub.f32 %v2925, %v2797
          %v2942 = vsub.f32 %v1134, 1.0
          %v2943 = vsub.f32 %v1135, 1.0
          %v2944 = vsub.f32 %v1136, 1.0
          %v2945 = vsub.f32 %v1137, 1.0
          %v2946 = vsub.f32 %v1138, 1.0
          %v2947 = vsub.f32 %v1139, 1.0
          %v2948 = vsub.f32 %v1140, 1.0
          %v2949 = vsub.f32 %v1141, 1.0
          %v2950 = vsub.f32 %v1142, 1.0
          %v2951 = vsub.f32 %v1143, 1.0
          %v2952 = vsub.f32 %v1144, 1.0
          %v2953 = vsub.f32 %v1145, 1.0
          %v2954 = vsub.f32 %v1146, 1.0
          %v2955 = vsub.f32 %v1147, 1.0
          %v2956 = vsub.f32 %v1148, 1.0
          %v2957 = vsub.f32 %v1149, 1.0
          %v2958 = vmul.f32 %v2798, %v2942
          %v2959 = vmul.f32 %v2799, %v2943
          %v2960 = vmul.f32 %v2800, %v2944
          %v2961 = vmul.f32 %v2801, %v2945
          %v2962 = vmul.f32 %v2802, %v2946
          %v2963 = vmul.f32 %v2803, %v2947
          %v2964 = vmul.f32 %v2804, %v2948
          %v2965 = vmul.f32 %v2805, %v2949
          %v2966 = vmul.f32 %v2806, %v2950
          %v2967 = vmul.f32 %v2807, %v2951
          %v2968 = vmul.f32 %v2808, %v2952
          %v2969 = vmul.f32 %v2809, %v2953
          %v2970 = vmul.f32 %v2810, %v2954
          %v2971 = vmul.f32 %v2811, %v2955
          %v2972 = vmul.f32 %v2812, %v2956
          %v2973 = vmul.f32 %v2813, %v2957
          %v2974 = vsub.f32 %v1054, 1.0
          %v2975 = vsub.f32 %v1055, 1.0
          %v2976 = vsub.f32 %v1056, 1.0
          %v2977 = vsub.f32 %v1057, 1.0
          %v2978 = vsub.f32 %v1058, 1.0
          %v2979 = vsub.f32 %v1059, 1.0
          %v2980 = vsub.f32 %v1060, 1.0
          %v2981 = vsub.f32 %v1061, 1.0
          %v2982 = vsub.f32 %v1062, 1.0
          %v2983 = vsub.f32 %v1063, 1.0
          %v2984 = vsub.f32 %v1064, 1.0
          %v2985 = vsub.f32 %v1065, 1.0
          %v2986 = vsub.f32 %v1066, 1.0
          %v2987 = vsub.f32 %v1067, 1.0
          %v2988 = vsub.f32 %v1068, 1.0
          %v2989 = vsub.f32 %v1069, 1.0
          %v2990 = vmul.f32 %v2814, %v2974
          %v2991 = vmul.f32 %v2815, %v2975
          %v2992 = vmul.f32 %v2816, %v2976
          %v2993 = vmul.f32 %v2817, %v2977
          %v2994 = vmul.f32 %v2818, %v2978
          %v2995 = vmul.f32 %v2819, %v2979
          %v2996 = vmul.f32 %v2820, %v2980
          %v2997 = vmul.f32 %v2821, %v2981
          %v2998 = vmul.f32 %v2822, %v2982
          %v2999 = vmul.f32 %v2823, %v2983
          %v3000 = vmul.f32 %v2824, %v2984
          %v3001 = vmul.f32 %v2825, %v2985
          %v3002 = vmul.f32 %v2826, %v2986
          %v3003 = vmul.f32 %v2827, %v2987
          %v3004 = vmul.f32 %v2828, %v2988
          %v3005 = vmul.f32 %v2829, %v2989
          %v3006 = vadd.f32 %v2958, %v2990
          %v3007 = vadd.f32 %v2959, %v2991
          %v3008 = vadd.f32 %v2960, %v2992
          %v3009 = vadd.f32 %v2961, %v2993
          %v3010 = vadd.f32 %v2962, %v2994
          %v3011 = vadd.f32 %v2963, %v2995
          %v3012 = vadd.f32 %v2964, %v2996
          %v3013 = vadd.f32 %v2965, %v2997
          %v3014 = vadd.f32 %v2966, %v2998
          %v3015 = vadd.f32 %v2967, %v2999
          %v3016 = vadd.f32 %v2968, %v3000
          %v3017 = vadd.f32 %v2969, %v3001
          %v3018 = vadd.f32 %v2970, %v3002
          %v3019 = vadd.f32 %v2971, %v3003
          %v3020 = vadd.f32 %v2972, %v3004
          %v3021 = vadd.f32 %v2973, %v3005
          %v3022 = vsub.f32 %v2926, %v3006
          %v3023 = vsub.f32 %v2927, %v3007
          %v3024 = vsub.f32 %v2928, %v3008
          %v3025 = vsub.f32 %v2929, %v3009
          %v3026 = vsub.f32 %v2930, %v3010
          %v3027 = vsub.f32 %v2931, %v3011
          %v3028 = vsub.f32 %v2932, %v3012
          %v3029 = vsub.f32 %v2933, %v3013
          %v3030 = vsub.f32 %v2934, %v3014
          %v3031 = vsub.f32 %v2935, %v3015
          %v3032 = vsub.f32 %v2936, %v3016
          %v3033 = vsub.f32 %v2937, %v3017
          %v3034 = vsub.f32 %v2938, %v3018
          %v3035 = vsub.f32 %v2939, %v3019
          %v3036 = vsub.f32 %v2940, %v3020
          %v3037 = vsub.f32 %v2941, %v3021
          %v3038 = vmul.f32 %v990, 2.0
          %v3039 = vmul.f32 %v991, 2.0
          %v3040 = vmul.f32 %v992, 2.0
          %v3041 = vmul.f32 %v993, 2.0
          %v3042 = vmul.f32 %v994, 2.0
          %v3043 = vmul.f32 %v995, 2.0
          %v3044 = vmul.f32 %v996, 2.0
          %v3045 = vmul.f32 %v997, 2.0
          %v3046 = vmul.f32 %v998, 2.0
          %v3047 = vmul.f32 %v999, 2.0
          %v3048 = vmul.f32 %v1000, 2.0
          %v3049 = vmul.f32 %v1001, 2.0
          %v3050 = vmul.f32 %v1002, 2.0
          %v3051 = vmul.f32 %v1003, 2.0
          %v3052 = vmul.f32 %v1004, 2.0
          %v3053 = vmul.f32 %v1005, 2.0
          %v3054 = vadd.f32 %v3038, 1.1920929e-07
          %v3055 = vadd.f32 %v3039, 1.1920929e-07
          %v3056 = vadd.f32 %v3040, 1.1920929e-07
          %v3057 = vadd.f32 %v3041, 1.1920929e-07
          %v3058 = vadd.f32 %v3042, 1.1920929e-07
          %v3059 = vadd.f32 %v3043, 1.1920929e-07
          %v3060 = vadd.f32 %v3044, 1.1920929e-07
          %v3061 = vadd.f32 %v3045, 1.1920929e-07
          %v3062 = vadd.f32 %v3046, 1.1920929e-07
          %v3063 = vadd.f32 %v3047, 1.1920929e-07
          %v3064 = vadd.f32 %v3048, 1.1920929e-07
          %v3065 = vadd.f32 %v3049, 1.1920929e-07
          %v3066 = vadd.f32 %v3050, 1.1920929e-07
          %v3067 = vadd.f32 %v3051, 1.1920929e-07
          %v3068 = vadd.f32 %v3052, 1.1920929e-07
          %v3069 = vadd.f32 %v3053, 1.1920929e-07
          %v3070 = vmul.f32 %v3022, %v3054
          %v3071 = vmul.f32 %v3023, %v3055
          %v3072 = vmul.f32 %v3024, %v3056
          %v3073 = vmul.f32 %v3025, %v3057
          %v3074 = vmul.f32 %v3026, %v3058
          %v3075 = vmul.f32 %v3027, %v3059
          %v3076 = vmul.f32 %v3028, %v3060
          %v3077 = vmul.f32 %v3029, %v3061
          %v3078 = vmul.f32 %v3030, %v3062
          %v3079 = vmul.f32 %v3031, %v3063
          %v3080 = vmul.f32 %v3032, %v3064
          %v3081 = vmul.f32 %v3033, %v3065
          %v3082 = vmul.f32 %v3034, %v3066
          %v3083 = vmul.f32 %v3035, %v3067
          %v3084 = vmul.f32 %v3036, %v3068
          %v3085 = vmul.f32 %v3037, %v3069
          %v3086 = vmul.f32 %v3054, 2.0
          %v3087 = vmul.f32 %v3055, 2.0
          %v3088 = vmul.f32 %v3056, 2.0
          %v3089 = vmul.f32 %v3057, 2.0
          %v3090 = vmul.f32 %v3058, 2.0
          %v3091 = vmul.f32 %v3059, 2.0
          %v3092 = vmul.f32 %v3060, 2.0
          %v3093 = vmul.f32 %v3061, 2.0
          %v3094 = vmul.f32 %v3062, 2.0
          %v3095 = vmul.f32 %v3063, 2.0
          %v3096 = vmul.f32 %v3064, 2.0
          %v3097 = vmul.f32 %v3065, 2.0
          %v3098 = vmul.f32 %v3066, 2.0
          %v3099 = vmul.f32 %v3067, 2.0
          %v3100 = vmul.f32 %v3068, 2.0
          %v3101 = vmul.f32 %v3069, 2.0
          %v3102 = vadd.f32 %v3086, 1.0
          %v3103 = vadd.f32 %v3087, 1.0
          %v3104 = vadd.f32 %v3088, 1.0
          %v3105 = vadd.f32 %v3089, 1.0
          %v3106 = vadd.f32 %v3090, 1.0
          %v3107 = vadd.f32 %v3091, 1.0
          %v3108 = vadd.f32 %v3092, 1.0
          %v3109 = vadd.f32 %v3093, 1.0
          %v3110 = vadd.f32 %v3094, 1.0
          %v3111 = vadd.f32 %v3095, 1.0
          %v3112 = vadd.f32 %v3096, 1.0
          %v3113 = vadd.f32 %v3097, 1.0
          %v3114 = vadd.f32 %v3098, 1.0
          %v3115 = vadd.f32 %v3099, 1.0
          %v3116 = vadd.f32 %v3100, 1.0
          %v3117 = vadd.f32 %v3101, 1.0
          %v3118 = vrcp.pop %v3102
          %v3119 = vmul.f32 %v3070, %v3118
          %v3120 = vrcp.pop %v3103
          %v3121 = vmul.f32 %v3071, %v3120
          %v3122 = vrcp.pop %v3104
          %v3123 = vmul.f32 %v3072, %v3122
          %v3124 = vrcp.pop %v3105
          %v3125 = vmul.f32 %v3073, %v3124
          %v3126 = vrcp.pop %v3106
          %v3127 = vmul.f32 %v3074, %v3126
          %v3128 = vrcp.pop %v3107
          %v3129 = vmul.f32 %v3075, %v3128
          %v3130 = vrcp.pop %v3108
          %v3131 = vmul.f32 %v3076, %v3130
          %v3132 = vrcp.pop %v3109
          %v3133 = vmul.f32 %v3077, %v3132
          %v3134 = vrcp.pop %v3110
          %v3135 = vmul.f32 %v3078, %v3134
          %v3136 = vrcp.pop %v3111
          %v3137 = vmul.f32 %v3079, %v3136
          %v3138 = vrcp.pop %v3112
          %v3139 = vmul.f32 %v3080, %v3138
          %v3140 = vrcp.pop %v3113
          %v3141 = vmul.f32 %v3081, %v3140
          %v3142 = vrcp.pop %v3114
          %v3143 = vmul.f32 %v3082, %v3142
          %v3144 = vrcp.pop %v3115
          %v3145 = vmul.f32 %v3083, %v3144
          %v3146 = vrcp.pop %v3116
          %v3147 = vmul.f32 %v3084, %v3146
          %v3148 = vrcp.pop %v3117
          %v3149 = vmul.f32 %v3085, %v3148
          %v3150 = vsub.f32 %v2894, %v3119
          %v3151 = vsub.f32 %v2895, %v3121
          %v3152 = vsub.f32 %v2896, %v3123
          %v3153 = vsub.f32 %v2897, %v3125
          %v3154 = vsub.f32 %v2898, %v3127
          %v3155 = vsub.f32 %v2899, %v3129
          %v3156 = vsub.f32 %v2900, %v3131
          %v3157 = vsub.f32 %v2901, %v3133
          %v3158 = vsub.f32 %v2902, %v3135
          %v3159 = vsub.f32 %v2903, %v3137
          %v3160 = vsub.f32 %v2904, %v3139
          %v3161 = vsub.f32 %v2905, %v3141
          %v3162 = vsub.f32 %v2906, %v3143
          %v3163 = vsub.f32 %v2907, %v3145
          %v3164 = vsub.f32 %v2908, %v3147
          %v3165 = vsub.f32 %v2909, %v3149
          %v3166 = vld [vmem:[#allocation2] sm:$0xff]
          %v3167 = vld [vmem:[#allocation2 + $0x8] sm:$0xff]
          %v3168 = vld [vmem:[#allocation2 + $0x10] sm:$0xff]
          %v3169 = vld [vmem:[#allocation2 + $0x18] sm:$0xff]
          %v3170 = vld [vmem:[#allocation2 + $0x20] sm:$0xff]
          %v3171 = vld [vmem:[#allocation2 + $0x28] sm:$0xff]
          %v3172 = vld [vmem:[#allocation2 + $0x30] sm:$0xff]
          %v3173 = vld [vmem:[#allocation2 + $0x38] sm:$0xff]
          %v3174 = vld [vmem:[#allocation2 + $0x40] sm:$0xff]
          %v3175 = vld [vmem:[#allocation2 + $0x48] sm:$0xff]
          %v3176 = vld [vmem:[#allocation2 + $0x50] sm:$0xff]
          %v3177 = vld [vmem:[#allocation2 + $0x58] sm:$0xff]
          %v3178 = vld [vmem:[#allocation2 + $0x60] sm:$0xff]
          %v3179 = vld [vmem:[#allocation2 + $0x68] sm:$0xff]
          %v3180 = vld [vmem:[#allocation2 + $0x70] sm:$0xff]
          %v3181 = vld [vmem:[#allocation2 + $0x78] sm:$0xff]
          %vm3182 = vcmp.ge.f32.partialorder %v971, 0.0
          %vm3183 = vcmp.ge.f32.partialorder %v972, 0.0
          %vm3184 = vcmp.ge.f32.partialorder %v973, 0.0
          %vm3185 = vcmp.ge.f32.partialorder %v974, 0.0
          %vm3186 = vcmp.ge.f32.partialorder %v975, 0.0
          %vm3187 = vcmp.ge.f32.partialorder %v976, 0.0
          %vm3188 = vcmp.ge.f32.partialorder %v977, 0.0
          %vm3189 = vcmp.ge.f32.partialorder %v978, 0.0
          %vm3190 = vcmp.ge.f32.partialorder %v979, 0.0
          %vm3191 = vcmp.ge.f32.partialorder %v980, 0.0
          %vm3192 = vcmp.ge.f32.partialorder %v981, 0.0
          %vm3193 = vcmp.ge.f32.partialorder %v982, 0.0
          %vm3194 = vcmp.ge.f32.partialorder %v983, 0.0
          %vm3195 = vcmp.ge.f32.partialorder %v984, 0.0
          %vm3196 = vcmp.ge.f32.partialorder %v985, 0.0
          %vm3197 = vcmp.ge.f32.partialorder %v986, 0.0
          %v3198 = vsel %vm3182, %v3150, 0.0
          %v3199 = vsel %vm3183, %v3151, 0.0
          %v3200 = vsel %vm3184, %v3152, 0.0
          %v3201 = vsel %vm3185, %v3153, 0.0
          %v3202 = vsel %vm3186, %v3154, 0.0
          %v3203 = vsel %vm3187, %v3155, 0.0
          %v3204 = vsel %vm3188, %v3156, 0.0
          %v3205 = vsel %vm3189, %v3157, 0.0
          %v3206 = vsel %vm3190, %v3158, 0.0
          %v3207 = vsel %vm3191, %v3159, 0.0
          %v3208 = vsel %vm3192, %v3160, 0.0
          %v3209 = vsel %vm3193, %v3161, 0.0
          %v3210 = vsel %vm3194, %v3162, 0.0
          %v3211 = vsel %vm3195, %v3163, 0.0
          %v3212 = vsel %vm3196, %v3164, 0.0
          %v3213 = vsel %vm3197, %v3165, 0.0
          %v3214 = vadd.f32 %v3166, %v3198
          %v3215 = vadd.f32 %v3167, %v3199
          %v3216 = vadd.f32 %v3168, %v3200
          %v3217 = vadd.f32 %v3169, %v3201
          %v3218 = vadd.f32 %v3170, %v3202
          %v3219 = vadd.f32 %v3171, %v3203
          %v3220 = vadd.f32 %v3172, %v3204
          %v3221 = vadd.f32 %v3173, %v3205
          %v3222 = vadd.f32 %v3174, %v3206
          %v3223 = vadd.f32 %v3175, %v3207
          %v3224 = vadd.f32 %v3176, %v3208
          %v3225 = vadd.f32 %v3177, %v3209
          %v3226 = vadd.f32 %v3178, %v3210
          %v3227 = vadd.f32 %v3179, %v3211
          %v3228 = vadd.f32 %v3180, %v3212
          %v3229 = vadd.f32 %v3181, %v3213
          %3230 = vst [vmem:[#allocation2] sm:$0xff] %v3214
          %3231 = vst [vmem:[#allocation2 + $0x8] sm:$0xff] %v3215
          %3232 = vst [vmem:[#allocation2 + $0x10] sm:$0xff] %v3216
          %3233 = vst [vmem:[#allocation2 + $0x18] sm:$0xff] %v3217
          %3234 = vst [vmem:[#allocation2 + $0x20] sm:$0xff] %v3218
          %3235 = vst [vmem:[#allocation2 + $0x28] sm:$0xff] %v3219
          %3236 = vst [vmem:[#allocation2 + $0x30] sm:$0xff] %v3220
          %3237 = vst [vmem:[#allocation2 + $0x38] sm:$0xff] %v3221
          %3238 = vst [vmem:[#allocation2 + $0x40] sm:$0xff] %v3222
          %3239 = vst [vmem:[#allocation2 + $0x48] sm:$0xff] %v3223
          %3240 = vst [vmem:[#allocation2 + $0x50] sm:$0xff] %v3224
          %3241 = vst [vmem:[#allocation2 + $0x58] sm:$0xff] %v3225
          %3242 = vst [vmem:[#allocation2 + $0x60] sm:$0xff] %v3226
          %3243 = vst [vmem:[#allocation2 + $0x68] sm:$0xff] %v3227
          %3244 = vst [vmem:[#allocation2 + $0x70] sm:$0xff] %v3228
          %3245 = vst [vmem:[#allocation2 + $0x78] sm:$0xff] %v3229
        $region56: #{binary_rkl_dirichlet_mediator_loss.1} parent=42 // loop_footer
          %s945 = sadd.s32 1, %s941
        $region57: #{binary_rkl_dirichlet_mediator_loss.1} parent=42 // loop_footer_branch
          %940 = sbr.rel target = $region53
        $region58: #{binary_rkl_dirichlet_mediator_loss.1} parent=42 // loop_exit
          _
        // Predicated region
        $region59: #{binary_rkl_dirichlet_mediator_loss.1} parent=42 // pred_check
          %p3246 = pneg %p920
        $region60: #{binary_rkl_dirichlet_mediator_loss.1} parent=42 // pred_check_branch
          %3248 = sbr.rel (%p3246) target = $region62
        $region61: #{binary_rkl_dirichlet_mediator_loss.1} parent=42 // pred_region
          %v3249 = vld [vmem:[#allocation2] sm:$0xff]
          %v3250 = vld [vmem:[#allocation2 + $0x8] sm:$0xff]
          %v3251 = vld [vmem:[#allocation2 + $0x10] sm:$0xff]
          %v3252 = vld [vmem:[#allocation2 + $0x18] sm:$0xff]
          %v3253 = vld [vmem:[#allocation2 + $0x20] sm:$0xff]
          %v3254 = vld [vmem:[#allocation2 + $0x28] sm:$0xff]
          %v3255 = vld [vmem:[#allocation2 + $0x30] sm:$0xff]
          %v3256 = vld [vmem:[#allocation2 + $0x38] sm:$0xff]
          %v3257 = vld [vmem:[#allocation2 + $0x40] sm:$0xff]
          %v3258 = vld [vmem:[#allocation2 + $0x48] sm:$0xff]
          %v3259 = vld [vmem:[#allocation2 + $0x50] sm:$0xff]
          %v3260 = vld [vmem:[#allocation2 + $0x58] sm:$0xff]
          %v3261 = vld [vmem:[#allocation2 + $0x60] sm:$0xff]
          %v3262 = vld [vmem:[#allocation2 + $0x68] sm:$0xff]
          %v3263 = vld [vmem:[#allocation2 + $0x70] sm:$0xff]
          %v3264 = vld [vmem:[#allocation2 + $0x78] sm:$0xff]
          %v3265 = vrot.slane %v3249, 4
          %v3266 = vadd.f32 %v3249, %v3265
          %v3267 = vrot.slane %v3266, 2
          %v3268 = vadd.f32 %v3266, %v3267
          %v3269 = vrot.slane %v3268, 1
          %v3270 = vadd.f32 %v3268, %v3269
          %v3271 = vrot.slane %v3250, 4
          %v3272 = vadd.f32 %v3250, %v3271
          %v3273 = vrot.slane %v3272, 2
          %v3274 = vadd.f32 %v3272, %v3273
          %v3275 = vrot.slane %v3274, 1
          %v3276 = vadd.f32 %v3274, %v3275
          %v3277 = vrot.slane %v3251, 4
          %v3278 = vadd.f32 %v3251, %v3277
          %v3279 = vrot.slane %v3278, 2
          %v3280 = vadd.f32 %v3278, %v3279
          %v3281 = vrot.slane %v3280, 1
          %v3282 = vadd.f32 %v3280, %v3281
          %v3283 = vrot.slane %v3252, 4
          %v3284 = vadd.f32 %v3252, %v3283
          %v3285 = vrot.slane %v3284, 2
          %v3286 = vadd.f32 %v3284, %v3285
          %v3287 = vrot.slane %v3286, 1
          %v3288 = vadd.f32 %v3286, %v3287
          %v3289 = vrot.slane %v3253, 4
          %v3290 = vadd.f32 %v3253, %v3289
          %v3291 = vrot.slane %v3290, 2
          %v3292 = vadd.f32 %v3290, %v3291
          %v3293 = vrot.slane %v3292, 1
          %v3294 = vadd.f32 %v3292, %v3293
          %v3295 = vrot.slane %v3254, 4
          %v3296 = vadd.f32 %v3254, %v3295
          %v3297 = vrot.slane %v3296, 2
          %v3298 = vadd.f32 %v3296, %v3297
          %v3299 = vrot.slane %v3298, 1
          %v3300 = vadd.f32 %v3298, %v3299
          %v3301 = vrot.slane %v3255, 4
          %v3302 = vadd.f32 %v3255, %v3301
          %v3303 = vrot.slane %v3302, 2
          %v3304 = vadd.f32 %v3302, %v3303
          %v3305 = vrot.slane %v3304, 1
          %v3306 = vadd.f32 %v3304, %v3305
          %v3307 = vrot.slane %v3256, 4
          %v3308 = vadd.f32 %v3256, %v3307
          %v3309 = vrot.slane %v3308, 2
          %v3310 = vadd.f32 %v3308, %v3309
          %v3311 = vrot.slane %v3310, 1
          %v3312 = vadd.f32 %v3310, %v3311
          %v3313 = vrot.slane %v3257, 4
          %v3314 = vadd.f32 %v3257, %v3313
          %v3315 = vrot.slane %v3314, 2
          %v3316 = vadd.f32 %v3314, %v3315
          %v3317 = vrot.slane %v3316, 1
          %v3318 = vadd.f32 %v3316, %v3317
          %v3319 = vrot.slane %v3258, 4
          %v3320 = vadd.f32 %v3258, %v3319
          %v3321 = vrot.slane %v3320, 2
          %v3322 = vadd.f32 %v3320, %v3321
          %v3323 = vrot.slane %v3322, 1
          %v3324 = vadd.f32 %v3322, %v3323
          %v3325 = vrot.slane %v3259, 4
          %v3326 = vadd.f32 %v3259, %v3325
          %v3327 = vrot.slane %v3326, 2
          %v3328 = vadd.f32 %v3326, %v3327
          %v3329 = vrot.slane %v3328, 1
          %v3330 = vadd.f32 %v3328, %v3329
          %v3331 = vrot.slane %v3260, 4
          %v3332 = vadd.f32 %v3260, %v3331
          %v3333 = vrot.slane %v3332, 2
          %v3334 = vadd.f32 %v3332, %v3333
          %v3335 = vrot.slane %v3334, 1
          %v3336 = vadd.f32 %v3334, %v3335
          %v3337 = vrot.slane %v3261, 4
          %v3338 = vadd.f32 %v3261, %v3337
          %v3339 = vrot.slane %v3338, 2
          %v3340 = vadd.f32 %v3338, %v3339
          %v3341 = vrot.slane %v3340, 1
          %v3342 = vadd.f32 %v3340, %v3341
          %v3343 = vrot.slane %v3262, 4
          %v3344 = vadd.f32 %v3262, %v3343
          %v3345 = vrot.slane %v3344, 2
          %v3346 = vadd.f32 %v3344, %v3345
          %v3347 = vrot.slane %v3346, 1
          %v3348 = vadd.f32 %v3346, %v3347
          %v3349 = vrot.slane %v3263, 4
          %v3350 = vadd.f32 %v3263, %v3349
          %v3351 = vrot.slane %v3350, 2
          %v3352 = vadd.f32 %v3350, %v3351
          %v3353 = vrot.slane %v3352, 1
          %v3354 = vadd.f32 %v3352, %v3353
          %v3355 = vrot.slane %v3264, 4
          %v3356 = vadd.f32 %v3264, %v3355
          %v3357 = vrot.slane %v3356, 2
          %v3358 = vadd.f32 %v3356, %v3357
          %v3359 = vrot.slane %v3358, 1
          %v3360 = vadd.f32 %v3358, %v3359
          %v3377 = vcombine.low %v3270, %v3276
          %v3378 = vcombine.low %v3282, %v3288
          %v3379 = vcombine.low %v3294, %v3300
          %v3380 = vcombine.low %v3306, %v3312
          %v3382 = vunpack.c.l.s4 1966171168
          %v3383 = vunpack.c.0.s8 %v3382
          %v3384 = vlaneseq
          %v3385 = vshrl.u32 %v3384, 7
          %v3386 = vsub.s32 %v3383, %v3385
          %v3387 = vrot.slane %v3377, %v3386
          %v3389 = vunpack.c.l.s4 1966171168
          %v3390 = vunpack.c.0.s8 %v3389
          %v3391 = vlaneseq
          %v3392 = vshrl.u32 %v3391, 7
          %v3393 = vsub.s32 %v3390, %v3392
          %v3394 = vrot.slane %v3378, %v3393
          %v3396 = vunpack.c.l.s4 1966171168
          %v3397 = vunpack.c.0.s8 %v3396
          %v3398 = vlaneseq
          %v3399 = vshrl.u32 %v3398, 7
          %v3400 = vsub.s32 %v3397, %v3399
          %v3401 = vrot.slane %v3379, %v3400
          %v3403 = vunpack.c.l.s4 1966171168
          %v3404 = vunpack.c.0.s8 %v3403
          %v3405 = vlaneseq
          %v3406 = vshrl.u32 %v3405, 7
          %v3407 = vsub.s32 %v3404, %v3406
          %v3408 = vrot.slane %v3380, %v3407
          %v3409 = vcombine.low %v3387, %v3394
          %v3410 = vcombine.low %v3401, %v3408
          %v3412 = vunpack.c.l.s4 1966171168
          %v3413 = vunpack.c.0.s8 %v3412
          %v3414 = vlaneseq
          %v3415 = vshrl.u32 %v3414, 7
          %v3416 = vsub.s32 %v3413, %v3415
          %v3417 = vrot.slane %v3409, %v3416
          %v3419 = vunpack.c.l.s4 1966171168
          %v3420 = vunpack.c.0.s8 %v3419
          %v3421 = vlaneseq
          %v3422 = vshrl.u32 %v3421, 7
          %v3423 = vsub.s32 %v3420, %v3422
          %v3424 = vrot.slane %v3410, %v3423
          %v3425 = vcombine.low %v3417, %v3424
          %v3426 = vcombine.low %v3318, %v3324
          %v3427 = vcombine.low %v3330, %v3336
          %v3428 = vcombine.low %v3342, %v3348
          %v3429 = vcombine.low %v3354, %v3360
          %v3431 = vunpack.c.l.s4 1966171168
          %v3432 = vunpack.c.0.s8 %v3431
          %v3433 = vlaneseq
          %v3434 = vshrl.u32 %v3433, 7
          %v3435 = vsub.s32 %v3432, %v3434
          %v3436 = vrot.slane %v3426, %v3435
          %v3438 = vunpack.c.l.s4 1966171168
          %v3439 = vunpack.c.0.s8 %v3438
          %v3440 = vlaneseq
          %v3441 = vshrl.u32 %v3440, 7
          %v3442 = vsub.s32 %v3439, %v3441
          %v3443 = vrot.slane %v3427, %v3442
          %v3445 = vunpack.c.l.s4 1966171168
          %v3446 = vunpack.c.0.s8 %v3445
          %v3447 = vlaneseq
          %v3448 = vshrl.u32 %v3447, 7
          %v3449 = vsub.s32 %v3446, %v3448
          %v3450 = vrot.slane %v3428, %v3449
          %v3452 = vunpack.c.l.s4 1966171168
          %v3453 = vunpack.c.0.s8 %v3452
          %v3454 = vlaneseq
          %v3455 = vshrl.u32 %v3454, 7
          %v3456 = vsub.s32 %v3453, %v3455
          %v3457 = vrot.slane %v3429, %v3456
          %v3458 = vcombine.low %v3436, %v3443
          %v3459 = vcombine.low %v3450, %v3457
          %v3461 = vunpack.c.l.s4 1966171168
          %v3462 = vunpack.c.0.s8 %v3461
          %v3463 = vlaneseq
          %v3464 = vshrl.u32 %v3463, 7
          %v3465 = vsub.s32 %v3462, %v3464
          %v3466 = vrot.slane %v3458, %v3465
          %v3468 = vunpack.c.l.s4 1966171168
          %v3469 = vunpack.c.0.s8 %v3468
          %v3470 = vlaneseq
          %v3471 = vshrl.u32 %v3470, 7
          %v3472 = vsub.s32 %v3469, %v3471
          %v3473 = vrot.slane %v3459, %v3472
          %v3474 = vcombine.low %v3466, %v3473
          %3477 = vst [vmem:[%s918] sm:$0xff] %v3425
          %3478 = vst [vmem:[%s918 + $0x8] sm:$0xff] %v3474
        $region62: #{binary_rkl_dirichlet_mediator_loss.1} parent=42 // pred_fallthru
          _
        %s3479 = smul.u32 16, %s16
        %p3480 = scmp.lt.s32.totalorder %s3479, 31
        %s3481 = scalar_select %p3480, %s3479, 31
        %s3482 = scalar_lea.vmem %s1, %s3481
        // Predicated region
        $region63: #{binary_rkl_dirichlet_mediator_loss.1} parent=42 // pred_check
          %p3483 = pneg %p70
        $region64: #{binary_rkl_dirichlet_mediator_loss.1} parent=42 // pred_check_branch
          %3485 = sbr.rel (%p3483) target = $region66
        $region65: #{binary_rkl_dirichlet_mediator_loss.1} parent=42 // pred_region
          %s3486 = smul.u32 16, %s16
        $region66: #{binary_rkl_dirichlet_mediator_loss.1} parent=42 // pred_fallthru
          _
      $region43: #{binary_rkl_dirichlet_mediator_loss.1} parent=5 // pred_fallthru
        _
      %p3487 = scmp.le.s32.totalorder 2, %s7
      // Predicated region
      $region67: #{binary_rkl_dirichlet_mediator_loss.1} parent=5 // pred_check
        %p3488 = pneg %p3487
      $region68: #{binary_rkl_dirichlet_mediator_loss.1} parent=5 // pred_check_branch
        %3490 = sbr.rel (%p3488) target = $region70
      $region69: #{binary_rkl_dirichlet_mediator_loss.1} parent=5 // pred_region
        %s3491 = ssub.s32 %s7, 2
        // Predicated region
        $region71: #{binary_rkl_dirichlet_mediator_loss.1} parent=69 // pred_check
          %p3492 = pneg %p76
        $region72: #{binary_rkl_dirichlet_mediator_loss.1} parent=69 // pred_check_branch
          %3494 = sbr.rel (%p3492) target = $region74
        $region73: #{binary_rkl_dirichlet_mediator_loss.1} parent=69 // pred_region
          %s3495 = smul.u32 16, %s18
          %p3496 = scmp.lt.s32.totalorder %s3495, 31
          %s3497 = scalar_select %p3496, %s3495, 31
          %s3498 = scalar_lea.vmem %s1, %s3497
        $region74: #{binary_rkl_dirichlet_mediator_loss.1} parent=69 // pred_fallthru
          _
      $region70: #{binary_rkl_dirichlet_mediator_loss.1} parent=5 // pred_fallthru
        _
    $region6: #{binary_rkl_dirichlet_mediator_loss.1} parent=1 // loop_footer
      %s11 = sadd.s32 1, %s7
    $region7: #{binary_rkl_dirichlet_mediator_loss.1} parent=1 // loop_footer_branch
      %6 = sbr.rel target = $region3
    $region8: #{binary_rkl_dirichlet_mediator_loss.1} parent=1 // loop_exit
      _

</llo_original>
